<compile_context>
chip_gen: v5e
topology: v5e:2x2
jax: 0.10.0
libtpu: 0.0.40
codegen_flags: <defaults>
</compile_context>

<pallas_src>
import functools
import math

import jax
import jax.numpy as jnp
from jax.experimental import pallas as pl
from jax.experimental.pallas import tpu as pltpu

MXU_DTYPE = jnp.bfloat16      # matmul-operand dtype (f32 accumulation everywhere)


# -----------------------------------------------------------------------------
# In-kernel helpers
# -----------------------------------------------------------------------------

def _mxu(x):
    return x.astype(MXU_DTYPE)


def _dot(a, b):
    # (M, K) @ (K, N) -> (M, N), f32 accumulation on the MXU.
    return jnp.dot(_mxu(a), _mxu(b), preferred_element_type=jnp.float32)


def _dot_nt(a, b):
    # (M, K) @ (N, K)^T -> (M, N) without an explicit transpose.
    return jax.lax.dot_general(_mxu(a), _mxu(b), (((1,), (1,)), ((), ())),
                               preferred_element_type=jnp.float32)


def _bdot_nt(a, b):
    # (B, M, K) x (B, N, K) -> (B, M, N), batched over B.
    return jax.lax.dot_general(_mxu(a), _mxu(b), (((2,), (2,)), ((0,), (0,))),
                               preferred_element_type=jnp.float32)


def _bdot(a, b):
    # (B, M, K) x (B, K, N) -> (B, M, N), batched over B.
    return jax.lax.dot_general(_mxu(a), _mxu(b), (((2,), (1,)), ((0,), (0,))),
                               preferred_element_type=jnp.float32)


def _layer_norm(x, g, b, eps=1e-5):
    mean = jnp.mean(x, axis=-1, keepdims=True)
    var = jnp.mean((x - mean) ** 2, axis=-1, keepdims=True)
    return (x - mean) * jax.lax.rsqrt(var + eps) * g + b


def _softmax(s):
    # Exact softmax: the attention maps are exported outputs (rows sum to 1).
    m = jnp.max(s, axis=-1, keepdims=True)
    e = jnp.exp(s - m)
    return e / jnp.sum(e, axis=-1, keepdims=True)


# -----------------------------------------------------------------------------
# Fused decoder-stack kernel: grid=(n_blocks,), one iteration per layer.
#   norm1 -> rel-pos self-attn -> +res -> norm2 -> cross-attn -> +res
#        -> norm3 -> FFN -> +res
# x is carried across layers in the resident output block (constant index map).
# -----------------------------------------------------------------------------

def _decoder_stack_kernel(
    # layer-invariant inputs (constant index map, resident across the grid)
    x_in_ref, mem_ref, pos_ref, slf_bias_ref, mem_bias_ref,
    # per-layer stacked parameters (leading layer axis, block size 1)
    n1g_ref, n1b_ref,
    w_qkv_ref, b_qkv_ref, w_pos_ref, pos_u_ref, pos_v_ref, slf_wo_ref, slf_bo_ref,
    n2g_ref, n2b_ref,
    src_wq_ref, src_bq_ref, src_wkv_ref, src_bkv_ref, src_wo_ref, src_bo_ref,
    n3g_ref, n3b_ref,
    ffn_w1_ref, ffn_b1_ref, ffn_w2_ref, ffn_b2_ref,
    # outputs
    x_out_ref, slf_attn_ref, src_attn_ref,
    # scratch
    ctx_ref,
    *, B, T, S, H, dk,
):
    D = H * dk
    P = 2 * T - 1
    scale = 1.0 / math.sqrt(dk)
    layer = pl.program_id(0)

    # Layer 0: seed the resident activation block with the embeddings.
    @pl.when(layer == 0)
    def _():
        x_out_ref[...] = x_in_ref[...]

    x = x_out_ref[...]                                    # (B*T, D) f32, carried
    mem = mem_ref[...]                                    # (B*S, Dm) f32
    slf_bias = slf_bias_ref[...]                          # (B, T, T) additive mask
    mem_bias = mem_bias_ref[...]                          # (B, 1, S) additive mask

    # ================= self-attention (relative positional) =================
    xn = _layer_norm(x, n1g_ref[0], n1b_ref[0])           # pre-norm
    residual = xn                                         # reference: residual AFTER norm1

    qkv = _dot(xn, w_qkv_ref[0]) + b_qkv_ref[0]           # (B*T, 3D) fused Q|K|V
    rel = _dot(pos_ref[...], w_pos_ref[0])                # (P, D), linear without bias
    pos_u = pos_u_ref[0] * scale                          # (H, dk); 1/sqrt(dk) folded into q-side
    pos_v = pos_v_ref[0] * scale

    # Short static unroll over heads; inside, everything is batched over B.
    # (Batching heads too would need a sublane transpose; not worth it at dk=8.)
    for h in range(H):
        q = qkv[:, h * dk:(h + 1) * dk] * scale                         # (B*T, dk)
        k = qkv[:, D + h * dk:D + (h + 1) * dk]
        v = qkv[:, 2 * D + h * dk:2 * D + (h + 1) * dk]
        rel_h = rel[:, h * dk:(h + 1) * dk]                             # (P, dk)

        q_u = (q + pos_u[h:h + 1, :]).reshape(B, T, dk)
        ac = _bdot_nt(q_u, k.reshape(B, T, dk))                         # (B, T, T)

        bd_full = _dot_nt(q + pos_v[h:h + 1, :], rel_h).reshape(B, T, P)  # (B, T, P)
        # Relative shift: bd[b, i, j] = bd_full[b, i, j - i + T - 1].
        # T static lane slices instead of the O(T^3) one-hot selector.
        # TODO(synk): at production T use pltpu.roll(bd_full, T, 2, stride=1, stride_axis=1)[..., :T].
        bd = jnp.concatenate(
            [bd_full[:, i:i + 1, T - 1 - i:2 * T - 1 - i] for i in range(T)],
            axis=1)                                                      # (B, T, T)

        s = ac + bd + slf_bias                                           # scale already folded in
        p = _softmax(s)                                                  # (B, T, T) f32
        slf_attn_ref[0, h] = p
        ctx_ref[:, h * dk:(h + 1) * dk] = _bdot(p, v.reshape(B, T, dk)).reshape(B * T, dk)

    x = residual + _dot(ctx_ref[...], slf_wo_ref[0]) + slf_bo_ref[0]

    # ========================= cross-attention ==============================
    xn = _layer_norm(x, n2g_ref[0], n2b_ref[0])
    residual = xn
    q_all = (_dot(xn, src_wq_ref[0]) + src_bq_ref[0]) * scale            # (B*T, D)
    kv_all = _dot(mem, src_wkv_ref[0]) + src_bkv_ref[0]                  # (B*S, 2D) fused K|V

    for h in range(H):
        q3 = q_all[:, h * dk:(h + 1) * dk].reshape(B, T, dk)
        k3 = kv_all[:, h * dk:(h + 1) * dk].reshape(B, S, dk)
        v3 = kv_all[:, D + h * dk:D + (h + 1) * dk].reshape(B, S, dk)
        s = _bdot_nt(q3, k3) + mem_bias                                  # (B, T, S)
        p = _softmax(s)
        src_attn_ref[0, h] = p
        ctx_ref[:, h * dk:(h + 1) * dk] = _bdot(p, v3).reshape(B * T, dk)

    x = residual + _dot(ctx_ref[...], src_wo_ref[0]) + src_bo_ref[0]

    # =========================== feed-forward ===============================
    xn = _layer_norm(x, n3g_ref[0], n3b_ref[0])
    residual = xn
    ff_hidden = jnp.maximum(_dot(xn, ffn_w1_ref[0]) + ffn_b1_ref[0], 0.0)
    x = residual + _dot(ff_hidden, ffn_w2_ref[0]) + ffn_b2_ref[0]

    x_out_ref[...] = x                                    # resident; DMA'd out after last layer


def _invariant_spec(shape):
    nd = len(shape)
    return pl.BlockSpec(tuple(shape), lambda l, _nd=nd: (0,) * _nd)


def _per_layer_spec(shape):
    nd = len(shape)
    return pl.BlockSpec((1,) + tuple(shape[1:]),
                        lambda l, _nd=nd: (l,) + (0,) * (_nd - 1))


def decoder_stack(x2d, mem2d, pos2d, slf_bias, mem_bias, stack, B, T, S, H, dk):
    D = H * dk
    L = stack["w_qkv"].shape[0]

    order = ["n1g", "n1b",
             "w_qkv", "b_qkv", "w_pos", "pos_u", "pos_v", "slf_wo", "slf_bo",
             "n2g", "n2b",
             "src_wq", "src_bq", "src_wkv", "src_bkv", "src_wo", "src_bo",
             "n3g", "n3b",
             "ffn_w1", "ffn_b1", "ffn_w2", "ffn_b2"]
    stacked_args = [stack[k] for k in order]
    invariants = [x2d, mem2d, pos2d, slf_bias, mem_bias]

    in_specs = ([_invariant_spec(a.shape) for a in invariants] +
                [_per_layer_spec(a.shape) for a in stacked_args])

    out_shape = (
        jax.ShapeDtypeStruct((B * T, D), jnp.float32),
        jax.ShapeDtypeStruct((L, H, B, T, T), jnp.float32),
        jax.ShapeDtypeStruct((L, H, B, T, S), jnp.float32),
    )
    out_specs = (
        pl.BlockSpec((B * T, D), lambda l: (0, 0)),                 # resident carry
        pl.BlockSpec((1, H, B, T, T), lambda l: (l, 0, 0, 0, 0)),
        pl.BlockSpec((1, H, B, T, S), lambda l: (l, 0, 0, 0, 0)),
    )

    kern = functools.partial(_decoder_stack_kernel, B=B, T=T, S=S, H=H, dk=dk)
    return pl.pallas_call(
        kern,
        grid_spec=pltpu.PrefetchScalarGridSpec(
            num_scalar_prefetch=0,
            grid=(L,),
            in_specs=in_specs,
            out_specs=out_specs,
            scratch_shapes=[pltpu.VMEM((B * T, D), jnp.float32)],   # head-context scratch
        ),
        out_shape=out_shape,
        compiler_params=pltpu.CompilerParams(
            dimension_semantics=("arbitrary",),                     # layers are sequential
        ),
    )(*invariants, *stacked_args)


# -----------------------------------------------------------------------------
# Fused after_norm + vocab projection, tiled over (padded, lane-dense) V.
# -----------------------------------------------------------------------------

def _final_kernel(x_ref, g_ref, b_ref, w_ref, bo_ref, o_ref):
    # LayerNorm recomputed per V tile (negligible vs. the projection matmul).
    xn = _layer_norm(x_ref[...], g_ref[...], b_ref[...])
    o_ref[...] = _dot(xn, w_ref[...]) + bo_ref[...]


def final_norm_logits(x2d, g, b, w_pad, bo_pad, tile_v=128):
    M, D = x2d.shape
    Vp = w_pad.shape[1]
    return pl.pallas_call(
        _final_kernel,
        grid_spec=pltpu.PrefetchScalarGridSpec(
            num_scalar_prefetch=0,
            grid=(Vp // tile_v,),
            in_specs=[
                pl.BlockSpec((M, D), lambda j: (0, 0)),
                pl.BlockSpec((1, D), lambda j: (0, 0)),
                pl.BlockSpec((1, D), lambda j: (0, 0)),
                pl.BlockSpec((D, tile_v), lambda j: (0, j)),
                pl.BlockSpec((1, tile_v), lambda j: (0, j)),
            ],
            out_specs=pl.BlockSpec((M, tile_v), lambda j: (0, j)),
        ),
        out_shape=jax.ShapeDtypeStruct((M, Vp), jnp.float32),
        compiler_params=pltpu.CompilerParams(dimension_semantics=("parallel",)),
    )(x2d, g.reshape(1, D), b.reshape(1, D), w_pad, bo_pad.reshape(1, Vp))


# -----------------------------------------------------------------------------
# Model glue (XLA side): embeddings, sinusoidal positions, masks, params.
# -----------------------------------------------------------------------------

def sinusoidal_embedding_from_positions(positions, d_model):
    """positions: (1, P) ints (may be negative) -> (1, P, d_model) sinusoids."""
    pos = positions.astype(jnp.float32)[..., None]
    div = jnp.exp(jnp.arange(0, d_model, 2, dtype=jnp.float32)
                  * (-math.log(10000.0) / d_model))
    angles = pos * div
    pe = jnp.zeros(positions.shape + (d_model,), jnp.float32)
    pe = pe.at[..., 0::2].set(jnp.sin(angles))
    pe = pe.at[..., 1::2].set(jnp.cos(angles))
    return pe


def init_params(key, vocab_size, d_model, n_heads, d_ff, memory_dim, n_blocks):
    D, H, F, Dm, L = d_model, n_heads, d_ff, memory_dim, n_blocks
    dk = D // H
    ks = jax.random.split(key, 12)

    def w(k, shape, scale=0.02):
        return jax.random.normal(k, shape, jnp.float32) * scale

    ones = lambda s: jnp.ones(s, jnp.float32)
    zeros = lambda s: jnp.zeros(s, jnp.float32)

    stack = {
        "n1g": ones((L, 1, D)), "n1b": zeros((L, 1, D)),
        "w_qkv": w(ks[0], (L, D, 3 * D)).astype(MXU_DTYPE),
        "b_qkv": zeros((L, 1, 3 * D)),
        "w_pos": w(ks[1], (L, D, D)).astype(MXU_DTYPE),
        "pos_u": w(ks[2], (L, H, dk)),
        "pos_v": w(ks[3], (L, H, dk)),
        "slf_wo": w(ks[4], (L, D, D)).astype(MXU_DTYPE),
        "slf_bo": zeros((L, 1, D)),
        "n2g": ones((L, 1, D)), "n2b": zeros((L, 1, D)),
        "src_wq": w(ks[5], (L, D, D)).astype(MXU_DTYPE),
        "src_bq": zeros((L, 1, D)),
        "src_wkv": w(ks[6], (L, Dm, 2 * D)).astype(MXU_DTYPE),
        "src_bkv": zeros((L, 1, 2 * D)),
        "src_wo": w(ks[7], (L, D, D)).astype(MXU_DTYPE),
        "src_bo": zeros((L, 1, D)),
        "n3g": ones((L, 1, D)), "n3b": zeros((L, 1, D)),
        "ffn_w1": w(ks[8], (L, D, F)).astype(MXU_DTYPE),
        "ffn_b1": zeros((L, 1, F)),
        "ffn_w2": w(ks[9], (L, F, D)).astype(MXU_DTYPE),
        "ffn_b2": zeros((L, 1, D)),
    }
    return {
        "embedding": w(ks[10], (vocab_size, D)),
        "after_norm_g": ones((D,)), "after_norm_b": zeros((D,)),
        "out_w": w(ks[11], (D, vocab_size)),
        "out_b": zeros((vocab_size,)),
        "stack": stack,
    }


def transformer_decoder_forward(params, targets, memory, memory_mask,
                                d_model, n_heads):
    B, T = targets.shape
    S = memory.shape[1]
    H = n_heads
    dk = d_model // H
    D = d_model

    # TODO(synk): embedding gather has no natural rectangular-tile Pallas pattern
    # at this size; done with jnp.take (XLA glue).
    dec = jnp.take(params["embedding"], targets, axis=0)                 # (B, T, D)

    positions = jnp.arange(-(T - 1), T).reshape(1, -1)                   # (1, 2T-1)
    pos2d = sinusoidal_embedding_from_positions(positions, D).reshape(2 * T - 1, D)

    # Additive attention biases, built once and shared by every layer.
    row = jnp.arange(T)[:, None]
    col = jnp.arange(T)[None, :]
    causal = (col <= row)[None, :, :]                                    # (1, T, T)
    key_ok = (targets != 0)[:, None, :]                                  # (B, 1, T)
    slf_bias = jnp.where(jnp.logical_and(causal, key_ok), 0.0, -1e9).astype(jnp.float32)
    mem_bias = jnp.where(memory_mask[:, None, :] > 0, 0.0, -1e9).astype(jnp.float32)

    x2d = dec.reshape(B * T, D)
    mem2d = memory.reshape(B * S, -1)

    x_out, slf_attn, src_attn = decoder_stack(
        x2d, mem2d, pos2d, slf_bias, mem_bias, params["stack"], B, T, S, H, dk)

    attn_weights = {}
    for i in range(slf_attn.shape[0]):
        attn_weights["dec_block_%d" % i] = {
            "slf_attn_weights": jnp.transpose(slf_attn[i], (1, 0, 2, 3)),  # (B, H, T, T)
            "src_attn_weights": jnp.transpose(src_attn[i], (1, 0, 2, 3)),  # (B, H, T, S)
        }

    # Pad vocab to a lane-dense multiple of 128 for the tiled projection.
    V = params["out_w"].shape[1]
    Vp = ((V + 127) // 128) * 128
    w_pad = jnp.pad(params["out_w"], ((0, 0), (0, Vp - V))).astype(MXU_DTYPE)
    b_pad = jnp.pad(params["out_b"], (0, Vp - V))

    logits = final_norm_logits(x_out, params["after_norm_g"], params["after_norm_b"],
                               w_pad, b_pad)
    logits = logits[:, :V].reshape(B, T, V)
    return logits, attn_weights


# -----------------------------------------------------------------------------
# Main
# -----------------------------------------------------------------------------

if __name__ == "__main__":
    vocab_size = 50
    d_model = 32
    n_heads = 4
    d_ff = 64
    memory_dim = 32
    n_blocks = 2
    B, T, S = 2, 8, 16

    key = jax.random.PRNGKey(0)
    kp, kt, km = jax.random.split(key, 3)

    params = init_params(kp, vocab_size, d_model, n_heads, d_ff, memory_dim, n_blocks)
    targets = jax.random.randint(kt, (B, T), 1, vocab_size, dtype=jnp.int32)
    memory = jax.random.normal(km, (B, S, memory_dim), jnp.float32)
    memory_mask = jnp.ones((B, S), jnp.float32)

    fwd = jax.jit(transformer_decoder_forward, static_argnums=(4, 5))
    logits, attn_weights = fwd(params, targets, memory, memory_mask, d_model, n_heads)
    logits = jax.block_until_ready(logits)

    assert logits.shape == (B, T, vocab_size)
    assert bool(jnp.all(jnp.isfinite(logits)))
    assert attn_weights["dec_block_0"]["slf_attn_weights"].shape == (B, n_heads, T, T)
    assert attn_weights["dec_block_0"]["src_attn_weights"].shape == (B, n_heads, T, S)
    assert attn_weights["dec_block_1"]["src_attn_weights"].shape == (B, n_heads, T, S)
    # softmax rows (exact reciprocal) must sum to ~1
    row_sums = attn_weights["dec_block_0"]["slf_attn_weights"].sum(-1)
    assert bool(jnp.all(jnp.abs(row_sums - 1.0) < 1e-3))
    print("KERNEL_OK")
</pallas_src>

<mosaic_0001>
module attributes {stable_mosaic.version = 11 : i64} {
  func.func @_final_kernel(%arg0: i32, %arg1: memref<16x32xf32, #tpu.memory_space<vmem>>, %arg2: memref<1x32xf32, #tpu.memory_space<vmem>>, %arg3: memref<1x32xf32, #tpu.memory_space<vmem>>, %arg4: memref<32x128xbf16, #tpu.memory_space<vmem>>, %arg5: memref<1x128xf32, #tpu.memory_space<vmem>>, %arg6: memref<16x128xf32, #tpu.memory_space<vmem>>) attributes {dimension_semantics = [#tpu.dimension_semantics<parallel>], iteration_bounds = array<i64: 1>, scalar_prefetch = 0 : i64, scratch_operands = 0 : i64, tpu.core_type = #tpu.core_type<tc>, window_params = [{pipeline_mode = #tpu.pipeline_mode<synchronous>, transform_indices = @transform_0, window_bounds = array<i64: 16, 32>}, {pipeline_mode = #tpu.pipeline_mode<synchronous>, transform_indices = @transform_1, window_bounds = array<i64: 1, 32>}, {pipeline_mode = #tpu.pipeline_mode<synchronous>, transform_indices = @transform_2, window_bounds = array<i64: 1, 32>}, {transform_indices = @transform_3, window_bounds = array<i64: 32, 128>}, {transform_indices = @transform_4, window_bounds = array<i64: 1, 128>}, {transform_indices = @transform_5, window_bounds = array<i64: 16, 128>}]} {
    %c0 = arith.constant 0 : index
    %c0_0 = arith.constant 0 : index
    %0 = vector.load %arg1[%c0, %c0_0] : memref<16x32xf32, #tpu.memory_space<vmem>>, vector<16x32xf32>
    %c0_1 = arith.constant 0 : index
    %c0_2 = arith.constant 0 : index
    %1 = vector.load %arg2[%c0_1, %c0_2] : memref<1x32xf32, #tpu.memory_space<vmem>>, vector<1x32xf32>
    %c0_3 = arith.constant 0 : index
    %c0_4 = arith.constant 0 : index
    %2 = vector.load %arg3[%c0_3, %c0_4] : memref<1x32xf32, #tpu.memory_space<vmem>>, vector<1x32xf32>
    %cst = arith.constant dense<0.000000e+00> : vector<16xf32>
    %3 = vector.multi_reduction <add>, %0, %cst [1] : vector<16x32xf32> to vector<16xf32>
    %4 = vector.shape_cast %3 : vector<16xf32> to vector<16x1xf32>
    %cst_5 = arith.constant 3.200000e+01 : f32
    %5 = vector.broadcast %cst_5 : f32 to vector<16x1xf32>
    %6 = arith.divf %4, %5 : vector<16x1xf32>
    %7 = vector.broadcast %6 : vector<16x1xf32> to vector<16x32xf32>
    %8 = arith.subf %0, %7 : vector<16x32xf32>
    %9 = arith.mulf %8, %8 : vector<16x32xf32>
    %cst_6 = arith.constant dense<0.000000e+00> : vector<16xf32>
    %10 = vector.multi_reduction <add>, %9, %cst_6 [1] : vector<16x32xf32> to vector<16xf32>
    %11 = vector.shape_cast %10 : vector<16xf32> to vector<16x1xf32>
    %cst_7 = arith.constant 3.200000e+01 : f32
    %12 = vector.broadcast %cst_7 : f32 to vector<16x1xf32>
    %13 = arith.divf %11, %12 : vector<16x1xf32>
    %14 = vector.broadcast %6 : vector<16x1xf32> to vector<16x32xf32>
    %15 = arith.subf %0, %14 : vector<16x32xf32>
    %cst_8 = arith.constant 9.99999974E-6 : f32
    %16 = vector.broadcast %cst_8 : f32 to vector<16x1xf32>
    %17 = arith.addf %13, %16 : vector<16x1xf32>
    %18 = math.rsqrt %17 : vector<16x1xf32>
    %19 = vector.broadcast %18 : vector<16x1xf32> to vector<16x32xf32>
    %20 = arith.mulf %15, %19 : vector<16x32xf32>
    %21 = vector.broadcast %1 : vector<1x32xf32> to vector<16x32xf32>
    %22 = arith.mulf %20, %21 : vector<16x32xf32>
    %23 = vector.broadcast %2 : vector<1x32xf32> to vector<16x32xf32>
    %24 = arith.addf %22, %23 : vector<16x32xf32>
    %c0_9 = arith.constant 0 : index
    %c0_10 = arith.constant 0 : index
    %25 = vector.load %arg4[%c0_9, %c0_10] : memref<32x128xbf16, #tpu.memory_space<vmem>>, vector<32x128xbf16>
    %26 = arith.truncf %24 : vector<16x32xf32> to vector<16x32xbf16>
    %cst_11 = arith.constant dense<0.000000e+00> : vector<16x128xf32>
    %27 = tpu.matmul %26, %25, %cst_11 {dimension_numbers = #tpu.dot_dimension_numbers<[1], [0], [0], [1], [0, 0, 1, 1], [], []>} : vector<16x32xbf16>, vector<32x128xbf16>, vector<16x128xf32> -> vector<16x128xf32>
    %c0_12 = arith.constant 0 : index
    %c0_13 = arith.constant 0 : index
    %28 = vector.load %arg5[%c0_12, %c0_13] : memref<1x128xf32, #tpu.memory_space<vmem>>, vector<1x128xf32>
    %29 = vector.broadcast %28 : vector<1x128xf32> to vector<16x128xf32>
    %30 = arith.addf %27, %29 : vector<16x128xf32>
    %c0_14 = arith.constant 0 : index
    %c0_15 = arith.constant 0 : index
    %31 = vector.load %arg6[%c0_14, %c0_15] : memref<16x128xf32, #tpu.memory_space<vmem>>, vector<16x128xf32>
    tpu.vector_store %arg6[%c0_14, %c0_15], %30 {strides = array<i32>} : memref<16x128xf32, #tpu.memory_space<vmem>>, vector<16x128xf32>,
    return
  }
  func.func @transform_0(%arg0: i32) -> (i32, i32) {
    %c0_i32 = arith.constant 0 : i32
    %c0_i32_0 = arith.constant 0 : i32
    %c0_i32_1 = arith.constant 0 : i32
    return %c0_i32, %c0_i32_0 : i32, i32
  }
  func.func @transform_1(%arg0: i32) -> (i32, i32) {
    %c0_i32 = arith.constant 0 : i32
    %c0_i32_0 = arith.constant 0 : i32
    %c0_i32_1 = arith.constant 0 : i32
    return %c0_i32, %c0_i32_0 : i32, i32
  }
  func.func @transform_2(%arg0: i32) -> (i32, i32) {
    %c0_i32 = arith.constant 0 : i32
    %c0_i32_0 = arith.constant 0 : i32
    %c0_i32_1 = arith.constant 0 : i32
    return %c0_i32, %c0_i32_0 : i32, i32
  }
  func.func @transform_3(%arg0: i32) -> (i32, i32) {
    %c0_i32 = arith.constant 0 : i32
    %c0_i32_0 = arith.constant 0 : i32
    return %c0_i32, %arg0 : i32, i32
  }
  func.func @transform_4(%arg0: i32) -> (i32, i32) {
    %c0_i32 = arith.constant 0 : i32
    %c0_i32_0 = arith.constant 0 : i32
    return %c0_i32, %arg0 : i32, i32
  }
  func.func @transform_5(%arg0: i32) -> (i32, i32) {
    %c0_i32 = arith.constant 0 : i32
    %c0_i32_0 = arith.constant 0 : i32
    return %c0_i32, %arg0 : i32, i32
  }
}

module attributes {stable_mosaic.version = 11 : i64} {
  func.func @_decoder_stack_kernel(%arg0: i32, %arg1: memref<16x32xf32, #tpu.memory_space<vmem>>, %arg2: memref<32x32xf32, #tpu.memory_space<vmem>>, %arg3: memref<15x32xf32, #tpu.memory_space<vmem>>, %arg4: memref<2x8x8xf32, #tpu.memory_space<vmem>>, %arg5: memref<2x1x16xf32, #tpu.memory_space<vmem>>, %arg6: memref<1x1x32xf32, #tpu.memory_space<vmem>>, %arg7: memref<1x1x32xf32, #tpu.memory_space<vmem>>, %arg8: memref<1x32x96xbf16, #tpu.memory_space<vmem>>, %arg9: memref<1x1x96xf32, #tpu.memory_space<vmem>>, %arg10: memref<1x32x32xbf16, #tpu.memory_space<vmem>>, %arg11: memref<1x4x8xf32, #tpu.memory_space<vmem>>, %arg12: memref<1x4x8xf32, #tpu.memory_space<vmem>>, %arg13: memref<1x32x32xbf16, #tpu.memory_space<vmem>>, %arg14: memref<1x1x32xf32, #tpu.memory_space<vmem>>, %arg15: memref<1x1x32xf32, #tpu.memory_space<vmem>>, %arg16: memref<1x1x32xf32, #tpu.memory_space<vmem>>, %arg17: memref<1x32x32xbf16, #tpu.memory_space<vmem>>, %arg18: memref<1x1x32xf32, #tpu.memory_space<vmem>>, %arg19: memref<1x32x64xbf16, #tpu.memory_space<vmem>>, %arg20: memref<1x1x64xf32, #tpu.memory_space<vmem>>, %arg21: memref<1x32x32xbf16, #tpu.memory_space<vmem>>, %arg22: memref<1x1x32xf32, #tpu.memory_space<vmem>>, %arg23: memref<1x1x32xf32, #tpu.memory_space<vmem>>, %arg24: memref<1x1x32xf32, #tpu.memory_space<vmem>>, %arg25: memref<1x32x64xbf16, #tpu.memory_space<vmem>>, %arg26: memref<1x1x64xf32, #tpu.memory_space<vmem>>, %arg27: memref<1x64x32xbf16, #tpu.memory_space<vmem>>, %arg28: memref<1x1x32xf32, #tpu.memory_space<vmem>>, %arg29: memref<16x32xf32, #tpu.memory_space<vmem>>, %arg30: memref<1x4x2x8x8xf32, #tpu.memory_space<vmem>>, %arg31: memref<1x4x2x8x16xf32, #tpu.memory_space<vmem>>, %arg32: memref<16x32xf32, #tpu.memory_space<vmem>>) attributes {dimension_semantics = [#tpu.dimension_semantics<arbitrary>], iteration_bounds = array<i64: 2>, scalar_prefetch = 0 : i64, scratch_operands = 1 : i64, tpu.core_type = #tpu.core_type<tc>, window_params = [{pipeline_mode = #tpu.pipeline_mode<synchronous>, transform_indices = @transform_0, window_bounds = array<i64: 16, 32>}, {pipeline_mode = #tpu.pipeline_mode<synchronous>, transform_indices = @transform_1, window_bounds = array<i64: 32, 32>}, {pipeline_mode = #tpu.pipeline_mode<synchronous>, transform_indices = @transform_2, window_bounds = array<i64: 15, 32>}, {pipeline_mode = #tpu.pipeline_mode<synchronous>, transform_indices = @transform_3, window_bounds = array<i64: 2, 8, 8>}, {pipeline_mode = #tpu.pipeline_mode<synchronous>, transform_indices = @transform_4, window_bounds = array<i64: 2, 1, 16>}, {transform_indices = @transform_5, window_bounds = array<i64: 1, 1, 32>}, {transform_indices = @transform_6, window_bounds = array<i64: 1, 1, 32>}, {transform_indices = @transform_7, window_bounds = array<i64: 1, 32, 96>}, {transform_indices = @transform_8, window_bounds = array<i64: 1, 1, 96>}, {transform_indices = @transform_9, window_bounds = array<i64: 1, 32, 32>}, {transform_indices = @transform_10, window_bounds = array<i64: 1, 4, 8>}, {transform_indices = @transform_11, window_bounds = array<i64: 1, 4, 8>}, {transform_indices = @transform_12, window_bounds = array<i64: 1, 32, 32>}, {transform_indices = @transform_13, window_bounds = array<i64: 1, 1, 32>}, {transform_indices = @transform_14, window_bounds = array<i64: 1, 1, 32>}, {transform_indices = @transform_15, window_bounds = array<i64: 1, 1, 32>}, {transform_indices = @transform_16, window_bounds = array<i64: 1, 32, 32>}, {transform_indices = @transform_17, window_bounds = array<i64: 1, 1, 32>}, {transform_indices = @transform_18, window_bounds = array<i64: 1, 32, 64>}, {transform_indices = @transform_19, window_bounds = array<i64: 1, 1, 64>}, {transform_indices = @transform_20, window_bounds = array<i64: 1, 32, 32>}, {transform_indices = @transform_21, window_bounds = array<i64: 1, 1, 32>}, {transform_indices = @transform_22, window_bounds = array<i64: 1, 1, 32>}, {transform_indices = @transform_23, window_bounds = array<i64: 1, 1, 32>}, {transform_indices = @transform_24, window_bounds = array<i64: 1, 32, 64>}, {transform_indices = @transform_25, window_bounds = array<i64: 1, 1, 64>}, {transform_indices = @transform_26, window_bounds = array<i64: 1, 64, 32>}, {transform_indices = @transform_27, window_bounds = array<i64: 1, 1, 32>}, {pipeline_mode = #tpu.pipeline_mode<synchronous>, transform_indices = @transform_28, window_bounds = array<i64: 16, 32>}, {transform_indices = @transform_29, window_bounds = array<i64: 1, 4, 2, 8, 8>}, {transform_indices = @transform_30, window_bounds = array<i64: 1, 4, 2, 8, 16>}]} {
    %c0_i32 = arith.constant 0 : i32
    %0 = arith.cmpi eq, %arg0, %c0_i32 : i32
    %1 = arith.extui %0 : i1 to i32
    %c0_i32_0 = arith.constant 0 : i32
    %2 = arith.cmpi ne, %1, %c0_i32_0 : i32
    scf.if %2 {
      %c0_203 = arith.constant 0 : index
      %c0_204 = arith.constant 0 : index
      %476 = vector.load %arg1[%c0_203, %c0_204] : memref<16x32xf32, #tpu.memory_space<vmem>>, vector<16x32xf32>
      %c0_205 = arith.constant 0 : index
      %c0_206 = arith.constant 0 : index
      %477 = vector.load %arg29[%c0_205, %c0_206] : memref<16x32xf32, #tpu.memory_space<vmem>>, vector<16x32xf32>
      tpu.vector_store %arg29[%c0_205, %c0_206], %476 {strides = array<i32>} : memref<16x32xf32, #tpu.memory_space<vmem>>, vector<16x32xf32>,
    } else {
    }
    %c0 = arith.constant 0 : index
    %c0_1 = arith.constant 0 : index
    %3 = vector.load %arg29[%c0, %c0_1] : memref<16x32xf32, #tpu.memory_space<vmem>>, vector<16x32xf32>
    %c0_2 = arith.constant 0 : index
    %c0_3 = arith.constant 0 : index
    %4 = vector.load %arg2[%c0_2, %c0_3] : memref<32x32xf32, #tpu.memory_space<vmem>>, vector<32x32xf32>
    %c0_4 = arith.constant 0 : index
    %c0_5 = arith.constant 0 : index
    %c0_6 = arith.constant 0 : index
    %5 = vector.load %arg4[%c0_4, %c0_5, %c0_6] : memref<2x8x8xf32, #tpu.memory_space<vmem>>, vector<2x8x8xf32>
    %c0_7 = arith.constant 0 : index
    %c0_8 = arith.constant 0 : index
    %c0_9 = arith.constant 0 : index
    %6 = vector.load %arg5[%c0_7, %c0_8, %c0_9] : memref<2x1x16xf32, #tpu.memory_space<vmem>>, vector<2x1x16xf32>
    %c0_10 = arith.constant 0 : index
    %c0_11 = arith.constant 0 : index
    %c0_12 = arith.constant 0 : index
    %7 = vector.load %arg6[%c0_10, %c0_11, %c0_12] : memref<1x1x32xf32, #tpu.memory_space<vmem>>, vector<1x1x32xf32>
    %8 = vector.shape_cast %7 : vector<1x1x32xf32> to vector<1x32xf32>
    %c0_13 = arith.constant 0 : index
    %c0_14 = arith.constant 0 : index
    %c0_15 = arith.constant 0 : index
    %9 = vector.load %arg7[%c0_13, %c0_14, %c0_15] : memref<1x1x32xf32, #tpu.memory_space<vmem>>, vector<1x1x32xf32>
    %10 = vector.shape_cast %9 : vector<1x1x32xf32> to vector<1x32xf32>
    %cst = arith.constant dense<0.000000e+00> : vector<16xf32>
    %11 = vector.multi_reduction <add>, %3, %cst [1] : vector<16x32xf32> to vector<16xf32>
    %12 = vector.shape_cast %11 : vector<16xf32> to vector<16x1xf32>
    %cst_16 = arith.constant 3.200000e+01 : f32
    %13 = vector.broadcast %cst_16 : f32 to vector<16x1xf32>
    %14 = arith.divf %12, %13 : vector<16x1xf32>
    %15 = vector.broadcast %14 : vector<16x1xf32> to vector<16x32xf32>
    %16 = arith.subf %3, %15 : vector<16x32xf32>
    %17 = arith.mulf %16, %16 : vector<16x32xf32>
    %cst_17 = arith.constant dense<0.000000e+00> : vector<16xf32>
    %18 = vector.multi_reduction <add>, %17, %cst_17 [1] : vector<16x32xf32> to vector<16xf32>
    %19 = vector.shape_cast %18 : vector<16xf32> to vector<16x1xf32>
    %cst_18 = arith.constant 3.200000e+01 : f32
    %20 = vector.broadcast %cst_18 : f32 to vector<16x1xf32>
    %21 = arith.divf %19, %20 : vector<16x1xf32>
    %22 = vector.broadcast %14 : vector<16x1xf32> to vector<16x32xf32>
    %23 = arith.subf %3, %22 : vector<16x32xf32>
    %cst_19 = arith.constant 9.99999974E-6 : f32
    %24 = vector.broadcast %cst_19 : f32 to vector<16x1xf32>
    %25 = arith.addf %21, %24 : vector<16x1xf32>
    %26 = math.rsqrt %25 : vector<16x1xf32>
    %27 = vector.broadcast %26 : vector<16x1xf32> to vector<16x32xf32>
    %28 = arith.mulf %23, %27 : vector<16x32xf32>
    %29 = vector.broadcast %8 : vector<1x32xf32> to vector<16x32xf32>
    %30 = arith.mulf %28, %29 : vector<16x32xf32>
    %31 = vector.broadcast %10 : vector<1x32xf32> to vector<16x32xf32>
    %32 = arith.addf %30, %31 : vector<16x32xf32>
    %c0_20 = arith.constant 0 : index
    %c0_21 = arith.constant 0 : index
    %c0_22 = arith.constant 0 : index
    %33 = vector.load %arg8[%c0_20, %c0_21, %c0_22] : memref<1x32x96xbf16, #tpu.memory_space<vmem>>, vector<1x32x96xbf16>
    %34 = vector.shape_cast %33 : vector<1x32x96xbf16> to vector<32x96xbf16>
    %35 = arith.truncf %32 : vector<16x32xf32> to vector<16x32xbf16>
    %cst_23 = arith.constant dense<0.000000e+00> : vector<16x96xf32>
    %36 = tpu.matmul %35, %34, %cst_23 {dimension_numbers = #tpu.dot_dimension_numbers<[1], [0], [0], [1], [0, 0, 1, 1], [], []>} : vector<16x32xbf16>, vector<32x96xbf16>, vector<16x96xf32> -> vector<16x96xf32>
    %c0_24 = arith.constant 0 : index
    %c0_25 = arith.constant 0 : index
    %c0_26 = arith.constant 0 : index
    %37 = vector.load %arg9[%c0_24, %c0_25, %c0_26] : memref<1x1x96xf32, #tpu.memory_space<vmem>>, vector<1x1x96xf32>
    %38 = vector.shape_cast %37 : vector<1x1x96xf32> to vector<1x96xf32>
    %39 = vector.broadcast %38 : vector<1x96xf32> to vector<16x96xf32>
    %40 = arith.addf %36, %39 : vector<16x96xf32>
    %c0_27 = arith.constant 0 : index
    %c0_28 = arith.constant 0 : index
    %41 = vector.load %arg3[%c0_27, %c0_28] : memref<15x32xf32, #tpu.memory_space<vmem>>, vector<15x32xf32>
    %c0_29 = arith.constant 0 : index
    %c0_30 = arith.constant 0 : index
    %c0_31 = arith.constant 0 : index
    %42 = vector.load %arg10[%c0_29, %c0_30, %c0_31] : memref<1x32x32xbf16, #tpu.memory_space<vmem>>, vector<1x32x32xbf16>
    %43 = vector.shape_cast %42 : vector<1x32x32xbf16> to vector<32x32xbf16>
    %44 = arith.truncf %41 : vector<15x32xf32> to vector<15x32xbf16>
    %cst_32 = arith.constant dense<0.000000e+00> : vector<15x32xf32>
    %45 = tpu.matmul %44, %43, %cst_32 {dimension_numbers = #tpu.dot_dimension_numbers<[1], [0], [0], [1], [0, 0, 1, 1], [], []>} : vector<15x32xbf16>, vector<32x32xbf16>, vector<15x32xf32> -> vector<15x32xf32>
    %c0_33 = arith.constant 0 : index
    %c0_34 = arith.constant 0 : index
    %c0_35 = arith.constant 0 : index
    %46 = vector.load %arg11[%c0_33, %c0_34, %c0_35] : memref<1x4x8xf32, #tpu.memory_space<vmem>>, vector<1x4x8xf32>
    %47 = vector.shape_cast %46 : vector<1x4x8xf32> to vector<4x8xf32>
    %cst_36 = arith.constant 0.353553385 : f32
    %48 = vector.broadcast %cst_36 : f32 to vector<4x8xf32>
    %49 = arith.mulf %47, %48 : vector<4x8xf32>
    %c0_37 = arith.constant 0 : index
    %c0_38 = arith.constant 0 : index
    %c0_39 = arith.constant 0 : index
    %50 = vector.load %arg12[%c0_37, %c0_38, %c0_39] : memref<1x4x8xf32, #tpu.memory_space<vmem>>, vector<1x4x8xf32>
    %51 = vector.shape_cast %50 : vector<1x4x8xf32> to vector<4x8xf32>
    %cst_40 = arith.constant 0.353553385 : f32
    %52 = vector.broadcast %cst_40 : f32 to vector<4x8xf32>
    %53 = arith.mulf %51, %52 : vector<4x8xf32>
    %54 = vector.extract_strided_slice %40 {offsets = [0, 0], sizes = [16, 8], strides = [1, 1]} : vector<16x96xf32> to vector<16x8xf32>
    %cst_41 = arith.constant 0.353553385 : f32
    %55 = vector.broadcast %cst_41 : f32 to vector<16x8xf32>
    %56 = arith.mulf %54, %55 : vector<16x8xf32>
    %57 = vector.extract_strided_slice %40 {offsets = [0, 32], sizes = [16, 8], strides = [1, 1]} : vector<16x96xf32> to vector<16x8xf32>
    %58 = vector.extract_strided_slice %40 {offsets = [0, 64], sizes = [16, 8], strides = [1, 1]} : vector<16x96xf32> to vector<16x8xf32>
    %59 = vector.extract_strided_slice %45 {offsets = [0, 0], sizes = [15, 8], strides = [1, 1]} : vector<15x32xf32> to vector<15x8xf32>
    %60 = vector.extract_strided_slice %49 {offsets = [0, 0], sizes = [1, 8], strides = [1, 1]} : vector<4x8xf32> to vector<1x8xf32>
    %61 = vector.broadcast %60 : vector<1x8xf32> to vector<16x8xf32>
    %62 = arith.addf %56, %61 : vector<16x8xf32>
    %63 = vector.shape_cast %62 : vector<16x8xf32> to vector<2x8x8xf32>
    %64 = vector.shape_cast %57 : vector<16x8xf32> to vector<2x8x8xf32>
    %65 = arith.truncf %63 : vector<2x8x8xf32> to vector<2x8x8xbf16>
    %66 = arith.truncf %64 : vector<2x8x8xf32> to vector<2x8x8xbf16>
    %cst_42 = arith.constant dense<0.000000e+00> : vector<2x8x8xf32>
    %67 = tpu.matmul %65, %66, %cst_42 {dimension_numbers = #tpu.dot_dimension_numbers<[2], [2], [1], [1], [0, 0, 0, 1, 1, 1], [0], [0]>} : vector<2x8x8xbf16>, vector<2x8x8xbf16>, vector<2x8x8xf32> -> vector<2x8x8xf32>
    %68 = vector.extract_strided_slice %53 {offsets = [0, 0], sizes = [1, 8], strides = [1, 1]} : vector<4x8xf32> to vector<1x8xf32>
    %69 = vector.broadcast %68 : vector<1x8xf32> to vector<16x8xf32>
    %70 = arith.addf %56, %69 : vector<16x8xf32>
    %71 = arith.truncf %70 : vector<16x8xf32> to vector<16x8xbf16>
    %72 = arith.truncf %59 : vector<15x8xf32> to vector<15x8xbf16>
    %cst_43 = arith.constant dense<0.000000e+00> : vector<16x15xf32>
    %73 = tpu.matmul %71, %72, %cst_43 {dimension_numbers = #tpu.dot_dimension_numbers<[1], [1], [0], [0], [0, 0, 1, 0], [], []>} : vector<16x8xbf16>, vector<15x8xbf16>, vector<16x15xf32> -> vector<16x15xf32>
    %74 = vector.shape_cast %73 : vector<16x15xf32> to vector<2x8x15xf32>
    %75 = vector.extract_strided_slice %74 {offsets = [0, 0, 7], sizes = [2, 1, 8], strides = [1, 1, 1]} : vector<2x8x15xf32> to vector<2x1x8xf32>
    %76 = vector.extract_strided_slice %74 {offsets = [0, 1, 6], sizes = [2, 1, 8], strides = [1, 1, 1]} : vector<2x8x15xf32> to vector<2x1x8xf32>
    %77 = vector.extract_strided_slice %74 {offsets = [0, 2, 5], sizes = [2, 1, 8], strides = [1, 1, 1]} : vector<2x8x15xf32> to vector<2x1x8xf32>
    %78 = vector.extract_strided_slice %74 {offsets = [0, 3, 4], sizes = [2, 1, 8], strides = [1, 1, 1]} : vector<2x8x15xf32> to vector<2x1x8xf32>
    %79 = vector.extract_strided_slice %74 {offsets = [0, 4, 3], sizes = [2, 1, 8], strides = [1, 1, 1]} : vector<2x8x15xf32> to vector<2x1x8xf32>
    %80 = vector.extract_strided_slice %74 {offsets = [0, 5, 2], sizes = [2, 1, 8], strides = [1, 1, 1]} : vector<2x8x15xf32> to vector<2x1x8xf32>
    %81 = vector.extract_strided_slice %74 {offsets = [0, 6, 1], sizes = [2, 1, 8], strides = [1, 1, 1]} : vector<2x8x15xf32> to vector<2x1x8xf32>
    %82 = vector.extract_strided_slice %74 {offsets = [0, 7, 0], sizes = [2, 1, 8], strides = [1, 1, 1]} : vector<2x8x15xf32> to vector<2x1x8xf32>
    %83 = tpu.concatenate %75, %76, %77, %78, %79, %80, %81, %82 in 1 : vector<2x1x8xf32>, vector<2x1x8xf32>, vector<2x1x8xf32>, vector<2x1x8xf32>, vector<2x1x8xf32>, vector<2x1x8xf32>, vector<2x1x8xf32>, vector<2x1x8xf32> -> vector<2x8x8xf32>
    %84 = arith.addf %67, %83 : vector<2x8x8xf32>
    %85 = arith.addf %84, %5 : vector<2x8x8xf32>
    %cst_44 = arith.constant dense<0xFF800000> : vector<2x8xf32>
    %86 = vector.multi_reduction <maximumf>, %85, %cst_44 [2] : vector<2x8x8xf32> to vector<2x8xf32>
    %87 = vector.shape_cast %86 : vector<2x8xf32> to vector<2x8x1xf32>
    %88 = vector.broadcast %87 : vector<2x8x1xf32> to vector<2x8x8xf32>
    %89 = arith.subf %85, %88 : vector<2x8x8xf32>
    %90 = math.exp %89 : vector<2x8x8xf32>
    %cst_45 = arith.constant dense<0.000000e+00> : vector<2x8xf32>
    %91 = vector.multi_reduction <add>, %90, %cst_45 [2] : vector<2x8x8xf32> to vector<2x8xf32>
    %92 = vector.shape_cast %91 : vector<2x8xf32> to vector<2x8x1xf32>
    %93 = vector.broadcast %92 : vector<2x8x1xf32> to vector<2x8x8xf32>
    %94 = arith.divf %90, %93 : vector<2x8x8xf32>
    %c0_46 = arith.constant 0 : index
    %c0_47 = arith.constant 0 : index
    %c0_48 = arith.constant 0 : index
    %c0_49 = arith.constant 0 : index
    %c0_50 = arith.constant 0 : index
    %95 = vector.load %arg30[%c0_46, %c0_47, %c0_48, %c0_49, %c0_50] : memref<1x4x2x8x8xf32, #tpu.memory_space<vmem>>, vector<1x1x2x8x8xf32>
    %96 = vector.shape_cast %95 : vector<1x1x2x8x8xf32> to vector<2x8x8xf32>
    %97 = vector.shape_cast %94 : vector<2x8x8xf32> to vector<1x1x2x8x8xf32>
    tpu.vector_store %arg30[%c0_46, %c0_47, %c0_48, %c0_49, %c0_50], %97 {strides = array<i32>} : memref<1x4x2x8x8xf32, #tpu.memory_space<vmem>>, vector<1x1x2x8x8xf32>,
    %98 = vector.shape_cast %58 : vector<16x8xf32> to vector<2x8x8xf32>
    %99 = arith.truncf %94 : vector<2x8x8xf32> to vector<2x8x8xbf16>
    %100 = arith.truncf %98 : vector<2x8x8xf32> to vector<2x8x8xbf16>
    %cst_51 = arith.constant dense<0.000000e+00> : vector<2x8x8xf32>
    %101 = tpu.matmul %99, %100, %cst_51 {dimension_numbers = #tpu.dot_dimension_numbers<[2], [1], [1], [2], [0, 0, 0, 1, 1, 2], [0], [0]>} : vector<2x8x8xbf16>, vector<2x8x8xbf16>, vector<2x8x8xf32> -> vector<2x8x8xf32>
    %102 = vector.shape_cast %101 : vector<2x8x8xf32> to vector<16x8xf32>
    %c0_52 = arith.constant 0 : index
    %c0_53 = arith.constant 0 : index
    %103 = vector.load %arg32[%c0_52, %c0_53] : memref<16x32xf32, #tpu.memory_space<vmem>>, vector<16x8xf32>
    tpu.vector_store %arg32[%c0_52, %c0_53], %102 {strides = array<i32>} : memref<16x32xf32, #tpu.memory_space<vmem>>, vector<16x8xf32>,
    %104 = vector.extract_strided_slice %40 {offsets = [0, 8], sizes = [16, 8], strides = [1, 1]} : vector<16x96xf32> to vector<16x8xf32>
    %cst_54 = arith.constant 0.353553385 : f32
    %105 = vector.broadcast %cst_54 : f32 to vector<16x8xf32>
    %106 = arith.mulf %104, %105 : vector<16x8xf32>
    %107 = vector.extract_strided_slice %40 {offsets = [0, 40], sizes = [16, 8], strides = [1, 1]} : vector<16x96xf32> to vector<16x8xf32>
    %108 = vector.extract_strided_slice %40 {offsets = [0, 72], sizes = [16, 8], strides = [1, 1]} : vector<16x96xf32> to vector<16x8xf32>
    %109 = vector.extract_strided_slice %45 {offsets = [0, 8], sizes = [15, 8], strides = [1, 1]} : vector<15x32xf32> to vector<15x8xf32>
    %110 = vector.extract_strided_slice %49 {offsets = [1, 0], sizes = [1, 8], strides = [1, 1]} : vector<4x8xf32> to vector<1x8xf32>
    %111 = vector.broadcast %110 : vector<1x8xf32> to vector<16x8xf32>
    %112 = arith.addf %106, %111 : vector<16x8xf32>
    %113 = vector.shape_cast %112 : vector<16x8xf32> to vector<2x8x8xf32>
    %114 = vector.shape_cast %107 : vector<16x8xf32> to vector<2x8x8xf32>
    %115 = arith.truncf %113 : vector<2x8x8xf32> to vector<2x8x8xbf16>
    %116 = arith.truncf %114 : vector<2x8x8xf32> to vector<2x8x8xbf16>
    %cst_55 = arith.constant dense<0.000000e+00> : vector<2x8x8xf32>
    %117 = tpu.matmul %115, %116, %cst_55 {dimension_numbers = #tpu.dot_dimension_numbers<[2], [2], [1], [1], [0, 0, 0, 1, 1, 1], [0], [0]>} : vector<2x8x8xbf16>, vector<2x8x8xbf16>, vector<2x8x8xf32> -> vector<2x8x8xf32>
    %118 = vector.extract_strided_slice %53 {offsets = [1, 0], sizes = [1, 8], strides = [1, 1]} : vector<4x8xf32> to vector<1x8xf32>
    %119 = vector.broadcast %118 : vector<1x8xf32> to vector<16x8xf32>
    %120 = arith.addf %106, %119 : vector<16x8xf32>
    %121 = arith.truncf %120 : vector<16x8xf32> to vector<16x8xbf16>
    %122 = arith.truncf %109 : vector<15x8xf32> to vector<15x8xbf16>
    %cst_56 = arith.constant dense<0.000000e+00> : vector<16x15xf32>
    %123 = tpu.matmul %121, %122, %cst_56 {dimension_numbers = #tpu.dot_dimension_numbers<[1], [1], [0], [0], [0, 0, 1, 0], [], []>} : vector<16x8xbf16>, vector<15x8xbf16>, vector<16x15xf32> -> vector<16x15xf32>
    %124 = vector.shape_cast %123 : vector<16x15xf32> to vector<2x8x15xf32>
    %125 = vector.extract_strided_slice %124 {offsets = [0, 0, 7], sizes = [2, 1, 8], strides = [1, 1, 1]} : vector<2x8x15xf32> to vector<2x1x8xf32>
    %126 = vector.extract_strided_slice %124 {offsets = [0, 1, 6], sizes = [2, 1, 8], strides = [1, 1, 1]} : vector<2x8x15xf32> to vector<2x1x8xf32>
    %127 = vector.extract_strided_slice %124 {offsets = [0, 2, 5], sizes = [2, 1, 8], strides = [1, 1, 1]} : vector<2x8x15xf32> to vector<2x1x8xf32>
    %128 = vector.extract_strided_slice %124 {offsets = [0, 3, 4], sizes = [2, 1, 8], strides = [1, 1, 1]} : vector<2x8x15xf32> to vector<2x1x8xf32>
    %129 = vector.extract_strided_slice %124 {offsets = [0, 4, 3], sizes = [2, 1, 8], strides = [1, 1, 1]} : vector<2x8x15xf32> to vector<2x1x8xf32>
    %130 = vector.extract_strided_slice %124 {offsets = [0, 5, 2], sizes = [2, 1, 8], strides = [1, 1, 1]} : vector<2x8x15xf32> to vector<2x1x8xf32>
    %131 = vector.extract_strided_slice %124 {offsets = [0, 6, 1], sizes = [2, 1, 8], strides = [1, 1, 1]} : vector<2x8x15xf32> to vector<2x1x8xf32>
    %132 = vector.extract_strided_slice %124 {offsets = [0, 7, 0], sizes = [2, 1, 8], strides = [1, 1, 1]} : vector<2x8x15xf32> to vector<2x1x8xf32>
    %133 = tpu.concatenate %125, %126, %127, %128, %129, %130, %131, %132 in 1 : vector<2x1x8xf32>, vector<2x1x8xf32>, vector<2x1x8xf32>, vector<2x1x8xf32>, vector<2x1x8xf32>, vector<2x1x8xf32>, vector<2x1x8xf32>, vector<2x1x8xf32> -> vector<2x8x8xf32>
    %134 = arith.addf %117, %133 : vector<2x8x8xf32>
    %135 = arith.addf %134, %5 : vector<2x8x8xf32>
    %cst_57 = arith.constant dense<0xFF800000> : vector<2x8xf32>
    %136 = vector.multi_reduction <maximumf>, %135, %cst_57 [2] : vector<2x8x8xf32> to vector<2x8xf32>
    %137 = vector.shape_cast %136 : vector<2x8xf32> to vector<2x8x1xf32>
    %138 = vector.broadcast %137 : vector<2x8x1xf32> to vector<2x8x8xf32>
    %139 = arith.subf %135, %138 : vector<2x8x8xf32>
    %140 = math.exp %139 : vector<2x8x8xf32>
    %cst_58 = arith.constant dense<0.000000e+00> : vector<2x8xf32>
    %141 = vector.multi_reduction <add>, %140, %cst_58 [2] : vector<2x8x8xf32> to vector<2x8xf32>
    %142 = vector.shape_cast %141 : vector<2x8xf32> to vector<2x8x1xf32>
    %143 = vector.broadcast %142 : vector<2x8x1xf32> to vector<2x8x8xf32>
    %144 = arith.divf %140, %143 : vector<2x8x8xf32>
    %c0_59 = arith.constant 0 : index
    %c1 = arith.constant 1 : index
    %c0_60 = arith.constant 0 : index
    %c0_61 = arith.constant 0 : index
    %c0_62 = arith.constant 0 : index
    %145 = vector.load %arg30[%c0_59, %c1, %c0_60, %c0_61, %c0_62] : memref<1x4x2x8x8xf32, #tpu.memory_space<vmem>>, vector<1x1x2x8x8xf32>
    %146 = vector.shape_cast %145 : vector<1x1x2x8x8xf32> to vector<2x8x8xf32>
    %147 = vector.shape_cast %144 : vector<2x8x8xf32> to vector<1x1x2x8x8xf32>
    tpu.vector_store %arg30[%c0_59, %c1, %c0_60, %c0_61, %c0_62], %147 {strides = array<i32>} : memref<1x4x2x8x8xf32, #tpu.memory_space<vmem>>, vector<1x1x2x8x8xf32>,
    %148 = vector.shape_cast %108 : vector<16x8xf32> to vector<2x8x8xf32>
    %149 = arith.truncf %144 : vector<2x8x8xf32> to vector<2x8x8xbf16>
    %150 = arith.truncf %148 : vector<2x8x8xf32> to vector<2x8x8xbf16>
    %cst_63 = arith.constant dense<0.000000e+00> : vector<2x8x8xf32>
    %151 = tpu.matmul %149, %150, %cst_63 {dimension_numbers = #tpu.dot_dimension_numbers<[2], [1], [1], [2], [0, 0, 0, 1, 1, 2], [0], [0]>} : vector<2x8x8xbf16>, vector<2x8x8xbf16>, vector<2x8x8xf32> -> vector<2x8x8xf32>
    %152 = vector.shape_cast %151 : vector<2x8x8xf32> to vector<16x8xf32>
    %c0_64 = arith.constant 0 : index
    %c8 = arith.constant 8 : index
    %153 = vector.load %arg32[%c0_64, %c8] : memref<16x32xf32, #tpu.memory_space<vmem>>, vector<16x8xf32>
    tpu.vector_store %arg32[%c0_64, %c8], %152 {strides = array<i32>} : memref<16x32xf32, #tpu.memory_space<vmem>>, vector<16x8xf32>,
    %154 = vector.extract_strided_slice %40 {offsets = [0, 16], sizes = [16, 8], strides = [1, 1]} : vector<16x96xf32> to vector<16x8xf32>
    %cst_65 = arith.constant 0.353553385 : f32
    %155 = vector.broadcast %cst_65 : f32 to vector<16x8xf32>
    %156 = arith.mulf %154, %155 : vector<16x8xf32>
    %157 = vector.extract_strided_slice %40 {offsets = [0, 48], sizes = [16, 8], strides = [1, 1]} : vector<16x96xf32> to vector<16x8xf32>
    %158 = vector.extract_strided_slice %40 {offsets = [0, 80], sizes = [16, 8], strides = [1, 1]} : vector<16x96xf32> to vector<16x8xf32>
    %159 = vector.extract_strided_slice %45 {offsets = [0, 16], sizes = [15, 8], strides = [1, 1]} : vector<15x32xf32> to vector<15x8xf32>
    %160 = vector.extract_strided_slice %49 {offsets = [2, 0], sizes = [1, 8], strides = [1, 1]} : vector<4x8xf32> to vector<1x8xf32>
    %161 = vector.broadcast %160 : vector<1x8xf32> to vector<16x8xf32>
    %162 = arith.addf %156, %161 : vector<16x8xf32>
    %163 = vector.shape_cast %162 : vector<16x8xf32> to vector<2x8x8xf32>
    %164 = vector.shape_cast %157 : vector<16x8xf32> to vector<2x8x8xf32>
    %165 = arith.truncf %163 : vector<2x8x8xf32> to vector<2x8x8xbf16>
    %166 = arith.truncf %164 : vector<2x8x8xf32> to vector<2x8x8xbf16>
    %cst_66 = arith.constant dense<0.000000e+00> : vector<2x8x8xf32>
    %167 = tpu.matmul %165, %166, %cst_66 {dimension_numbers = #tpu.dot_dimension_numbers<[2], [2], [1], [1], [0, 0, 0, 1, 1, 1], [0], [0]>} : vector<2x8x8xbf16>, vector<2x8x8xbf16>, vector<2x8x8xf32> -> vector<2x8x8xf32>
    %168 = vector.extract_strided_slice %53 {offsets = [2, 0], sizes = [1, 8], strides = [1, 1]} : vector<4x8xf32> to vector<1x8xf32>
    %169 = vector.broadcast %168 : vector<1x8xf32> to vector<16x8xf32>
    %170 = arith.addf %156, %169 : vector<16x8xf32>
    %171 = arith.truncf %170 : vector<16x8xf32> to vector<16x8xbf16>
    %172 = arith.truncf %159 : vector<15x8xf32> to vector<15x8xbf16>
    %cst_67 = arith.constant dense<0.000000e+00> : vector<16x15xf32>
    %173 = tpu.matmul %171, %172, %cst_67 {dimension_numbers = #tpu.dot_dimension_numbers<[1], [1], [0], [0], [0, 0, 1, 0], [], []>} : vector<16x8xbf16>, vector<15x8xbf16>, vector<16x15xf32> -> vector<16x15xf32>
    %174 = vector.shape_cast %173 : vector<16x15xf32> to vector<2x8x15xf32>
    %175 = vector.extract_strided_slice %174 {offsets = [0, 0, 7], sizes = [2, 1, 8], strides = [1, 1, 1]} : vector<2x8x15xf32> to vector<2x1x8xf32>
    %176 = vector.extract_strided_slice %174 {offsets = [0, 1, 6], sizes = [2, 1, 8], strides = [1, 1, 1]} : vector<2x8x15xf32> to vector<2x1x8xf32>
    %177 = vector.extract_strided_slice %174 {offsets = [0, 2, 5], sizes = [2, 1, 8], strides = [1, 1, 1]} : vector<2x8x15xf32> to vector<2x1x8xf32>
    %178 = vector.extract_strided_slice %174 {offsets = [0, 3, 4], sizes = [2, 1, 8], strides = [1, 1, 1]} : vector<2x8x15xf32> to vector<2x1x8xf32>
    %179 = vector.extract_strided_slice %174 {offsets = [0, 4, 3], sizes = [2, 1, 8], strides = [1, 1, 1]} : vector<2x8x15xf32> to vector<2x1x8xf32>
    %180 = vector.extract_strided_slice %174 {offsets = [0, 5, 2], sizes = [2, 1, 8], strides = [1, 1, 1]} : vector<2x8x15xf32> to vector<2x1x8xf32>
    %181 = vector.extract_strided_slice %174 {offsets = [0, 6, 1], sizes = [2, 1, 8], strides = [1, 1, 1]} : vector<2x8x15xf32> to vector<2x1x8xf32>
    %182 = vector.extract_strided_slice %174 {offsets = [0, 7, 0], sizes = [2, 1, 8], strides = [1, 1, 1]} : vector<2x8x15xf32> to vector<2x1x8xf32>
    %183 = tpu.concatenate %175, %176, %177, %178, %179, %180, %181, %182 in 1 : vector<2x1x8xf32>, vector<2x1x8xf32>, vector<2x1x8xf32>, vector<2x1x8xf32>, vector<2x1x8xf32>, vector<2x1x8xf32>, vector<2x1x8xf32>, vector<2x1x8xf32> -> vector<2x8x8xf32>
    %184 = arith.addf %167, %183 : vector<2x8x8xf32>
    %185 = arith.addf %184, %5 : vector<2x8x8xf32>
    %cst_68 = arith.constant dense<0xFF800000> : vector<2x8xf32>
    %186 = vector.multi_reduction <maximumf>, %185, %cst_68 [2] : vector<2x8x8xf32> to vector<2x8xf32>
    %187 = vector.shape_cast %186 : vector<2x8xf32> to vector<2x8x1xf32>
    %188 = vector.broadcast %187 : vector<2x8x1xf32> to vector<2x8x8xf32>
    %189 = arith.subf %185, %188 : vector<2x8x8xf32>
    %190 = math.exp %189 : vector<2x8x8xf32>
    %cst_69 = arith.constant dense<0.000000e+00> : vector<2x8xf32>
    %191 = vector.multi_reduction <add>, %190, %cst_69 [2] : vector<2x8x8xf32> to vector<2x8xf32>
    %192 = vector.shape_cast %191 : vector<2x8xf32> to vector<2x8x1xf32>
    %193 = vector.broadcast %192 : vector<2x8x1xf32> to vector<2x8x8xf32>
    %194 = arith.divf %190, %193 : vector<2x8x8xf32>
    %c0_70 = arith.constant 0 : index
    %c2 = arith.constant 2 : index
    %c0_71 = arith.constant 0 : index
    %c0_72 = arith.constant 0 : index
    %c0_73 = arith.constant 0 : index
    %195 = vector.load %arg30[%c0_70, %c2, %c0_71, %c0_72, %c0_73] : memref<1x4x2x8x8xf32, #tpu.memory_space<vmem>>, vector<1x1x2x8x8xf32>
    %196 = vector.shape_cast %195 : vector<1x1x2x8x8xf32> to vector<2x8x8xf32>
    %197 = vector.shape_cast %194 : vector<2x8x8xf32> to vector<1x1x2x8x8xf32>
    tpu.vector_store %arg30[%c0_70, %c2, %c0_71, %c0_72, %c0_73], %197 {strides = array<i32>} : memref<1x4x2x8x8xf32, #tpu.memory_space<vmem>>, vector<1x1x2x8x8xf32>,
    %198 = vector.shape_cast %158 : vector<16x8xf32> to vector<2x8x8xf32>
    %199 = arith.truncf %194 : vector<2x8x8xf32> to vector<2x8x8xbf16>
    %200 = arith.truncf %198 : vector<2x8x8xf32> to vector<2x8x8xbf16>
    %cst_74 = arith.constant dense<0.000000e+00> : vector<2x8x8xf32>
    %201 = tpu.matmul %199, %200, %cst_74 {dimension_numbers = #tpu.dot_dimension_numbers<[2], [1], [1], [2], [0, 0, 0, 1, 1, 2], [0], [0]>} : vector<2x8x8xbf16>, vector<2x8x8xbf16>, vector<2x8x8xf32> -> vector<2x8x8xf32>
    %202 = vector.shape_cast %201 : vector<2x8x8xf32> to vector<16x8xf32>
    %c0_75 = arith.constant 0 : index
    %c16 = arith.constant 16 : index
    %203 = vector.load %arg32[%c0_75, %c16] : memref<16x32xf32, #tpu.memory_space<vmem>>, vector<16x8xf32>
    tpu.vector_store %arg32[%c0_75, %c16], %202 {strides = array<i32>} : memref<16x32xf32, #tpu.memory_space<vmem>>, vector<16x8xf32>,
    %204 = vector.extract_strided_slice %40 {offsets = [0, 24], sizes = [16, 8], strides = [1, 1]} : vector<16x96xf32> to vector<16x8xf32>
    %cst_76 = arith.constant 0.353553385 : f32
    %205 = vector.broadcast %cst_76 : f32 to vector<16x8xf32>
    %206 = arith.mulf %204, %205 : vector<16x8xf32>
    %207 = vector.extract_strided_slice %40 {offsets = [0, 56], sizes = [16, 8], strides = [1, 1]} : vector<16x96xf32> to vector<16x8xf32>
    %208 = vector.extract_strided_slice %40 {offsets = [0, 88], sizes = [16, 8], strides = [1, 1]} : vector<16x96xf32> to vector<16x8xf32>
    %209 = vector.extract_strided_slice %45 {offsets = [0, 24], sizes = [15, 8], strides = [1, 1]} : vector<15x32xf32> to vector<15x8xf32>
    %210 = vector.extract_strided_slice %49 {offsets = [3, 0], sizes = [1, 8], strides = [1, 1]} : vector<4x8xf32> to vector<1x8xf32>
    %211 = vector.broadcast %210 : vector<1x8xf32> to vector<16x8xf32>
    %212 = arith.addf %206, %211 : vector<16x8xf32>
    %213 = vector.shape_cast %212 : vector<16x8xf32> to vector<2x8x8xf32>
    %214 = vector.shape_cast %207 : vector<16x8xf32> to vector<2x8x8xf32>
    %215 = arith.truncf %213 : vector<2x8x8xf32> to vector<2x8x8xbf16>
    %216 = arith.truncf %214 : vector<2x8x8xf32> to vector<2x8x8xbf16>
    %cst_77 = arith.constant dense<0.000000e+00> : vector<2x8x8xf32>
    %217 = tpu.matmul %215, %216, %cst_77 {dimension_numbers = #tpu.dot_dimension_numbers<[2], [2], [1], [1], [0, 0, 0, 1, 1, 1], [0], [0]>} : vector<2x8x8xbf16>, vector<2x8x8xbf16>, vector<2x8x8xf32> -> vector<2x8x8xf32>
    %218 = vector.extract_strided_slice %53 {offsets = [3, 0], sizes = [1, 8], strides = [1, 1]} : vector<4x8xf32> to vector<1x8xf32>
    %219 = vector.broadcast %218 : vector<1x8xf32> to vector<16x8xf32>
    %220 = arith.addf %206, %219 : vector<16x8xf32>
    %221 = arith.truncf %220 : vector<16x8xf32> to vector<16x8xbf16>
    %222 = arith.truncf %209 : vector<15x8xf32> to vector<15x8xbf16>
    %cst_78 = arith.constant dense<0.000000e+00> : vector<16x15xf32>
    %223 = tpu.matmul %221, %222, %cst_78 {dimension_numbers = #tpu.dot_dimension_numbers<[1], [1], [0], [0], [0, 0, 1, 0], [], []>} : vector<16x8xbf16>, vector<15x8xbf16>, vector<16x15xf32> -> vector<16x15xf32>
    %224 = vector.shape_cast %223 : vector<16x15xf32> to vector<2x8x15xf32>
    %225 = vector.extract_strided_slice %224 {offsets = [0, 0, 7], sizes = [2, 1, 8], strides = [1, 1, 1]} : vector<2x8x15xf32> to vector<2x1x8xf32>
    %226 = vector.extract_strided_slice %224 {offsets = [0, 1, 6], sizes = [2, 1, 8], strides = [1, 1, 1]} : vector<2x8x15xf32> to vector<2x1x8xf32>
    %227 = vector.extract_strided_slice %224 {offsets = [0, 2, 5], sizes = [2, 1, 8], strides = [1, 1, 1]} : vector<2x8x15xf32> to vector<2x1x8xf32>
    %228 = vector.extract_strided_slice %224 {offsets = [0, 3, 4], sizes = [2, 1, 8], strides = [1, 1, 1]} : vector<2x8x15xf32> to vector<2x1x8xf32>
    %229 = vector.extract_strided_slice %224 {offsets = [0, 4, 3], sizes = [2, 1, 8], strides = [1, 1, 1]} : vector<2x8x15xf32> to vector<2x1x8xf32>
    %230 = vector.extract_strided_slice %224 {offsets = [0, 5, 2], sizes = [2, 1, 8], strides = [1, 1, 1]} : vector<2x8x15xf32> to vector<2x1x8xf32>
    %231 = vector.extract_strided_slice %224 {offsets = [0, 6, 1], sizes = [2, 1, 8], strides = [1, 1, 1]} : vector<2x8x15xf32> to vector<2x1x8xf32>
    %232 = vector.extract_strided_slice %224 {offsets = [0, 7, 0], sizes = [2, 1, 8], strides = [1, 1, 1]} : vector<2x8x15xf32> to vector<2x1x8xf32>
    %233 = tpu.concatenate %225, %226, %227, %228, %229, %230, %231, %232 in 1 : vector<2x1x8xf32>, vector<2x1x8xf32>, vector<2x1x8xf32>, vector<2x1x8xf32>, vector<2x1x8xf32>, vector<2x1x8xf32>, vector<2x1x8xf32>, vector<2x1x8xf32> -> vector<2x8x8xf32>
    %234 = arith.addf %217, %233 : vector<2x8x8xf32>
    %235 = arith.addf %234, %5 : vector<2x8x8xf32>
    %cst_79 = arith.constant dense<0xFF800000> : vector<2x8xf32>
    %236 = vector.multi_reduction <maximumf>, %235, %cst_79 [2] : vector<2x8x8xf32> to vector<2x8xf32>
    %237 = vector.shape_cast %236 : vector<2x8xf32> to vector<2x8x1xf32>
    %238 = vector.broadcast %237 : vector<2x8x1xf32> to vector<2x8x8xf32>
    %239 = arith.subf %235, %238 : vector<2x8x8xf32>
    %240 = math.exp %239 : vector<2x8x8xf32>
    %cst_80 = arith.constant dense<0.000000e+00> : vector<2x8xf32>
    %241 = vector.multi_reduction <add>, %240, %cst_80 [2] : vector<2x8x8xf32> to vector<2x8xf32>
    %242 = vector.shape_cast %241 : vector<2x8xf32> to vector<2x8x1xf32>
    %243 = vector.broadcast %242 : vector<2x8x1xf32> to vector<2x8x8xf32>
    %244 = arith.divf %240, %243 : vector<2x8x8xf32>
    %c0_81 = arith.constant 0 : index
    %c3 = arith.constant 3 : index
    %c0_82 = arith.constant 0 : index
    %c0_83 = arith.constant 0 : index
    %c0_84 = arith.constant 0 : index
    %245 = vector.load %arg30[%c0_81, %c3, %c0_82, %c0_83, %c0_84] : memref<1x4x2x8x8xf32, #tpu.memory_space<vmem>>, vector<1x1x2x8x8xf32>
    %246 = vector.shape_cast %245 : vector<1x1x2x8x8xf32> to vector<2x8x8xf32>
    %247 = vector.shape_cast %244 : vector<2x8x8xf32> to vector<1x1x2x8x8xf32>
    tpu.vector_store %arg30[%c0_81, %c3, %c0_82, %c0_83, %c0_84], %247 {strides = array<i32>} : memref<1x4x2x8x8xf32, #tpu.memory_space<vmem>>, vector<1x1x2x8x8xf32>,
    %248 = vector.shape_cast %208 : vector<16x8xf32> to vector<2x8x8xf32>
    %249 = arith.truncf %244 : vector<2x8x8xf32> to vector<2x8x8xbf16>
    %250 = arith.truncf %248 : vector<2x8x8xf32> to vector<2x8x8xbf16>
    %cst_85 = arith.constant dense<0.000000e+00> : vector<2x8x8xf32>
    %251 = tpu.matmul %249, %250, %cst_85 {dimension_numbers = #tpu.dot_dimension_numbers<[2], [1], [1], [2], [0, 0, 0, 1, 1, 2], [0], [0]>} : vector<2x8x8xbf16>, vector<2x8x8xbf16>, vector<2x8x8xf32> -> vector<2x8x8xf32>
    %252 = vector.shape_cast %251 : vector<2x8x8xf32> to vector<16x8xf32>
    %c0_86 = arith.constant 0 : index
    %c24 = arith.constant 24 : index
    %253 = vector.load %arg32[%c0_86, %c24] : memref<16x32xf32, #tpu.memory_space<vmem>>, vector<16x8xf32>
    tpu.vector_store %arg32[%c0_86, %c24], %252 {strides = array<i32>} : memref<16x32xf32, #tpu.memory_space<vmem>>, vector<16x8xf32>,
    %c0_87 = arith.constant 0 : index
    %c0_88 = arith.constant 0 : index
    %254 = vector.load %arg32[%c0_87, %c0_88] : memref<16x32xf32, #tpu.memory_space<vmem>>, vector<16x32xf32>
    %c0_89 = arith.constant 0 : index
    %c0_90 = arith.constant 0 : index
    %c0_91 = arith.constant 0 : index
    %255 = vector.load %arg13[%c0_89, %c0_90, %c0_91] : memref<1x32x32xbf16, #tpu.memory_space<vmem>>, vector<1x32x32xbf16>
    %256 = vector.shape_cast %255 : vector<1x32x32xbf16> to vector<32x32xbf16>
    %257 = arith.truncf %254 : vector<16x32xf32> to vector<16x32xbf16>
    %cst_92 = arith.constant dense<0.000000e+00> : vector<16x32xf32>
    %258 = tpu.matmul %257, %256, %cst_92 {dimension_numbers = #tpu.dot_dimension_numbers<[1], [0], [0], [1], [0, 0, 1, 1], [], []>} : vector<16x32xbf16>, vector<32x32xbf16>, vector<16x32xf32> -> vector<16x32xf32>
    %259 = arith.addf %32, %258 : vector<16x32xf32>
    %c0_93 = arith.constant 0 : index
    %c0_94 = arith.constant 0 : index
    %c0_95 = arith.constant 0 : index
    %260 = vector.load %arg14[%c0_93, %c0_94, %c0_95] : memref<1x1x32xf32, #tpu.memory_space<vmem>>, vector<1x1x32xf32>
    %261 = vector.shape_cast %260 : vector<1x1x32xf32> to vector<1x32xf32>
    %262 = vector.broadcast %261 : vector<1x32xf32> to vector<16x32xf32>
    %263 = arith.addf %259, %262 : vector<16x32xf32>
    %c0_96 = arith.constant 0 : index
    %c0_97 = arith.constant 0 : index
    %c0_98 = arith.constant 0 : index
    %264 = vector.load %arg15[%c0_96, %c0_97, %c0_98] : memref<1x1x32xf32, #tpu.memory_space<vmem>>, vector<1x1x32xf32>
    %265 = vector.shape_cast %264 : vector<1x1x32xf32> to vector<1x32xf32>
    %c0_99 = arith.constant 0 : index
    %c0_100 = arith.constant 0 : index
    %c0_101 = arith.constant 0 : index
    %266 = vector.load %arg16[%c0_99, %c0_100, %c0_101] : memref<1x1x32xf32, #tpu.memory_space<vmem>>, vector<1x1x32xf32>
    %267 = vector.shape_cast %266 : vector<1x1x32xf32> to vector<1x32xf32>
    %cst_102 = arith.constant dense<0.000000e+00> : vector<16xf32>
    %268 = vector.multi_reduction <add>, %263, %cst_102 [1] : vector<16x32xf32> to vector<16xf32>
    %269 = vector.shape_cast %268 : vector<16xf32> to vector<16x1xf32>
    %cst_103 = arith.constant 3.200000e+01 : f32
    %270 = vector.broadcast %cst_103 : f32 to vector<16x1xf32>
    %271 = arith.divf %269, %270 : vector<16x1xf32>
    %272 = vector.broadcast %271 : vector<16x1xf32> to vector<16x32xf32>
    %273 = arith.subf %263, %272 : vector<16x32xf32>
    %274 = arith.mulf %273, %273 : vector<16x32xf32>
    %cst_104 = arith.constant dense<0.000000e+00> : vector<16xf32>
    %275 = vector.multi_reduction <add>, %274, %cst_104 [1] : vector<16x32xf32> to vector<16xf32>
    %276 = vector.shape_cast %275 : vector<16xf32> to vector<16x1xf32>
    %cst_105 = arith.constant 3.200000e+01 : f32
    %277 = vector.broadcast %cst_105 : f32 to vector<16x1xf32>
    %278 = arith.divf %276, %277 : vector<16x1xf32>
    %279 = vector.broadcast %271 : vector<16x1xf32> to vector<16x32xf32>
    %280 = arith.subf %263, %279 : vector<16x32xf32>
    %cst_106 = arith.constant 9.99999974E-6 : f32
    %281 = vector.broadcast %cst_106 : f32 to vector<16x1xf32>
    %282 = arith.addf %278, %281 : vector<16x1xf32>
    %283 = math.rsqrt %282 : vector<16x1xf32>
    %284 = vector.broadcast %283 : vector<16x1xf32> to vector<16x32xf32>
    %285 = arith.mulf %280, %284 : vector<16x32xf32>
    %286 = vector.broadcast %265 : vector<1x32xf32> to vector<16x32xf32>
    %287 = arith.mulf %285, %286 : vector<16x32xf32>
    %288 = vector.broadcast %267 : vector<1x32xf32> to vector<16x32xf32>
    %289 = arith.addf %287, %288 : vector<16x32xf32>
    %c0_107 = arith.constant 0 : index
    %c0_108 = arith.constant 0 : index
    %c0_109 = arith.constant 0 : index
    %290 = vector.load %arg17[%c0_107, %c0_108, %c0_109] : memref<1x32x32xbf16, #tpu.memory_space<vmem>>, vector<1x32x32xbf16>
    %291 = vector.shape_cast %290 : vector<1x32x32xbf16> to vector<32x32xbf16>
    %292 = arith.truncf %289 : vector<16x32xf32> to vector<16x32xbf16>
    %cst_110 = arith.constant dense<0.000000e+00> : vector<16x32xf32>
    %293 = tpu.matmul %292, %291, %cst_110 {dimension_numbers = #tpu.dot_dimension_numbers<[1], [0], [0], [1], [0, 0, 1, 1], [], []>} : vector<16x32xbf16>, vector<32x32xbf16>, vector<16x32xf32> -> vector<16x32xf32>
    %c0_111 = arith.constant 0 : index
    %c0_112 = arith.constant 0 : index
    %c0_113 = arith.constant 0 : index
    %294 = vector.load %arg18[%c0_111, %c0_112, %c0_113] : memref<1x1x32xf32, #tpu.memory_space<vmem>>, vector<1x1x32xf32>
    %295 = vector.shape_cast %294 : vector<1x1x32xf32> to vector<1x32xf32>
    %296 = vector.broadcast %295 : vector<1x32xf32> to vector<16x32xf32>
    %297 = arith.addf %293, %296 : vector<16x32xf32>
    %cst_114 = arith.constant 0.353553385 : f32
    %298 = vector.broadcast %cst_114 : f32 to vector<16x32xf32>
    %299 = arith.mulf %297, %298 : vector<16x32xf32>
    %c0_115 = arith.constant 0 : index
    %c0_116 = arith.constant 0 : index
    %c0_117 = arith.constant 0 : index
    %300 = vector.load %arg19[%c0_115, %c0_116, %c0_117] : memref<1x32x64xbf16, #tpu.memory_space<vmem>>, vector<1x32x64xbf16>
    %301 = vector.shape_cast %300 : vector<1x32x64xbf16> to vector<32x64xbf16>
    %302 = arith.truncf %4 : vector<32x32xf32> to vector<32x32xbf16>
    %cst_118 = arith.constant dense<0.000000e+00> : vector<32x64xf32>
    %303 = tpu.matmul %302, %301, %cst_118 {dimension_numbers = #tpu.dot_dimension_numbers<[1], [0], [0], [1], [0, 0, 1, 1], [], []>} : vector<32x32xbf16>, vector<32x64xbf16>, vector<32x64xf32> -> vector<32x64xf32>
    %c0_119 = arith.constant 0 : index
    %c0_120 = arith.constant 0 : index
    %c0_121 = arith.constant 0 : index
    %304 = vector.load %arg20[%c0_119, %c0_120, %c0_121] : memref<1x1x64xf32, #tpu.memory_space<vmem>>, vector<1x1x64xf32>
    %305 = vector.shape_cast %304 : vector<1x1x64xf32> to vector<1x64xf32>
    %306 = vector.broadcast %305 : vector<1x64xf32> to vector<32x64xf32>
    %307 = arith.addf %303, %306 : vector<32x64xf32>
    %308 = vector.extract_strided_slice %299 {offsets = [0, 0], sizes = [16, 8], strides = [1, 1]} : vector<16x32xf32> to vector<16x8xf32>
    %309 = vector.shape_cast %308 : vector<16x8xf32> to vector<2x8x8xf32>
    %310 = vector.extract_strided_slice %307 {offsets = [0, 0], sizes = [32, 8], strides = [1, 1]} : vector<32x64xf32> to vector<32x8xf32>
    %311 = vector.shape_cast %310 : vector<32x8xf32> to vector<2x16x8xf32>
    %312 = vector.extract_strided_slice %307 {offsets = [0, 32], sizes = [32, 8], strides = [1, 1]} : vector<32x64xf32> to vector<32x8xf32>
    %313 = vector.shape_cast %312 : vector<32x8xf32> to vector<2x16x8xf32>
    %314 = arith.truncf %309 : vector<2x8x8xf32> to vector<2x8x8xbf16>
    %315 = arith.truncf %311 : vector<2x16x8xf32> to vector<2x16x8xbf16>
    %cst_122 = arith.constant dense<0.000000e+00> : vector<2x8x16xf32>
    %316 = tpu.matmul %314, %315, %cst_122 {dimension_numbers = #tpu.dot_dimension_numbers<[2], [2], [1], [1], [0, 0, 0, 1, 1, 1], [0], [0]>} : vector<2x8x8xbf16>, vector<2x16x8xbf16>, vector<2x8x16xf32> -> vector<2x8x16xf32>
    %317 = vector.broadcast %6 : vector<2x1x16xf32> to vector<2x8x16xf32>
    %318 = arith.addf %316, %317 : vector<2x8x16xf32>
    %cst_123 = arith.constant dense<0xFF800000> : vector<2x8xf32>
    %319 = vector.multi_reduction <maximumf>, %318, %cst_123 [2] : vector<2x8x16xf32> to vector<2x8xf32>
    %320 = vector.shape_cast %319 : vector<2x8xf32> to vector<2x8x1xf32>
    %321 = vector.broadcast %320 : vector<2x8x1xf32> to vector<2x8x16xf32>
    %322 = arith.subf %318, %321 : vector<2x8x16xf32>
    %323 = math.exp %322 : vector<2x8x16xf32>
    %cst_124 = arith.constant dense<0.000000e+00> : vector<2x8xf32>
    %324 = vector.multi_reduction <add>, %323, %cst_124 [2] : vector<2x8x16xf32> to vector<2x8xf32>
    %325 = vector.shape_cast %324 : vector<2x8xf32> to vector<2x8x1xf32>
    %326 = vector.broadcast %325 : vector<2x8x1xf32> to vector<2x8x16xf32>
    %327 = arith.divf %323, %326 : vector<2x8x16xf32>
    %c0_125 = arith.constant 0 : index
    %c0_126 = arith.constant 0 : index
    %c0_127 = arith.constant 0 : index
    %c0_128 = arith.constant 0 : index
    %c0_129 = arith.constant 0 : index
    %328 = vector.load %arg31[%c0_125, %c0_126, %c0_127, %c0_128, %c0_129] : memref<1x4x2x8x16xf32, #tpu.memory_space<vmem>>, vector<1x1x2x8x16xf32>
    %329 = vector.shape_cast %328 : vector<1x1x2x8x16xf32> to vector<2x8x16xf32>
    %330 = vector.shape_cast %327 : vector<2x8x16xf32> to vector<1x1x2x8x16xf32>
    tpu.vector_store %arg31[%c0_125, %c0_126, %c0_127, %c0_128, %c0_129], %330 {strides = array<i32>} : memref<1x4x2x8x16xf32, #tpu.memory_space<vmem>>, vector<1x1x2x8x16xf32>,
    %331 = arith.truncf %327 : vector<2x8x16xf32> to vector<2x8x16xbf16>
    %332 = arith.truncf %313 : vector<2x16x8xf32> to vector<2x16x8xbf16>
    %cst_130 = arith.constant dense<0.000000e+00> : vector<2x8x8xf32>
    %333 = tpu.matmul %331, %332, %cst_130 {dimension_numbers = #tpu.dot_dimension_numbers<[2], [1], [1], [2], [0, 0, 0, 1, 1, 2], [0], [0]>} : vector<2x8x16xbf16>, vector<2x16x8xbf16>, vector<2x8x8xf32> -> vector<2x8x8xf32>
    %334 = vector.shape_cast %333 : vector<2x8x8xf32> to vector<16x8xf32>
    %c0_131 = arith.constant 0 : index
    %c0_132 = arith.constant 0 : index
    %335 = vector.load %arg32[%c0_131, %c0_132] : memref<16x32xf32, #tpu.memory_space<vmem>>, vector<16x8xf32>
    tpu.vector_store %arg32[%c0_131, %c0_132], %334 {strides = array<i32>} : memref<16x32xf32, #tpu.memory_space<vmem>>, vector<16x8xf32>,
    %336 = vector.extract_strided_slice %299 {offsets = [0, 8], sizes = [16, 8], strides = [1, 1]} : vector<16x32xf32> to vector<16x8xf32>
    %337 = vector.shape_cast %336 : vector<16x8xf32> to vector<2x8x8xf32>
    %338 = vector.extract_strided_slice %307 {offsets = [0, 8], sizes = [32, 8], strides = [1, 1]} : vector<32x64xf32> to vector<32x8xf32>
    %339 = vector.shape_cast %338 : vector<32x8xf32> to vector<2x16x8xf32>
    %340 = vector.extract_strided_slice %307 {offsets = [0, 40], sizes = [32, 8], strides = [1, 1]} : vector<32x64xf32> to vector<32x8xf32>
    %341 = vector.shape_cast %340 : vector<32x8xf32> to vector<2x16x8xf32>
    %342 = arith.truncf %337 : vector<2x8x8xf32> to vector<2x8x8xbf16>
    %343 = arith.truncf %339 : vector<2x16x8xf32> to vector<2x16x8xbf16>
    %cst_133 = arith.constant dense<0.000000e+00> : vector<2x8x16xf32>
    %344 = tpu.matmul %342, %343, %cst_133 {dimension_numbers = #tpu.dot_dimension_numbers<[2], [2], [1], [1], [0, 0, 0, 1, 1, 1], [0], [0]>} : vector<2x8x8xbf16>, vector<2x16x8xbf16>, vector<2x8x16xf32> -> vector<2x8x16xf32>
    %345 = vector.broadcast %6 : vector<2x1x16xf32> to vector<2x8x16xf32>
    %346 = arith.addf %344, %345 : vector<2x8x16xf32>
    %cst_134 = arith.constant dense<0xFF800000> : vector<2x8xf32>
    %347 = vector.multi_reduction <maximumf>, %346, %cst_134 [2] : vector<2x8x16xf32> to vector<2x8xf32>
    %348 = vector.shape_cast %347 : vector<2x8xf32> to vector<2x8x1xf32>
    %349 = vector.broadcast %348 : vector<2x8x1xf32> to vector<2x8x16xf32>
    %350 = arith.subf %346, %349 : vector<2x8x16xf32>
    %351 = math.exp %350 : vector<2x8x16xf32>
    %cst_135 = arith.constant dense<0.000000e+00> : vector<2x8xf32>
    %352 = vector.multi_reduction <add>, %351, %cst_135 [2] : vector<2x8x16xf32> to vector<2x8xf32>
    %353 = vector.shape_cast %352 : vector<2x8xf32> to vector<2x8x1xf32>
    %354 = vector.broadcast %353 : vector<2x8x1xf32> to vector<2x8x16xf32>
    %355 = arith.divf %351, %354 : vector<2x8x16xf32>
    %c0_136 = arith.constant 0 : index
    %c1_137 = arith.constant 1 : index
    %c0_138 = arith.constant 0 : index
    %c0_139 = arith.constant 0 : index
    %c0_140 = arith.constant 0 : index
    %356 = vector.load %arg31[%c0_136, %c1_137, %c0_138, %c0_139, %c0_140] : memref<1x4x2x8x16xf32, #tpu.memory_space<vmem>>, vector<1x1x2x8x16xf32>
    %357 = vector.shape_cast %356 : vector<1x1x2x8x16xf32> to vector<2x8x16xf32>
    %358 = vector.shape_cast %355 : vector<2x8x16xf32> to vector<1x1x2x8x16xf32>
    tpu.vector_store %arg31[%c0_136, %c1_137, %c0_138, %c0_139, %c0_140], %358 {strides = array<i32>} : memref<1x4x2x8x16xf32, #tpu.memory_space<vmem>>, vector<1x1x2x8x16xf32>,
    %359 = arith.truncf %355 : vector<2x8x16xf32> to vector<2x8x16xbf16>
    %360 = arith.truncf %341 : vector<2x16x8xf32> to vector<2x16x8xbf16>
    %cst_141 = arith.constant dense<0.000000e+00> : vector<2x8x8xf32>
    %361 = tpu.matmul %359, %360, %cst_141 {dimension_numbers = #tpu.dot_dimension_numbers<[2], [1], [1], [2], [0, 0, 0, 1, 1, 2], [0], [0]>} : vector<2x8x16xbf16>, vector<2x16x8xbf16>, vector<2x8x8xf32> -> vector<2x8x8xf32>
    %362 = vector.shape_cast %361 : vector<2x8x8xf32> to vector<16x8xf32>
    %c0_142 = arith.constant 0 : index
    %c8_143 = arith.constant 8 : index
    %363 = vector.load %arg32[%c0_142, %c8_143] : memref<16x32xf32, #tpu.memory_space<vmem>>, vector<16x8xf32>
    tpu.vector_store %arg32[%c0_142, %c8_143], %362 {strides = array<i32>} : memref<16x32xf32, #tpu.memory_space<vmem>>, vector<16x8xf32>,
    %364 = vector.extract_strided_slice %299 {offsets = [0, 16], sizes = [16, 8], strides = [1, 1]} : vector<16x32xf32> to vector<16x8xf32>
    %365 = vector.shape_cast %364 : vector<16x8xf32> to vector<2x8x8xf32>
    %366 = vector.extract_strided_slice %307 {offsets = [0, 16], sizes = [32, 8], strides = [1, 1]} : vector<32x64xf32> to vector<32x8xf32>
    %367 = vector.shape_cast %366 : vector<32x8xf32> to vector<2x16x8xf32>
    %368 = vector.extract_strided_slice %307 {offsets = [0, 48], sizes = [32, 8], strides = [1, 1]} : vector<32x64xf32> to vector<32x8xf32>
    %369 = vector.shape_cast %368 : vector<32x8xf32> to vector<2x16x8xf32>
    %370 = arith.truncf %365 : vector<2x8x8xf32> to vector<2x8x8xbf16>
    %371 = arith.truncf %367 : vector<2x16x8xf32> to vector<2x16x8xbf16>
    %cst_144 = arith.constant dense<0.000000e+00> : vector<2x8x16xf32>
    %372 = tpu.matmul %370, %371, %cst_144 {dimension_numbers = #tpu.dot_dimension_numbers<[2], [2], [1], [1], [0, 0, 0, 1, 1, 1], [0], [0]>} : vector<2x8x8xbf16>, vector<2x16x8xbf16>, vector<2x8x16xf32> -> vector<2x8x16xf32>
    %373 = vector.broadcast %6 : vector<2x1x16xf32> to vector<2x8x16xf32>
    %374 = arith.addf %372, %373 : vector<2x8x16xf32>
    %cst_145 = arith.constant dense<0xFF800000> : vector<2x8xf32>
    %375 = vector.multi_reduction <maximumf>, %374, %cst_145 [2] : vector<2x8x16xf32> to vector<2x8xf32>
    %376 = vector.shape_cast %375 : vector<2x8xf32> to vector<2x8x1xf32>
    %377 = vector.broadcast %376 : vector<2x8x1xf32> to vector<2x8x16xf32>
    %378 = arith.subf %374, %377 : vector<2x8x16xf32>
    %379 = math.exp %378 : vector<2x8x16xf32>
    %cst_146 = arith.constant dense<0.000000e+00> : vector<2x8xf32>
    %380 = vector.multi_reduction <add>, %379, %cst_146 [2] : vector<2x8x16xf32> to vector<2x8xf32>
    %381 = vector.shape_cast %380 : vector<2x8xf32> to vector<2x8x1xf32>
    %382 = vector.broadcast %381 : vector<2x8x1xf32> to vector<2x8x16xf32>
    %383 = arith.divf %379, %382 : vector<2x8x16xf32>
    %c0_147 = arith.constant 0 : index
    %c2_148 = arith.constant 2 : index
    %c0_149 = arith.constant 0 : index
    %c0_150 = arith.constant 0 : index
    %c0_151 = arith.constant 0 : index
    %384 = vector.load %arg31[%c0_147, %c2_148, %c0_149, %c0_150, %c0_151] : memref<1x4x2x8x16xf32, #tpu.memory_space<vmem>>, vector<1x1x2x8x16xf32>
    %385 = vector.shape_cast %384 : vector<1x1x2x8x16xf32> to vector<2x8x16xf32>
    %386 = vector.shape_cast %383 : vector<2x8x16xf32> to vector<1x1x2x8x16xf32>
    tpu.vector_store %arg31[%c0_147, %c2_148, %c0_149, %c0_150, %c0_151], %386 {strides = array<i32>} : memref<1x4x2x8x16xf32, #tpu.memory_space<vmem>>, vector<1x1x2x8x16xf32>,
    %387 = arith.truncf %383 : vector<2x8x16xf32> to vector<2x8x16xbf16>
    %388 = arith.truncf %369 : vector<2x16x8xf32> to vector<2x16x8xbf16>
    %cst_152 = arith.constant dense<0.000000e+00> : vector<2x8x8xf32>
    %389 = tpu.matmul %387, %388, %cst_152 {dimension_numbers = #tpu.dot_dimension_numbers<[2], [1], [1], [2], [0, 0, 0, 1, 1, 2], [0], [0]>} : vector<2x8x16xbf16>, vector<2x16x8xbf16>, vector<2x8x8xf32> -> vector<2x8x8xf32>
    %390 = vector.shape_cast %389 : vector<2x8x8xf32> to vector<16x8xf32>
    %c0_153 = arith.constant 0 : index
    %c16_154 = arith.constant 16 : index
    %391 = vector.load %arg32[%c0_153, %c16_154] : memref<16x32xf32, #tpu.memory_space<vmem>>, vector<16x8xf32>
    tpu.vector_store %arg32[%c0_153, %c16_154], %390 {strides = array<i32>} : memref<16x32xf32, #tpu.memory_space<vmem>>, vector<16x8xf32>,
    %392 = vector.extract_strided_slice %299 {offsets = [0, 24], sizes = [16, 8], strides = [1, 1]} : vector<16x32xf32> to vector<16x8xf32>
    %393 = vector.shape_cast %392 : vector<16x8xf32> to vector<2x8x8xf32>
    %394 = vector.extract_strided_slice %307 {offsets = [0, 24], sizes = [32, 8], strides = [1, 1]} : vector<32x64xf32> to vector<32x8xf32>
    %395 = vector.shape_cast %394 : vector<32x8xf32> to vector<2x16x8xf32>
    %396 = vector.extract_strided_slice %307 {offsets = [0, 56], sizes = [32, 8], strides = [1, 1]} : vector<32x64xf32> to vector<32x8xf32>
    %397 = vector.shape_cast %396 : vector<32x8xf32> to vector<2x16x8xf32>
    %398 = arith.truncf %393 : vector<2x8x8xf32> to vector<2x8x8xbf16>
    %399 = arith.truncf %395 : vector<2x16x8xf32> to vector<2x16x8xbf16>
    %cst_155 = arith.constant dense<0.000000e+00> : vector<2x8x16xf32>
    %400 = tpu.matmul %398, %399, %cst_155 {dimension_numbers = #tpu.dot_dimension_numbers<[2], [2], [1], [1], [0, 0, 0, 1, 1, 1], [0], [0]>} : vector<2x8x8xbf16>, vector<2x16x8xbf16>, vector<2x8x16xf32> -> vector<2x8x16xf32>
    %401 = vector.broadcast %6 : vector<2x1x16xf32> to vector<2x8x16xf32>
    %402 = arith.addf %400, %401 : vector<2x8x16xf32>
    %cst_156 = arith.constant dense<0xFF800000> : vector<2x8xf32>
    %403 = vector.multi_reduction <maximumf>, %402, %cst_156 [2] : vector<2x8x16xf32> to vector<2x8xf32>
    %404 = vector.shape_cast %403 : vector<2x8xf32> to vector<2x8x1xf32>
    %405 = vector.broadcast %404 : vector<2x8x1xf32> to vector<2x8x16xf32>
    %406 = arith.subf %402, %405 : vector<2x8x16xf32>
    %407 = math.exp %406 : vector<2x8x16xf32>
    %cst_157 = arith.constant dense<0.000000e+00> : vector<2x8xf32>
    %408 = vector.multi_reduction <add>, %407, %cst_157 [2] : vector<2x8x16xf32> to vector<2x8xf32>
    %409 = vector.shape_cast %408 : vector<2x8xf32> to vector<2x8x1xf32>
    %410 = vector.broadcast %409 : vector<2x8x1xf32> to vector<2x8x16xf32>
    %411 = arith.divf %407, %410 : vector<2x8x16xf32>
    %c0_158 = arith.constant 0 : index
    %c3_159 = arith.constant 3 : index
    %c0_160 = arith.constant 0 : index
    %c0_161 = arith.constant 0 : index
    %c0_162 = arith.constant 0 : index
    %412 = vector.load %arg31[%c0_158, %c3_159, %c0_160, %c0_161, %c0_162] : memref<1x4x2x8x16xf32, #tpu.memory_space<vmem>>, vector<1x1x2x8x16xf32>
    %413 = vector.shape_cast %412 : vector<1x1x2x8x16xf32> to vector<2x8x16xf32>
    %414 = vector.shape_cast %411 : vector<2x8x16xf32> to vector<1x1x2x8x16xf32>
    tpu.vector_store %arg31[%c0_158, %c3_159, %c0_160, %c0_161, %c0_162], %414 {strides = array<i32>} : memref<1x4x2x8x16xf32, #tpu.memory_space<vmem>>, vector<1x1x2x8x16xf32>,
    %415 = arith.truncf %411 : vector<2x8x16xf32> to vector<2x8x16xbf16>
    %416 = arith.truncf %397 : vector<2x16x8xf32> to vector<2x16x8xbf16>
    %cst_163 = arith.constant dense<0.000000e+00> : vector<2x8x8xf32>
    %417 = tpu.matmul %415, %416, %cst_163 {dimension_numbers = #tpu.dot_dimension_numbers<[2], [1], [1], [2], [0, 0, 0, 1, 1, 2], [0], [0]>} : vector<2x8x16xbf16>, vector<2x16x8xbf16>, vector<2x8x8xf32> -> vector<2x8x8xf32>
    %418 = vector.shape_cast %417 : vector<2x8x8xf32> to vector<16x8xf32>
    %c0_164 = arith.constant 0 : index
    %c24_165 = arith.constant 24 : index
    %419 = vector.load %arg32[%c0_164, %c24_165] : memref<16x32xf32, #tpu.memory_space<vmem>>, vector<16x8xf32>
    tpu.vector_store %arg32[%c0_164, %c24_165], %418 {strides = array<i32>} : memref<16x32xf32, #tpu.memory_space<vmem>>, vector<16x8xf32>,
    %c0_166 = arith.constant 0 : index
    %c0_167 = arith.constant 0 : index
    %420 = vector.load %arg32[%c0_166, %c0_167] : memref<16x32xf32, #tpu.memory_space<vmem>>, vector<16x32xf32>
    %c0_168 = arith.constant 0 : index
    %c0_169 = arith.constant 0 : index
    %c0_170 = arith.constant 0 : index
    %421 = vector.load %arg21[%c0_168, %c0_169, %c0_170] : memref<1x32x32xbf16, #tpu.memory_space<vmem>>, vector<1x32x32xbf16>
    %422 = vector.shape_cast %421 : vector<1x32x32xbf16> to vector<32x32xbf16>
    %423 = arith.truncf %420 : vector<16x32xf32> to vector<16x32xbf16>
    %cst_171 = arith.constant dense<0.000000e+00> : vector<16x32xf32>
    %424 = tpu.matmul %423, %422, %cst_171 {dimension_numbers = #tpu.dot_dimension_numbers<[1], [0], [0], [1], [0, 0, 1, 1], [], []>} : vector<16x32xbf16>, vector<32x32xbf16>, vector<16x32xf32> -> vector<16x32xf32>
    %425 = arith.addf %289, %424 : vector<16x32xf32>
    %c0_172 = arith.constant 0 : index
    %c0_173 = arith.constant 0 : index
    %c0_174 = arith.constant 0 : index
    %426 = vector.load %arg22[%c0_172, %c0_173, %c0_174] : memref<1x1x32xf32, #tpu.memory_space<vmem>>, vector<1x1x32xf32>
    %427 = vector.shape_cast %426 : vector<1x1x32xf32> to vector<1x32xf32>
    %428 = vector.broadcast %427 : vector<1x32xf32> to vector<16x32xf32>
    %429 = arith.addf %425, %428 : vector<16x32xf32>
    %c0_175 = arith.constant 0 : index
    %c0_176 = arith.constant 0 : index
    %c0_177 = arith.constant 0 : index
    %430 = vector.load %arg23[%c0_175, %c0_176, %c0_177] : memref<1x1x32xf32, #tpu.memory_space<vmem>>, vector<1x1x32xf32>
    %431 = vector.shape_cast %430 : vector<1x1x32xf32> to vector<1x32xf32>
    %c0_178 = arith.constant 0 : index
    %c0_179 = arith.constant 0 : index
    %c0_180 = arith.constant 0 : index
    %432 = vector.load %arg24[%c0_178, %c0_179, %c0_180] : memref<1x1x32xf32, #tpu.memory_space<vmem>>, vector<1x1x32xf32>
    %433 = vector.shape_cast %432 : vector<1x1x32xf32> to vector<1x32xf32>
    %cst_181 = arith.constant dense<0.000000e+00> : vector<16xf32>
    %434 = vector.multi_reduction <add>, %429, %cst_181 [1] : vector<16x32xf32> to vector<16xf32>
    %435 = vector.shape_cast %434 : vector<16xf32> to vector<16x1xf32>
    %cst_182 = arith.constant 3.200000e+01 : f32
    %436 = vector.broadcast %cst_182 : f32 to vector<16x1xf32>
    %437 = arith.divf %435, %436 : vector<16x1xf32>
    %438 = vector.broadcast %437 : vector<16x1xf32> to vector<16x32xf32>
    %439 = arith.subf %429, %438 : vector<16x32xf32>
    %440 = arith.mulf %439, %439 : vector<16x32xf32>
    %cst_183 = arith.constant dense<0.000000e+00> : vector<16xf32>
    %441 = vector.multi_reduction <add>, %440, %cst_183 [1] : vector<16x32xf32> to vector<16xf32>
    %442 = vector.shape_cast %441 : vector<16xf32> to vector<16x1xf32>
    %cst_184 = arith.constant 3.200000e+01 : f32
    %443 = vector.broadcast %cst_184 : f32 to vector<16x1xf32>
    %444 = arith.divf %442, %443 : vector<16x1xf32>
    %445 = vector.broadcast %437 : vector<16x1xf32> to vector<16x32xf32>
    %446 = arith.subf %429, %445 : vector<16x32xf32>
    %cst_185 = arith.constant 9.99999974E-6 : f32
    %447 = vector.broadcast %cst_185 : f32 to vector<16x1xf32>
    %448 = arith.addf %444, %447 : vector<16x1xf32>
    %449 = math.rsqrt %448 : vector<16x1xf32>
    %450 = vector.broadcast %449 : vector<16x1xf32> to vector<16x32xf32>
    %451 = arith.mulf %446, %450 : vector<16x32xf32>
    %452 = vector.broadcast %431 : vector<1x32xf32> to vector<16x32xf32>
    %453 = arith.mulf %451, %452 : vector<16x32xf32>
    %454 = vector.broadcast %433 : vector<1x32xf32> to vector<16x32xf32>
    %455 = arith.addf %453, %454 : vector<16x32xf32>
    %c0_186 = arith.constant 0 : index
    %c0_187 = arith.constant 0 : index
    %c0_188 = arith.constant 0 : index
    %456 = vector.load %arg25[%c0_186, %c0_187, %c0_188] : memref<1x32x64xbf16, #tpu.memory_space<vmem>>, vector<1x32x64xbf16>
    %457 = vector.shape_cast %456 : vector<1x32x64xbf16> to vector<32x64xbf16>
    %458 = arith.truncf %455 : vector<16x32xf32> to vector<16x32xbf16>
    %cst_189 = arith.constant dense<0.000000e+00> : vector<16x64xf32>
    %459 = tpu.matmul %458, %457, %cst_189 {dimension_numbers = #tpu.dot_dimension_numbers<[1], [0], [0], [1], [0, 0, 1, 1], [], []>} : vector<16x32xbf16>, vector<32x64xbf16>, vector<16x64xf32> -> vector<16x64xf32>
    %c0_190 = arith.constant 0 : index
    %c0_191 = arith.constant 0 : index
    %c0_192 = arith.constant 0 : index
    %460 = vector.load %arg26[%c0_190, %c0_191, %c0_192] : memref<1x1x64xf32, #tpu.memory_space<vmem>>, vector<1x1x64xf32>
    %461 = vector.shape_cast %460 : vector<1x1x64xf32> to vector<1x64xf32>
    %462 = vector.broadcast %461 : vector<1x64xf32> to vector<16x64xf32>
    %463 = arith.addf %459, %462 : vector<16x64xf32>
    %cst_193 = arith.constant 0.000000e+00 : f32
    %464 = vector.broadcast %cst_193 : f32 to vector<16x64xf32>
    %465 = arith.maximumf %463, %464 : vector<16x64xf32>
    %c0_194 = arith.constant 0 : index
    %c0_195 = arith.constant 0 : index
    %c0_196 = arith.constant 0 : index
    %466 = vector.load %arg27[%c0_194, %c0_195, %c0_196] : memref<1x64x32xbf16, #tpu.memory_space<vmem>>, vector<1x64x32xbf16>
    %467 = vector.shape_cast %466 : vector<1x64x32xbf16> to vector<64x32xbf16>
    %468 = arith.truncf %465 : vector<16x64xf32> to vector<16x64xbf16>
    %cst_197 = arith.constant dense<0.000000e+00> : vector<16x32xf32>
    %469 = tpu.matmul %468, %467, %cst_197 {dimension_numbers = #tpu.dot_dimension_numbers<[1], [0], [0], [1], [0, 0, 1, 1], [], []>} : vector<16x64xbf16>, vector<64x32xbf16>, vector<16x32xf32> -> vector<16x32xf32>
    %470 = arith.addf %455, %469 : vector<16x32xf32>
    %c0_198 = arith.constant 0 : index
    %c0_199 = arith.constant 0 : index
    %c0_200 = arith.constant 0 : index
    %471 = vector.load %arg28[%c0_198, %c0_199, %c0_200] : memref<1x1x32xf32, #tpu.memory_space<vmem>>, vector<1x1x32xf32>
    %472 = vector.shape_cast %471 : vector<1x1x32xf32> to vector<1x32xf32>
    %473 = vector.broadcast %472 : vector<1x32xf32> to vector<16x32xf32>
    %474 = arith.addf %470, %473 : vector<16x32xf32>
    %c0_201 = arith.constant 0 : index
    %c0_202 = arith.constant 0 : index
    %475 = vector.load %arg29[%c0_201, %c0_202] : memref<16x32xf32, #tpu.memory_space<vmem>>, vector<16x32xf32>
    tpu.vector_store %arg29[%c0_201, %c0_202], %474 {strides = array<i32>} : memref<16x32xf32, #tpu.memory_space<vmem>>, vector<16x32xf32>,
    return
  }
  func.func @transform_0(%arg0: i32) -> (i32, i32) {
    %c0_i32 = arith.constant 0 : i32
    %c0_i32_0 = arith.constant 0 : i32
    %c0_i32_1 = arith.constant 0 : i32
    return %c0_i32, %c0_i32_0 : i32, i32
  }
  func.func @transform_1(%arg0: i32) -> (i32, i32) {
    %c0_i32 = arith.constant 0 : i32
    %c0_i32_0 = arith.constant 0 : i32
    %c0_i32_1 = arith.constant 0 : i32
    return %c0_i32, %c0_i32_0 : i32, i32
  }
  func.func @transform_2(%arg0: i32) -> (i32, i32) {
    %c0_i32 = arith.constant 0 : i32
    %c0_i32_0 = arith.constant 0 : i32
    %c0_i32_1 = arith.constant 0 : i32
    return %c0_i32, %c0_i32_0 : i32, i32
  }
  func.func @transform_3(%arg0: i32) -> (i32, i32, i32) {
    %c0_i32 = arith.constant 0 : i32
    %c0_i32_0 = arith.constant 0 : i32
    %c0_i32_1 = arith.constant 0 : i32
    %c0_i32_2 = arith.constant 0 : i32
    return %c0_i32, %c0_i32_0, %c0_i32_1 : i32, i32, i32
  }
  func.func @transform_4(%arg0: i32) -> (i32, i32, i32) {
    %c0_i32 = arith.constant 0 : i32
    %c0_i32_0 = arith.constant 0 : i32
    %c0_i32_1 = arith.constant 0 : i32
    %c0_i32_2 = arith.constant 0 : i32
    return %c0_i32, %c0_i32_0, %c0_i32_1 : i32, i32, i32
  }
  func.func @transform_5(%arg0: i32) -> (i32, i32, i32) {
    %c0_i32 = arith.constant 0 : i32
    %c0_i32_0 = arith.constant 0 : i32
    %c0_i32_1 = arith.constant 0 : i32
    return %arg0, %c0_i32, %c0_i32_0 : i32, i32, i32
  }
  func.func @transform_6(%arg0: i32) -> (i32, i32, i32) {
    %c0_i32 = arith.constant 0 : i32
    %c0_i32_0 = arith.constant 0 : i32
    %c0_i32_1 = arith.constant 0 : i32
    return %arg0, %c0_i32, %c0_i32_0 : i32, i32, i32
  }
  func.func @transform_7(%arg0: i32) -> (i32, i32, i32) {
    %c0_i32 = arith.constant 0 : i32
    %c0_i32_0 = arith.constant 0 : i32
    %c0_i32_1 = arith.constant 0 : i32
    return %arg0, %c0_i32, %c0_i32_0 : i32, i32, i32
  }
  func.func @transform_8(%arg0: i32) -> (i32, i32, i32) {
    %c0_i32 = arith.constant 0 : i32
    %c0_i32_0 = arith.constant 0 : i32
    %c0_i32_1 = arith.constant 0 : i32
    return %arg0, %c0_i32, %c0_i32_0 : i32, i32, i32
  }
  func.func @transform_9(%arg0: i32) -> (i32, i32, i32) {
    %c0_i32 = arith.constant 0 : i32
    %c0_i32_0 = arith.constant 0 : i32
    %c0_i32_1 = arith.constant 0 : i32
    return %arg0, %c0_i32, %c0_i32_0 : i32, i32, i32
  }
  func.func @transform_10(%arg0: i32) -> (i32, i32, i32) {
    %c0_i32 = arith.constant 0 : i32
    %c0_i32_0 = arith.constant 0 : i32
    %c0_i32_1 = arith.constant 0 : i32
    return %arg0, %c0_i32, %c0_i32_0 : i32, i32, i32
  }
  func.func @transform_11(%arg0: i32) -> (i32, i32, i32) {
    %c0_i32 = arith.constant 0 : i32
    %c0_i32_0 = arith.constant 0 : i32
    %c0_i32_1 = arith.constant 0 : i32
    return %arg0, %c0_i32, %c0_i32_0 : i32, i32, i32
  }
  func.func @transform_12(%arg0: i32) -> (i32, i32, i32) {
    %c0_i32 = arith.constant 0 : i32
    %c0_i32_0 = arith.constant 0 : i32
    %c0_i32_1 = arith.constant 0 : i32
    return %arg0, %c0_i32, %c0_i32_0 : i32, i32, i32
  }
  func.func @transform_13(%arg0: i32) -> (i32, i32, i32) {
    %c0_i32 = arith.constant 0 : i32
    %c0_i32_0 = arith.constant 0 : i32
    %c0_i32_1 = arith.constant 0 : i32
    return %arg0, %c0_i32, %c0_i32_0 : i32, i32, i32
  }
  func.func @transform_14(%arg0: i32) -> (i32, i32, i32) {
    %c0_i32 = arith.constant 0 : i32
    %c0_i32_0 = arith.constant 0 : i32
    %c0_i32_1 = arith.constant 0 : i32
    return %arg0, %c0_i32, %c0_i32_0 : i32, i32, i32
  }
  func.func @transform_15(%arg0: i32) -> (i32, i32, i32) {
    %c0_i32 = arith.constant 0 : i32
    %c0_i32_0 = arith.constant 0 : i32
    %c0_i32_1 = arith.constant 0 : i32
    return %arg0, %c0_i32, %c0_i32_0 : i32, i32, i32
  }
  func.func @transform_16(%arg0: i32) -> (i32, i32, i32) {
    %c0_i32 = arith.constant 0 : i32
    %c0_i32_0 = arith.constant 0 : i32
    %c0_i32_1 = arith.constant 0 : i32
    return %arg0, %c0_i32, %c0_i32_0 : i32, i32, i32
  }
  func.func @transform_17(%arg0: i32) -> (i32, i32, i32) {
    %c0_i32 = arith.constant 0 : i32
    %c0_i32_0 = arith.constant 0 : i32
    %c0_i32_1 = arith.constant 0 : i32
    return %arg0, %c0_i32, %c0_i32_0 : i32, i32, i32
  }
  func.func @transform_18(%arg0: i32) -> (i32, i32, i32) {
    %c0_i32 = arith.constant 0 : i32
    %c0_i32_0 = arith.constant 0 : i32
    %c0_i32_1 = arith.constant 0 : i32
    return %arg0, %c0_i32, %c0_i32_0 : i32, i32, i32
  }
  func.func @transform_19(%arg0: i32) -> (i32, i32, i32) {
    %c0_i32 = arith.constant 0 : i32
    %c0_i32_0 = arith.constant 0 : i32
    %c0_i32_1 = arith.constant 0 : i32
    return %arg0, %c0_i32, %c0_i32_0 : i32, i32, i32
  }
  func.func @transform_20(%arg0: i32) -> (i32, i32, i32) {
    %c0_i32 = arith.constant 0 : i32
    %c0_i32_0 = arith.constant 0 : i32
    %c0_i32_1 = arith.constant 0 : i32
    return %arg0, %c0_i32, %c0_i32_0 : i32, i32, i32
  }
  func.func @transform_21(%arg0: i32) -> (i32, i32, i32) {
    %c0_i32 = arith.constant 0 : i32
    %c0_i32_0 = arith.constant 0 : i32
    %c0_i32_1 = arith.constant 0 : i32
    return %arg0, %c0_i32, %c0_i32_0 : i32, i32, i32
  }
  func.func @transform_22(%arg0: i32) -> (i32, i32, i32) {
    %c0_i32 = arith.constant 0 : i32
    %c0_i32_0 = arith.constant 0 : i32
    %c0_i32_1 = arith.constant 0 : i32
    return %arg0, %c0_i32, %c0_i32_0 : i32, i32, i32
  }
  func.func @transform_23(%arg0: i32) -> (i32, i32, i32) {
    %c0_i32 = arith.constant 0 : i32
    %c0_i32_0 = arith.constant 0 : i32
    %c0_i32_1 = arith.constant 0 : i32
    return %arg0, %c0_i32, %c0_i32_0 : i32, i32, i32
  }
  func.func @transform_24(%arg0: i32) -> (i32, i32, i32) {
    %c0_i32 = arith.constant 0 : i32
    %c0_i32_0 = arith.constant 0 : i32
    %c0_i32_1 = arith.constant 0 : i32
    return %arg0, %c0_i32, %c0_i32_0 : i32, i32, i32
  }
  func.func @transform_25(%arg0: i32) -> (i32, i32, i32) {
    %c0_i32 = arith.constant 0 : i32
    %c0_i32_0 = arith.constant 0 : i32
    %c0_i32_1 = arith.constant 0 : i32
    return %arg0, %c0_i32, %c0_i32_0 : i32, i32, i32
  }
  func.func @transform_26(%arg0: i32) -> (i32, i32, i32) {
    %c0_i32 = arith.constant 0 : i32
    %c0_i32_0 = arith.constant 0 : i32
    %c0_i32_1 = arith.constant 0 : i32
    return %arg0, %c0_i32, %c0_i32_0 : i32, i32, i32
  }
  func.func @transform_27(%arg0: i32) -> (i32, i32, i32) {
    %c0_i32 = arith.constant 0 : i32
    %c0_i32_0 = arith.constant 0 : i32
    %c0_i32_1 = arith.constant 0 : i32
    return %arg0, %c0_i32, %c0_i32_0 : i32, i32, i32
  }
  func.func @transform_28(%arg0: i32) -> (i32, i32) {
    %c0_i32 = arith.constant 0 : i32
    %c0_i32_0 = arith.constant 0 : i32
    %c0_i32_1 = arith.constant 0 : i32
    return %c0_i32, %c0_i32_0 : i32, i32
  }
  func.func @transform_29(%arg0: i32) -> (i32, i32, i32, i32, i32) {
    %c0_i32 = arith.constant 0 : i32
    %c0_i32_0 = arith.constant 0 : i32
    %c0_i32_1 = arith.constant 0 : i32
    %c0_i32_2 = arith.constant 0 : i32
    %c0_i32_3 = arith.constant 0 : i32
    return %arg0, %c0_i32, %c0_i32_0, %c0_i32_1, %c0_i32_2 : i32, i32, i32, i32, i32
  }
  func.func @transform_30(%arg0: i32) -> (i32, i32, i32, i32, i32) {
    %c0_i32 = arith.constant 0 : i32
    %c0_i32_0 = arith.constant 0 : i32
    %c0_i32_1 = arith.constant 0 : i32
    %c0_i32_2 = arith.constant 0 : i32
    %c0_i32_3 = arith.constant 0 : i32
    return %arg0, %c0_i32, %c0_i32_0, %c0_i32_1, %c0_i32_2 : i32, i32, i32, i32, i32
  }
}

</mosaic_0001>

<llo_original>
// kernel: transformer_decoder_forward.3
$region0: #{transformer_decoder_forward.3}
  #allocation0 [shape = 'u32[]', space=smem, size = 0x4, offset = 0x4, fixed_abs, tag = 'smem constant byte address 0x4 - core index']
  #allocation1 [shape = 'u32[72,128]{1,0:T(1,128)}', space=vmem, size = 0x9000, scoped, tag = 'internal scratch']
  %s0 = inlined_call_operand.vmem [shape: f32[16,32], index: 0, kind: input, shape index: {}]
  %s1 = inlined_call_operand.vmem [shape: f32[1,32], index: 1, kind: input, shape index: {}]
  %s2 = inlined_call_operand.vmem [shape: f32[1,32], index: 2, kind: input, shape index: {}]
  %s3 = inlined_call_operand.vmem [shape: bf16[32,128], index: 3, kind: input, shape index: {}]
  %s4 = inlined_call_operand.vmem [shape: f32[1,128], index: 4, kind: input, shape index: {}]
  %s5 = inlined_call_operand.vmem [shape: f32[16,128], index: 5, kind: output, shape index: {}]
  %s6 = sld [smem:[#allocation0]]
  $region30: #{transformer_decoder_forward.3} parent=0
    _
  %s8 = ssub.s32 1, %s6
  %s9 = scalar_select 0, %s8, %s6
  // Predicated region
  $region2: #{transformer_decoder_forward.3} parent=0 // pred_check
    _
  $region3: #{transformer_decoder_forward.3} parent=0 // pred_check_branch
    %11 = sbr.rel (0) target = $region5
  $region4: #{transformer_decoder_forward.3} parent=0 // pred_region
    _
  $region5: #{transformer_decoder_forward.3} parent=0 // pred_fallthru
    _
  // Predicated region
  $region6: #{transformer_decoder_forward.3} parent=0 // pred_check
    _
  $region7: #{transformer_decoder_forward.3} parent=0 // pred_check_branch
    %13 = sbr.rel (0) target = $region9
  $region8: #{transformer_decoder_forward.3} parent=0 // pred_region
    _
  $region9: #{transformer_decoder_forward.3} parent=0 // pred_fallthru
    _
  // Predicated region
  $region10: #{transformer_decoder_forward.3} parent=0 // pred_check
    _
  $region11: #{transformer_decoder_forward.3} parent=0 // pred_check_branch
    %15 = sbr.rel (0) target = $region13
  $region12: #{transformer_decoder_forward.3} parent=0 // pred_region
    _
  $region13: #{transformer_decoder_forward.3} parent=0 // pred_fallthru
    _
  // Predicated region
  $region14: #{transformer_decoder_forward.3} parent=0 // pred_check
    _
  $region15: #{transformer_decoder_forward.3} parent=0 // pred_check_branch
    %17 = sbr.rel (0) target = $region17
  $region16: #{transformer_decoder_forward.3} parent=0 // pred_region
    _
  $region17: #{transformer_decoder_forward.3} parent=0 // pred_fallthru
    _
  // Predicated region
  $region18: #{transformer_decoder_forward.3} parent=0 // pred_check
    _
  $region19: #{transformer_decoder_forward.3} parent=0 // pred_check_branch
    %19 = sbr.rel (0) target = $region21
  $region20: #{transformer_decoder_forward.3} parent=0 // pred_region
    _
  $region21: #{transformer_decoder_forward.3} parent=0 // pred_fallthru
    _
  %v21 = vld [vmem:[%s0] sm:$0xff]
  %v22 = vld [vmem:[%s0 + $0x8] sm:$0xff]
  %v23 = vld [vmem:[%s1] sm:$0x1]
  %v24 = vld [vmem:[%s2] sm:$0x1]
  %vm25 = vcmask 261120
  %v26 = vsel %vm25, %v21, 0.0
  %27 = vadd.xlane.f32.xlu0 %v26
  %v28 = vpop.xlane.xlu0 %27
  %v29 = vsel %vm25, %v22, 0.0
  %30 = vadd.xlane.f32.xlu0 %v29
  %v31 = vpop.xlane.xlu0 %30
  %v32 = vrcp.pop 32.0
  %v33 = vmul.f32 32.0, %v32
  %v34 = vsub.f32 1.0, %v33
  %v35 = vmul.f32 %v32, %v34
  %v36 = vadd.f32 %v32, %v35
  %vm37 = vweird.f32 %v32
  %v38 = vsel %vm37, %v32, %v36
  %v39 = vmul.f32 %v28, %v38
  %v40 = vmul.f32 %v31, %v38
  %v41 = vsub.f32 %v21, %v39
  %v42 = vsub.f32 %v22, %v40
  %v43 = vmul.f32 %v41, %v41
  %v44 = vmul.f32 %v42, %v42
  %v45 = vsel %vm25, %v43, 0.0
  %46 = vadd.xlane.f32.xlu0 %v45
  %v47 = vpop.xlane.xlu0 %46
  %v48 = vsel %vm25, %v44, 0.0
  %49 = vadd.xlane.f32.xlu0 %v48
  %v50 = vpop.xlane.xlu0 %49
  %v51 = vmul.f32 %v47, %v38
  %v52 = vmul.f32 %v50, %v38
  %v53 = vadd.f32 %v51, 1e-05
  %v54 = vadd.f32 %v52, 1e-05
  %v55 = vrsqrt.pop %v53
  %v56 = vmul.f32 %v55, %v53
  %v57 = vmul.f32 %v56, %v55
  %v58 = vmul.f32 0.5, %v57
  %v59 = vsub.f32 1.5, %v58
  %v60 = vmul.f32 %v55, %v59
  %vm61 = vweird.f32 %v53
  %vm62 = vweird.f32 %v55
  %vm63 = vmor %vm61, %vm62
  %v64 = vsel %vm63, %v55, %v60
  %v65 = vrsqrt.pop %v54
  %v66 = vmul.f32 %v65, %v54
  %v67 = vmul.f32 %v66, %v65
  %v68 = vmul.f32 0.5, %v67
  %v69 = vsub.f32 1.5, %v68
  %v70 = vmul.f32 %v65, %v69
  %vm71 = vweird.f32 %v54
  %vm72 = vweird.f32 %v65
  %vm73 = vmor %vm71, %vm72
  %v74 = vsel %vm73, %v65, %v70
  %v75 = vmul.f32 %v41, %v64
  %v76 = vmul.f32 %v42, %v74
  %v78 = vperm.slane %v23, 0
  %v80 = vmul.f32 %v75, %v78
  %v81 = vmul.f32 %v76, %v78
  %v83 = vperm.slane %v24, 0
  %v85 = vadd.f32 %v80, %v83
  %v86 = vadd.f32 %v81, %v83
  %v87 = vld [vmem:[%s3] sm:$0xf]
  %v88 = vld [vmem:[%s3 + $0x4] sm:$0xf]
  %v89 = vld [vmem:[%s3 + $0x8] sm:$0xf]
  %v90 = vld [vmem:[%s3 + $0xc] sm:$0xf]
  %v91 = vpack.c.bf16 %v86, %v85
  %v92 = vld [vmem:[%s4] sm:$0x1]
  %v94 = vperm.slane %v92, 0
  %v100 = vunpack.c.l.b16 %v87
  %v101 = vunpack.c.l.b16 %v88
  %v102 = vunpack.c.l.b16 %v89
  %v103 = vunpack.c.l.b16 %v90
  %v104 = vpack.c.b16 %v101, %v100
  %v105 = vpack.c.b16 %v103, %v102
  %v109 = vsel %vm25, %v91, 0
  %111 = vmatpush.bf16.msra.mxu0 0
  %112 = vmatpush.bf16.msra.mxu0 0
  %113 = vmatpush.bf16.msra.mxu0 0
  %114 = vmatpush.bf16.msra.mxu0 0
  %115 = vmatpush.bf16.msra.mxu0 0
  %116 = vmatpush.bf16.msra.mxu0 0
  %117 = vmatpush.bf16.msra.mxu0 %v105
  %118 = vmatpush.bf16.msra.mxu0 %v104
  %119 = vmatmul.bf16.gmra.mxu0 %v109
  %v120 = vpop.f32.mrf.mxu0
  %v121 = vadd.f32 %v94, %v120
  %v122 = vpop.f32.mrf.mxu0
  %v123 = vadd.f32 %v94, %v122
  %124 = vdwg.mxu0
  %125 = vst [vmem:[%s5] sm:$0xff] %v121
  %126 = vst [vmem:[%s5 + $0x8] sm:$0xff] %v123
  // Predicated region
  $region22: #{transformer_decoder_forward.3} parent=0 // pred_check
    _
  $region23: #{transformer_decoder_forward.3} parent=0 // pred_check_branch
    %128 = sbr.rel (0) target = $region25
  $region24: #{transformer_decoder_forward.3} parent=0 // pred_region
    _
  $region25: #{transformer_decoder_forward.3} parent=0 // pred_fallthru
    _
  // Predicated region
  $region26: #{transformer_decoder_forward.3} parent=0 // pred_check
    _
  $region27: #{transformer_decoder_forward.3} parent=0 // pred_check_branch
    %130 = sbr.rel (0) target = $region29
  $region28: #{transformer_decoder_forward.3} parent=0 // pred_region
    _
  $region29: #{transformer_decoder_forward.3} parent=0 // pred_fallthru
    _

// kernel: transformer_decoder_forward.2
$region0: #{transformer_decoder_forward.2}
  #allocation0 [shape = 'u32[]', space=smem, size = 0x4, offset = 0x4, fixed_abs, tag = 'smem constant byte address 0x4 - core index']
  #allocation1 [shape = 'u32[72,128]{1,0:T(1,128)}', space=vmem, size = 0x9000, scoped, tag = 'internal scratch']
  #allocation2 [shape = 'f32[16,32]{1,0:T(8,128)}', space=vmem, size = 0x2000, scoped, tag = 'scratch operand']
  %s0 = inlined_call_operand.smem [shape: u32[31], index: -1, kind: input, shape index: {}]
  %s1 = sld [smem:[%s0]]
  %s2 = scalar_lea.smem %s0, 1
  %s3 = sld [smem:[%s2]]
  %s4 = scalar_lea.smem %s0, 2
  %s5 = sld [smem:[%s4]]
  %s6 = scalar_lea.smem %s0, 3
  %s7 = sld [smem:[%s6]]
  %s8 = scalar_lea.smem %s0, 4
  %s9 = sld [smem:[%s8]]
  %s10 = scalar_lea.smem %s0, 5
  %s11 = sld [smem:[%s10]]
  %s12 = scalar_lea.smem %s0, 6
  %s13 = sld [smem:[%s12]]
  %s14 = scalar_lea.smem %s0, 7
  %s15 = sld [smem:[%s14]]
  %s16 = scalar_lea.smem %s0, 8
  %s17 = sld [smem:[%s16]]
  %s18 = scalar_lea.smem %s0, 9
  %s19 = sld [smem:[%s18]]
  %s20 = scalar_lea.smem %s0, 10
  %s21 = sld [smem:[%s20]]
  %s22 = scalar_lea.smem %s0, 11
  %s23 = sld [smem:[%s22]]
  %s24 = scalar_lea.smem %s0, 12
  %s25 = sld [smem:[%s24]]
  %s26 = scalar_lea.smem %s0, 13
  %s27 = sld [smem:[%s26]]
  %s28 = scalar_lea.smem %s0, 14
  %s29 = sld [smem:[%s28]]
  %s30 = scalar_lea.smem %s0, 15
  %s31 = sld [smem:[%s30]]
  %s32 = scalar_lea.smem %s0, 16
  %s33 = sld [smem:[%s32]]
  %s34 = scalar_lea.smem %s0, 17
  %s35 = sld [smem:[%s34]]
  %s36 = scalar_lea.smem %s0, 18
  %s37 = sld [smem:[%s36]]
  %s38 = scalar_lea.smem %s0, 19
  %s39 = sld [smem:[%s38]]
  %s40 = scalar_lea.smem %s0, 20
  %s41 = sld [smem:[%s40]]
  %s42 = scalar_lea.smem %s0, 21
  %s43 = sld [smem:[%s42]]
  %s44 = scalar_lea.smem %s0, 22
  %s45 = sld [smem:[%s44]]
  %s46 = scalar_lea.smem %s0, 23
  %s47 = sld [smem:[%s46]]
  %s48 = scalar_lea.smem %s0, 24
  %s49 = sld [smem:[%s48]]
  %s50 = scalar_lea.smem %s0, 25
  %s51 = sld [smem:[%s50]]
  %s52 = scalar_lea.smem %s0, 26
  %s53 = sld [smem:[%s52]]
  %s54 = scalar_lea.smem %s0, 27
  %s55 = sld [smem:[%s54]]
  %s56 = scalar_lea.smem %s0, 28
  %s57 = sld [smem:[%s56]]
  %s58 = scalar_lea.smem %s0, 29
  %s59 = sld [smem:[%s58]]
  %s60 = scalar_lea.smem %s0, 30
  %s61 = sld [smem:[%s60]]
  %62 = xla_tuple %s57, %s59, %s61
  %s63 = sld [smem:[#allocation0]]
  $region165: #{transformer_decoder_forward.2} parent=0
    _
  %s65 = ssub.s32 1, %s63
  %s66 = scalar_select 0, %s65, %s63
  loop: start=0, step=1, limit=4
  $region2: #{transformer_decoder_forward.2} parent=0 // loop_pre_header
    _
  $region3: #{transformer_decoder_forward.2} parent=0 // loop_header
    %s68 = sphi 0, %s72
    %p69 = scmp.ge.s32.totalorder %s68, 4
    %s76 = sphi 0, %s76
    %s78 = sphi 0, %s76
    %s79 = sphi 0, %s78
    %s93 = sphi 0, %s79
    %s97 = sphi 0, %s97
    %s99 = sphi 0, %s97
    %s100 = sphi 0, %s99
    %s114 = sphi 0, %s100
    %s118 = sphi 0, %s118
    %s120 = sphi 0, %s118
    %s121 = sphi 0, %s120
    %s135 = sphi 0, %s121
    %s139 = sphi 0, %s139
    %s141 = sphi 0, %s139
    %s142 = sphi 0, %s141
    %s156 = sphi 0, %s142
    %s160 = sphi 0, %s160
    %s162 = sphi 0, %s160
    %s163 = sphi 0, %s162
    %s177 = sphi 0, %s163
    %s183 = sphi 0, %s185
    %s186 = sphi 0, %s183
    %s187 = sphi 0, %s186
    %s203 = sphi 0, %s187
    %s209 = sphi 0, %s211
    %s212 = sphi 0, %s209
    %s213 = sphi 0, %s212
    %s229 = sphi 0, %s213
    %s235 = sphi 0, %s237
    %s238 = sphi 0, %s235
    %s239 = sphi 0, %s238
    %s255 = sphi 0, %s239
    %s261 = sphi 0, %s263
    %s264 = sphi 0, %s261
    %s265 = sphi 0, %s264
    %s281 = sphi 0, %s265
    %s287 = sphi 0, %s289
    %s290 = sphi 0, %s287
    %s291 = sphi 0, %s290
    %s307 = sphi 0, %s291
    %s313 = sphi 0, %s315
    %s316 = sphi 0, %s313
    %s317 = sphi 0, %s316
    %s333 = sphi 0, %s317
    %s339 = sphi 0, %s341
    %s342 = sphi 0, %s339
    %s343 = sphi 0, %s342
    %s359 = sphi 0, %s343
    %s365 = sphi 0, %s367
    %s368 = sphi 0, %s365
    %s369 = sphi 0, %s368
    %s385 = sphi 0, %s369
    %s391 = sphi 0, %s393
    %s394 = sphi 0, %s391
    %s395 = sphi 0, %s394
    %s411 = sphi 0, %s395
    %s417 = sphi 0, %s419
    %s420 = sphi 0, %s417
    %s421 = sphi 0, %s420
    %s437 = sphi 0, %s421
    %s443 = sphi 0, %s445
    %s446 = sphi 0, %s443
    %s447 = sphi 0, %s446
    %s463 = sphi 0, %s447
    %s469 = sphi 0, %s471
    %s472 = sphi 0, %s469
    %s473 = sphi 0, %s472
    %s489 = sphi 0, %s473
    %s495 = sphi 0, %s497
    %s498 = sphi 0, %s495
    %s499 = sphi 0, %s498
    %s515 = sphi 0, %s499
    %s521 = sphi 0, %s523
    %s524 = sphi 0, %s521
    %s525 = sphi 0, %s524
    %s541 = sphi 0, %s525
    %s547 = sphi 0, %s549
    %s550 = sphi 0, %s547
    %s551 = sphi 0, %s550
    %s567 = sphi 0, %s551
    %s573 = sphi 0, %s575
    %s576 = sphi 0, %s573
    %s577 = sphi 0, %s576
    %s593 = sphi 0, %s577
    %s599 = sphi 0, %s601
    %s602 = sphi 0, %s599
    %s603 = sphi 0, %s602
    %s619 = sphi 0, %s603
    %s625 = sphi 0, %s627
    %s628 = sphi 0, %s625
    %s629 = sphi 0, %s628
    %s645 = sphi 0, %s629
    %s651 = sphi 0, %s653
    %s654 = sphi 0, %s651
    %s655 = sphi 0, %s654
    %s671 = sphi 0, %s655
    %s677 = sphi 0, %s679
    %s680 = sphi 0, %s677
    %s681 = sphi 0, %s680
    %s697 = sphi 0, %s681
    %s703 = sphi 0, %s705
    %s706 = sphi 0, %s703
    %s707 = sphi 0, %s706
    %s723 = sphi 0, %s707
    %s729 = sphi 0, %s731
    %s732 = sphi 0, %s729
    %s733 = sphi 0, %s732
    %s749 = sphi 0, %s733
    %s755 = sphi 0, %s757
    %s758 = sphi 0, %s755
    %s759 = sphi 0, %s758
    %s775 = sphi 0, %s759
    %s779 = sphi 0, %s779
    %s781 = sphi 0, %s779
    %s782 = sphi 0, %s781
    %s796 = sphi 0, %s782
    %s802 = sphi 0, %s804
    %s805 = sphi 0, %s802
    %s806 = sphi 0, %s805
    %s822 = sphi 0, %s806
    %s828 = sphi 0, %s830
    %s831 = sphi 0, %s828
    %s832 = sphi 0, %s831
    %s848 = sphi 0, %s832
  $region4: #{transformer_decoder_forward.2} parent=0 // loop_header_branch
    %71 = sbr.rel (%p69) target = $region8
  $region5: #{transformer_decoder_forward.2} parent=0 // loop_body
    %s73 = ssub.s32 %s68, 1
    %s74 = ssub.s32 %s68, 2
    %s75 = sadd.s32 %s68, 1
    %s77 = sadd.s32 %s76, 1
    %p80 = scmp.eq.s32.totalorder %s68, 1
    %p81 = scmp.ne.s32.totalorder %s76, %s78
    %p82 = scmp.eq.s32.totalorder %s68, 0
    %p83 = por %p81, %p82
    %p84 = scmp.ne.s32.totalorder %s76, %s78
    %p85 = scmp.eq.s32.totalorder %s73, 1
    %p86 = por %p84, %p85
    %p87 = scmp.ne.s32.totalorder %s78, %s79
    %p88 = scmp.eq.s32.totalorder %s73, 0
    %p89 = por %p87, %p88
    %p90 = scmp.ne.s32.totalorder %s78, %s79
    %p91 = scmp.eq.s32.totalorder %s74, 1
    %p92 = por %p90, %p91
    %p94 = scmp.ne.s32.totalorder %s79, %s93
    %p95 = scmp.eq.s32.totalorder %s74, 0
    %p96 = por %p94, %p95
    %s98 = sadd.s32 %s97, 1
    %p101 = scmp.eq.s32.totalorder %s68, 1
    %p102 = scmp.ne.s32.totalorder %s97, %s99
    %p103 = scmp.eq.s32.totalorder %s68, 0
    %p104 = por %p102, %p103
    %p105 = scmp.ne.s32.totalorder %s97, %s99
    %p106 = scmp.eq.s32.totalorder %s73, 1
    %p107 = por %p105, %p106
    %p108 = scmp.ne.s32.totalorder %s99, %s100
    %p109 = scmp.eq.s32.totalorder %s73, 0
    %p110 = por %p108, %p109
    %p111 = scmp.ne.s32.totalorder %s99, %s100
    %p112 = scmp.eq.s32.totalorder %s74, 1
    %p113 = por %p111, %p112
    %p115 = scmp.ne.s32.totalorder %s100, %s114
    %p116 = scmp.eq.s32.totalorder %s74, 0
    %p117 = por %p115, %p116
    %s119 = sadd.s32 %s118, 1
    %p122 = scmp.eq.s32.totalorder %s68, 1
    %p123 = scmp.ne.s32.totalorder %s118, %s120
    %p124 = scmp.eq.s32.totalorder %s68, 0
    %p125 = por %p123, %p124
    %p126 = scmp.ne.s32.totalorder %s118, %s120
    %p127 = scmp.eq.s32.totalorder %s73, 1
    %p128 = por %p126, %p127
    %p129 = scmp.ne.s32.totalorder %s120, %s121
    %p130 = scmp.eq.s32.totalorder %s73, 0
    %p131 = por %p129, %p130
    %p132 = scmp.ne.s32.totalorder %s120, %s121
    %p133 = scmp.eq.s32.totalorder %s74, 1
    %p134 = por %p132, %p133
    %p136 = scmp.ne.s32.totalorder %s121, %s135
    %p137 = scmp.eq.s32.totalorder %s74, 0
    %p138 = por %p136, %p137
    %s140 = sadd.s32 %s139, 1
    %p143 = scmp.eq.s32.totalorder %s68, 1
    %p144 = scmp.ne.s32.totalorder %s139, %s141
    %p145 = scmp.eq.s32.totalorder %s68, 0
    %p146 = por %p144, %p145
    %p147 = scmp.ne.s32.totalorder %s139, %s141
    %p148 = scmp.eq.s32.totalorder %s73, 1
    %p149 = por %p147, %p148
    %p150 = scmp.ne.s32.totalorder %s141, %s142
    %p151 = scmp.eq.s32.totalorder %s73, 0
    %p152 = por %p150, %p151
    %p153 = scmp.ne.s32.totalorder %s141, %s142
    %p154 = scmp.eq.s32.totalorder %s74, 1
    %p155 = por %p153, %p154
    %p157 = scmp.ne.s32.totalorder %s142, %s156
    %p158 = scmp.eq.s32.totalorder %s74, 0
    %p159 = por %p157, %p158
    %s161 = sadd.s32 %s160, 1
    %p164 = scmp.eq.s32.totalorder %s68, 1
    %p165 = scmp.ne.s32.totalorder %s160, %s162
    %p166 = scmp.eq.s32.totalorder %s68, 0
    %p167 = por %p165, %p166
    %p168 = scmp.ne.s32.totalorder %s160, %s162
    %p169 = scmp.eq.s32.totalorder %s73, 1
    %p170 = por %p168, %p169
    %p171 = scmp.ne.s32.totalorder %s162, %s163
    %p172 = scmp.eq.s32.totalorder %s73, 0
    %p173 = por %p171, %p172
    %p174 = scmp.ne.s32.totalorder %s162, %s163
    %p175 = scmp.eq.s32.totalorder %s74, 1
    %p176 = por %p174, %p175
    %p178 = scmp.ne.s32.totalorder %s163, %s177
    %p179 = scmp.eq.s32.totalorder %s74, 0
    %p180 = por %p178, %p179
    %s181 = ssub.s32 %s68, %s75
    %p182 = scmp.eq.s32.totalorder %s181, 0
    %s184 = sadd.s32 %s183, 1
    %s185 = scalar_select %p182, %s183, %s184
    %p188 = pneg %p182
    %p189 = scmp.eq.s32.totalorder %s68, 1
    %p190 = por %p188, %p189
    %p191 = scmp.ne.s32.totalorder %s183, %s186
    %p192 = scmp.eq.s32.totalorder %s68, 0
    %p193 = por %p191, %p192
    %p194 = scmp.ne.s32.totalorder %s183, %s186
    %p195 = scmp.eq.s32.totalorder %s73, 1
    %p196 = por %p194, %p195
    %p197 = scmp.ne.s32.totalorder %s186, %s187
    %p198 = scmp.eq.s32.totalorder %s73, 0
    %p199 = por %p197, %p198
    %p200 = scmp.ne.s32.totalorder %s186, %s187
    %p201 = scmp.eq.s32.totalorder %s74, 1
    %p202 = por %p200, %p201
    %p204 = scmp.ne.s32.totalorder %s187, %s203
    %p205 = scmp.eq.s32.totalorder %s74, 0
    %p206 = por %p204, %p205
    %s207 = ssub.s32 %s68, %s75
    %p208 = scmp.eq.s32.totalorder %s207, 0
    %s210 = sadd.s32 %s209, 1
    %s211 = scalar_select %p208, %s209, %s210
    %p214 = pneg %p208
    %p215 = scmp.eq.s32.totalorder %s68, 1
    %p216 = por %p214, %p215
    %p217 = scmp.ne.s32.totalorder %s209, %s212
    %p218 = scmp.eq.s32.totalorder %s68, 0
    %p219 = por %p217, %p218
    %p220 = scmp.ne.s32.totalorder %s209, %s212
    %p221 = scmp.eq.s32.totalorder %s73, 1
    %p222 = por %p220, %p221
    %p223 = scmp.ne.s32.totalorder %s212, %s213
    %p224 = scmp.eq.s32.totalorder %s73, 0
    %p225 = por %p223, %p224
    %p226 = scmp.ne.s32.totalorder %s212, %s213
    %p227 = scmp.eq.s32.totalorder %s74, 1
    %p228 = por %p226, %p227
    %p230 = scmp.ne.s32.totalorder %s213, %s229
    %p231 = scmp.eq.s32.totalorder %s74, 0
    %p232 = por %p230, %p231
    %s233 = ssub.s32 %s68, %s75
    %p234 = scmp.eq.s32.totalorder %s233, 0
    %s236 = sadd.s32 %s235, 1
    %s237 = scalar_select %p234, %s235, %s236
    %p240 = pneg %p234
    %p241 = scmp.eq.s32.totalorder %s68, 1
    %p242 = por %p240, %p241
    %p243 = scmp.ne.s32.totalorder %s235, %s238
    %p244 = scmp.eq.s32.totalorder %s68, 0
    %p245 = por %p243, %p244
    %p246 = scmp.ne.s32.totalorder %s235, %s238
    %p247 = scmp.eq.s32.totalorder %s73, 1
    %p248 = por %p246, %p247
    %p249 = scmp.ne.s32.totalorder %s238, %s239
    %p250 = scmp.eq.s32.totalorder %s73, 0
    %p251 = por %p249, %p250
    %p252 = scmp.ne.s32.totalorder %s238, %s239
    %p253 = scmp.eq.s32.totalorder %s74, 1
    %p254 = por %p252, %p253
    %p256 = scmp.ne.s32.totalorder %s239, %s255
    %p257 = scmp.eq.s32.totalorder %s74, 0
    %p258 = por %p256, %p257
    %s259 = ssub.s32 %s68, %s75
    %p260 = scmp.eq.s32.totalorder %s259, 0
    %s262 = sadd.s32 %s261, 1
    %s263 = scalar_select %p260, %s261, %s262
    %p266 = pneg %p260
    %p267 = scmp.eq.s32.totalorder %s68, 1
    %p268 = por %p266, %p267
    %p269 = scmp.ne.s32.totalorder %s261, %s264
    %p270 = scmp.eq.s32.totalorder %s68, 0
    %p271 = por %p269, %p270
    %p272 = scmp.ne.s32.totalorder %s261, %s264
    %p273 = scmp.eq.s32.totalorder %s73, 1
    %p274 = por %p272, %p273
    %p275 = scmp.ne.s32.totalorder %s264, %s265
    %p276 = scmp.eq.s32.totalorder %s73, 0
    %p277 = por %p275, %p276
    %p278 = scmp.ne.s32.totalorder %s264, %s265
    %p279 = scmp.eq.s32.totalorder %s74, 1
    %p280 = por %p278, %p279
    %p282 = scmp.ne.s32.totalorder %s265, %s281
    %p283 = scmp.eq.s32.totalorder %s74, 0
    %p284 = por %p282, %p283
    %s285 = ssub.s32 %s68, %s75
    %p286 = scmp.eq.s32.totalorder %s285, 0
    %s288 = sadd.s32 %s287, 1
    %s289 = scalar_select %p286, %s287, %s288
    %p292 = pneg %p286
    %p293 = scmp.eq.s32.totalorder %s68, 1
    %p294 = por %p292, %p293
    %p295 = scmp.ne.s32.totalorder %s287, %s290
    %p296 = scmp.eq.s32.totalorder %s68, 0
    %p297 = por %p295, %p296
    %p298 = scmp.ne.s32.totalorder %s287, %s290
    %p299 = scmp.eq.s32.totalorder %s73, 1
    %p300 = por %p298, %p299
    %p301 = scmp.ne.s32.totalorder %s290, %s291
    %p302 = scmp.eq.s32.totalorder %s73, 0
    %p303 = por %p301, %p302
    %p304 = scmp.ne.s32.totalorder %s290, %s291
    %p305 = scmp.eq.s32.totalorder %s74, 1
    %p306 = por %p304, %p305
    %p308 = scmp.ne.s32.totalorder %s291, %s307
    %p309 = scmp.eq.s32.totalorder %s74, 0
    %p310 = por %p308, %p309
    %s311 = ssub.s32 %s68, %s75
    %p312 = scmp.eq.s32.totalorder %s311, 0
    %s314 = sadd.s32 %s313, 1
    %s315 = scalar_select %p312, %s313, %s314
    %p318 = pneg %p312
    %p319 = scmp.eq.s32.totalorder %s68, 1
    %p320 = por %p318, %p319
    %p321 = scmp.ne.s32.totalorder %s313, %s316
    %p322 = scmp.eq.s32.totalorder %s68, 0
    %p323 = por %p321, %p322
    %p324 = scmp.ne.s32.totalorder %s313, %s316
    %p325 = scmp.eq.s32.totalorder %s73, 1
    %p326 = por %p324, %p325
    %p327 = scmp.ne.s32.totalorder %s316, %s317
    %p328 = scmp.eq.s32.totalorder %s73, 0
    %p329 = por %p327, %p328
    %p330 = scmp.ne.s32.totalorder %s316, %s317
    %p331 = scmp.eq.s32.totalorder %s74, 1
    %p332 = por %p330, %p331
    %p334 = scmp.ne.s32.totalorder %s317, %s333
    %p335 = scmp.eq.s32.totalorder %s74, 0
    %p336 = por %p334, %p335
    %s337 = ssub.s32 %s68, %s75
    %p338 = scmp.eq.s32.totalorder %s337, 0
    %s340 = sadd.s32 %s339, 1
    %s341 = scalar_select %p338, %s339, %s340
    %p344 = pneg %p338
    %p345 = scmp.eq.s32.totalorder %s68, 1
    %p346 = por %p344, %p345
    %p347 = scmp.ne.s32.totalorder %s339, %s342
    %p348 = scmp.eq.s32.totalorder %s68, 0
    %p349 = por %p347, %p348
    %p350 = scmp.ne.s32.totalorder %s339, %s342
    %p351 = scmp.eq.s32.totalorder %s73, 1
    %p352 = por %p350, %p351
    %p353 = scmp.ne.s32.totalorder %s342, %s343
    %p354 = scmp.eq.s32.totalorder %s73, 0
    %p355 = por %p353, %p354
    %p356 = scmp.ne.s32.totalorder %s342, %s343
    %p357 = scmp.eq.s32.totalorder %s74, 1
    %p358 = por %p356, %p357
    %p360 = scmp.ne.s32.totalorder %s343, %s359
    %p361 = scmp.eq.s32.totalorder %s74, 0
    %p362 = por %p360, %p361
    %s363 = ssub.s32 %s68, %s75
    %p364 = scmp.eq.s32.totalorder %s363, 0
    %s366 = sadd.s32 %s365, 1
    %s367 = scalar_select %p364, %s365, %s366
    %p370 = pneg %p364
    %p371 = scmp.eq.s32.totalorder %s68, 1
    %p372 = por %p370, %p371
    %p373 = scmp.ne.s32.totalorder %s365, %s368
    %p374 = scmp.eq.s32.totalorder %s68, 0
    %p375 = por %p373, %p374
    %p376 = scmp.ne.s32.totalorder %s365, %s368
    %p377 = scmp.eq.s32.totalorder %s73, 1
    %p378 = por %p376, %p377
    %p379 = scmp.ne.s32.totalorder %s368, %s369
    %p380 = scmp.eq.s32.totalorder %s73, 0
    %p381 = por %p379, %p380
    %p382 = scmp.ne.s32.totalorder %s368, %s369
    %p383 = scmp.eq.s32.totalorder %s74, 1
    %p384 = por %p382, %p383
    %p386 = scmp.ne.s32.totalorder %s369, %s385
    %p387 = scmp.eq.s32.totalorder %s74, 0
    %p388 = por %p386, %p387
    %s389 = ssub.s32 %s68, %s75
    %p390 = scmp.eq.s32.totalorder %s389, 0
    %s392 = sadd.s32 %s391, 1
    %s393 = scalar_select %p390, %s391, %s392
    %p396 = pneg %p390
    %p397 = scmp.eq.s32.totalorder %s68, 1
    %p398 = por %p396, %p397
    %p399 = scmp.ne.s32.totalorder %s391, %s394
    %p400 = scmp.eq.s32.totalorder %s68, 0
    %p401 = por %p399, %p400
    %p402 = scmp.ne.s32.totalorder %s391, %s394
    %p403 = scmp.eq.s32.totalorder %s73, 1
    %p404 = por %p402, %p403
    %p405 = scmp.ne.s32.totalorder %s394, %s395
    %p406 = scmp.eq.s32.totalorder %s73, 0
    %p407 = por %p405, %p406
    %p408 = scmp.ne.s32.totalorder %s394, %s395
    %p409 = scmp.eq.s32.totalorder %s74, 1
    %p410 = por %p408, %p409
    %p412 = scmp.ne.s32.totalorder %s395, %s411
    %p413 = scmp.eq.s32.totalorder %s74, 0
    %p414 = por %p412, %p413
    %s415 = ssub.s32 %s68, %s75
    %p416 = scmp.eq.s32.totalorder %s415, 0
    %s418 = sadd.s32 %s417, 1
    %s419 = scalar_select %p416, %s417, %s418
    %p422 = pneg %p416
    %p423 = scmp.eq.s32.totalorder %s68, 1
    %p424 = por %p422, %p423
    %p425 = scmp.ne.s32.totalorder %s417, %s420
    %p426 = scmp.eq.s32.totalorder %s68, 0
    %p427 = por %p425, %p426
    %p428 = scmp.ne.s32.totalorder %s417, %s420
    %p429 = scmp.eq.s32.totalorder %s73, 1
    %p430 = por %p428, %p429
    %p431 = scmp.ne.s32.totalorder %s420, %s421
    %p432 = scmp.eq.s32.totalorder %s73, 0
    %p433 = por %p431, %p432
    %p434 = scmp.ne.s32.totalorder %s420, %s421
    %p435 = scmp.eq.s32.totalorder %s74, 1
    %p436 = por %p434, %p435
    %p438 = scmp.ne.s32.totalorder %s421, %s437
    %p439 = scmp.eq.s32.totalorder %s74, 0
    %p440 = por %p438, %p439
    %s441 = ssub.s32 %s68, %s75
    %p442 = scmp.eq.s32.totalorder %s441, 0
    %s444 = sadd.s32 %s443, 1
    %s445 = scalar_select %p442, %s443, %s444
    %p448 = pneg %p442
    %p449 = scmp.eq.s32.totalorder %s68, 1
    %p450 = por %p448, %p449
    %p451 = scmp.ne.s32.totalorder %s443, %s446
    %p452 = scmp.eq.s32.totalorder %s68, 0
    %p453 = por %p451, %p452
    %p454 = scmp.ne.s32.totalorder %s443, %s446
    %p455 = scmp.eq.s32.totalorder %s73, 1
    %p456 = por %p454, %p455
    %p457 = scmp.ne.s32.totalorder %s446, %s447
    %p458 = scmp.eq.s32.totalorder %s73, 0
    %p459 = por %p457, %p458
    %p460 = scmp.ne.s32.totalorder %s446, %s447
    %p461 = scmp.eq.s32.totalorder %s74, 1
    %p462 = por %p460, %p461
    %p464 = scmp.ne.s32.totalorder %s447, %s463
    %p465 = scmp.eq.s32.totalorder %s74, 0
    %p466 = por %p464, %p465
    %s467 = ssub.s32 %s68, %s75
    %p468 = scmp.eq.s32.totalorder %s467, 0
    %s470 = sadd.s32 %s469, 1
    %s471 = scalar_select %p468, %s469, %s470
    %p474 = pneg %p468
    %p475 = scmp.eq.s32.totalorder %s68, 1
    %p476 = por %p474, %p475
    %p477 = scmp.ne.s32.totalorder %s469, %s472
    %p478 = scmp.eq.s32.totalorder %s68, 0
    %p479 = por %p477, %p478
    %p480 = scmp.ne.s32.totalorder %s469, %s472
    %p481 = scmp.eq.s32.totalorder %s73, 1
    %p482 = por %p480, %p481
    %p483 = scmp.ne.s32.totalorder %s472, %s473
    %p484 = scmp.eq.s32.totalorder %s73, 0
    %p485 = por %p483, %p484
    %p486 = scmp.ne.s32.totalorder %s472, %s473
    %p487 = scmp.eq.s32.totalorder %s74, 1
    %p488 = por %p486, %p487
    %p490 = scmp.ne.s32.totalorder %s473, %s489
    %p491 = scmp.eq.s32.totalorder %s74, 0
    %p492 = por %p490, %p491
    %s493 = ssub.s32 %s68, %s75
    %p494 = scmp.eq.s32.totalorder %s493, 0
    %s496 = sadd.s32 %s495, 1
    %s497 = scalar_select %p494, %s495, %s496
    %p500 = pneg %p494
    %p501 = scmp.eq.s32.totalorder %s68, 1
    %p502 = por %p500, %p501
    %p503 = scmp.ne.s32.totalorder %s495, %s498
    %p504 = scmp.eq.s32.totalorder %s68, 0
    %p505 = por %p503, %p504
    %p506 = scmp.ne.s32.totalorder %s495, %s498
    %p507 = scmp.eq.s32.totalorder %s73, 1
    %p508 = por %p506, %p507
    %p509 = scmp.ne.s32.totalorder %s498, %s499
    %p510 = scmp.eq.s32.totalorder %s73, 0
    %p511 = por %p509, %p510
    %p512 = scmp.ne.s32.totalorder %s498, %s499
    %p513 = scmp.eq.s32.totalorder %s74, 1
    %p514 = por %p512, %p513
    %p516 = scmp.ne.s32.totalorder %s499, %s515
    %p517 = scmp.eq.s32.totalorder %s74, 0
    %p518 = por %p516, %p517
    %s519 = ssub.s32 %s68, %s75
    %p520 = scmp.eq.s32.totalorder %s519, 0
    %s522 = sadd.s32 %s521, 1
    %s523 = scalar_select %p520, %s521, %s522
    %p526 = pneg %p520
    %p527 = scmp.eq.s32.totalorder %s68, 1
    %p528 = por %p526, %p527
    %p529 = scmp.ne.s32.totalorder %s521, %s524
    %p530 = scmp.eq.s32.totalorder %s68, 0
    %p531 = por %p529, %p530
    %p532 = scmp.ne.s32.totalorder %s521, %s524
    %p533 = scmp.eq.s32.totalorder %s73, 1
    %p534 = por %p532, %p533
    %p535 = scmp.ne.s32.totalorder %s524, %s525
    %p536 = scmp.eq.s32.totalorder %s73, 0
    %p537 = por %p535, %p536
    %p538 = scmp.ne.s32.totalorder %s524, %s525
    %p539 = scmp.eq.s32.totalorder %s74, 1
    %p540 = por %p538, %p539
    %p542 = scmp.ne.s32.totalorder %s525, %s541
    %p543 = scmp.eq.s32.totalorder %s74, 0
    %p544 = por %p542, %p543
    %s545 = ssub.s32 %s68, %s75
    %p546 = scmp.eq.s32.totalorder %s545, 0
    %s548 = sadd.s32 %s547, 1
    %s549 = scalar_select %p546, %s547, %s548
    %p552 = pneg %p546
    %p553 = scmp.eq.s32.totalorder %s68, 1
    %p554 = por %p552, %p553
    %p555 = scmp.ne.s32.totalorder %s547, %s550
    %p556 = scmp.eq.s32.totalorder %s68, 0
    %p557 = por %p555, %p556
    %p558 = scmp.ne.s32.totalorder %s547, %s550
    %p559 = scmp.eq.s32.totalorder %s73, 1
    %p560 = por %p558, %p559
    %p561 = scmp.ne.s32.totalorder %s550, %s551
    %p562 = scmp.eq.s32.totalorder %s73, 0
    %p563 = por %p561, %p562
    %p564 = scmp.ne.s32.totalorder %s550, %s551
    %p565 = scmp.eq.s32.totalorder %s74, 1
    %p566 = por %p564, %p565
    %p568 = scmp.ne.s32.totalorder %s551, %s567
    %p569 = scmp.eq.s32.totalorder %s74, 0
    %p570 = por %p568, %p569
    %s571 = ssub.s32 %s68, %s75
    %p572 = scmp.eq.s32.totalorder %s571, 0
    %s574 = sadd.s32 %s573, 1
    %s575 = scalar_select %p572, %s573, %s574
    %p578 = pneg %p572
    %p579 = scmp.eq.s32.totalorder %s68, 1
    %p580 = por %p578, %p579
    %p581 = scmp.ne.s32.totalorder %s573, %s576
    %p582 = scmp.eq.s32.totalorder %s68, 0
    %p583 = por %p581, %p582
    %p584 = scmp.ne.s32.totalorder %s573, %s576
    %p585 = scmp.eq.s32.totalorder %s73, 1
    %p586 = por %p584, %p585
    %p587 = scmp.ne.s32.totalorder %s576, %s577
    %p588 = scmp.eq.s32.totalorder %s73, 0
    %p589 = por %p587, %p588
    %p590 = scmp.ne.s32.totalorder %s576, %s577
    %p591 = scmp.eq.s32.totalorder %s74, 1
    %p592 = por %p590, %p591
    %p594 = scmp.ne.s32.totalorder %s577, %s593
    %p595 = scmp.eq.s32.totalorder %s74, 0
    %p596 = por %p594, %p595
    %s597 = ssub.s32 %s68, %s75
    %p598 = scmp.eq.s32.totalorder %s597, 0
    %s600 = sadd.s32 %s599, 1
    %s601 = scalar_select %p598, %s599, %s600
    %p604 = pneg %p598
    %p605 = scmp.eq.s32.totalorder %s68, 1
    %p606 = por %p604, %p605
    %p607 = scmp.ne.s32.totalorder %s599, %s602
    %p608 = scmp.eq.s32.totalorder %s68, 0
    %p609 = por %p607, %p608
    %p610 = scmp.ne.s32.totalorder %s599, %s602
    %p611 = scmp.eq.s32.totalorder %s73, 1
    %p612 = por %p610, %p611
    %p613 = scmp.ne.s32.totalorder %s602, %s603
    %p614 = scmp.eq.s32.totalorder %s73, 0
    %p615 = por %p613, %p614
    %p616 = scmp.ne.s32.totalorder %s602, %s603
    %p617 = scmp.eq.s32.totalorder %s74, 1
    %p618 = por %p616, %p617
    %p620 = scmp.ne.s32.totalorder %s603, %s619
    %p621 = scmp.eq.s32.totalorder %s74, 0
    %p622 = por %p620, %p621
    %s623 = ssub.s32 %s68, %s75
    %p624 = scmp.eq.s32.totalorder %s623, 0
    %s626 = sadd.s32 %s625, 1
    %s627 = scalar_select %p624, %s625, %s626
    %p630 = pneg %p624
    %p631 = scmp.eq.s32.totalorder %s68, 1
    %p632 = por %p630, %p631
    %p633 = scmp.ne.s32.totalorder %s625, %s628
    %p634 = scmp.eq.s32.totalorder %s68, 0
    %p635 = por %p633, %p634
    %p636 = scmp.ne.s32.totalorder %s625, %s628
    %p637 = scmp.eq.s32.totalorder %s73, 1
    %p638 = por %p636, %p637
    %p639 = scmp.ne.s32.totalorder %s628, %s629
    %p640 = scmp.eq.s32.totalorder %s73, 0
    %p641 = por %p639, %p640
    %p642 = scmp.ne.s32.totalorder %s628, %s629
    %p643 = scmp.eq.s32.totalorder %s74, 1
    %p644 = por %p642, %p643
    %p646 = scmp.ne.s32.totalorder %s629, %s645
    %p647 = scmp.eq.s32.totalorder %s74, 0
    %p648 = por %p646, %p647
    %s649 = ssub.s32 %s68, %s75
    %p650 = scmp.eq.s32.totalorder %s649, 0
    %s652 = sadd.s32 %s651, 1
    %s653 = scalar_select %p650, %s651, %s652
    %p656 = pneg %p650
    %p657 = scmp.eq.s32.totalorder %s68, 1
    %p658 = por %p656, %p657
    %p659 = scmp.ne.s32.totalorder %s651, %s654
    %p660 = scmp.eq.s32.totalorder %s68, 0
    %p661 = por %p659, %p660
    %p662 = scmp.ne.s32.totalorder %s651, %s654
    %p663 = scmp.eq.s32.totalorder %s73, 1
    %p664 = por %p662, %p663
    %p665 = scmp.ne.s32.totalorder %s654, %s655
    %p666 = scmp.eq.s32.totalorder %s73, 0
    %p667 = por %p665, %p666
    %p668 = scmp.ne.s32.totalorder %s654, %s655
    %p669 = scmp.eq.s32.totalorder %s74, 1
    %p670 = por %p668, %p669
    %p672 = scmp.ne.s32.totalorder %s655, %s671
    %p673 = scmp.eq.s32.totalorder %s74, 0
    %p674 = por %p672, %p673
    %s675 = ssub.s32 %s68, %s75
    %p676 = scmp.eq.s32.totalorder %s675, 0
    %s678 = sadd.s32 %s677, 1
    %s679 = scalar_select %p676, %s677, %s678
    %p682 = pneg %p676
    %p683 = scmp.eq.s32.totalorder %s68, 1
    %p684 = por %p682, %p683
    %p685 = scmp.ne.s32.totalorder %s677, %s680
    %p686 = scmp.eq.s32.totalorder %s68, 0
    %p687 = por %p685, %p686
    %p688 = scmp.ne.s32.totalorder %s677, %s680
    %p689 = scmp.eq.s32.totalorder %s73, 1
    %p690 = por %p688, %p689
    %p691 = scmp.ne.s32.totalorder %s680, %s681
    %p692 = scmp.eq.s32.totalorder %s73, 0
    %p693 = por %p691, %p692
    %p694 = scmp.ne.s32.totalorder %s680, %s681
    %p695 = scmp.eq.s32.totalorder %s74, 1
    %p696 = por %p694, %p695
    %p698 = scmp.ne.s32.totalorder %s681, %s697
    %p699 = scmp.eq.s32.totalorder %s74, 0
    %p700 = por %p698, %p699
    %s701 = ssub.s32 %s68, %s75
    %p702 = scmp.eq.s32.totalorder %s701, 0
    %s704 = sadd.s32 %s703, 1
    %s705 = scalar_select %p702, %s703, %s704
    %p708 = pneg %p702
    %p709 = scmp.eq.s32.totalorder %s68, 1
    %p710 = por %p708, %p709
    %p711 = scmp.ne.s32.totalorder %s703, %s706
    %p712 = scmp.eq.s32.totalorder %s68, 0
    %p713 = por %p711, %p712
    %p714 = scmp.ne.s32.totalorder %s703, %s706
    %p715 = scmp.eq.s32.totalorder %s73, 1
    %p716 = por %p714, %p715
    %p717 = scmp.ne.s32.totalorder %s706, %s707
    %p718 = scmp.eq.s32.totalorder %s73, 0
    %p719 = por %p717, %p718
    %p720 = scmp.ne.s32.totalorder %s706, %s707
    %p721 = scmp.eq.s32.totalorder %s74, 1
    %p722 = por %p720, %p721
    %p724 = scmp.ne.s32.totalorder %s707, %s723
    %p725 = scmp.eq.s32.totalorder %s74, 0
    %p726 = por %p724, %p725
    %s727 = ssub.s32 %s68, %s75
    %p728 = scmp.eq.s32.totalorder %s727, 0
    %s730 = sadd.s32 %s729, 1
    %s731 = scalar_select %p728, %s729, %s730
    %p734 = pneg %p728
    %p735 = scmp.eq.s32.totalorder %s68, 1
    %p736 = por %p734, %p735
    %p737 = scmp.ne.s32.totalorder %s729, %s732
    %p738 = scmp.eq.s32.totalorder %s68, 0
    %p739 = por %p737, %p738
    %p740 = scmp.ne.s32.totalorder %s729, %s732
    %p741 = scmp.eq.s32.totalorder %s73, 1
    %p742 = por %p740, %p741
    %p743 = scmp.ne.s32.totalorder %s732, %s733
    %p744 = scmp.eq.s32.totalorder %s73, 0
    %p745 = por %p743, %p744
    %p746 = scmp.ne.s32.totalorder %s732, %s733
    %p747 = scmp.eq.s32.totalorder %s74, 1
    %p748 = por %p746, %p747
    %p750 = scmp.ne.s32.totalorder %s733, %s749
    %p751 = scmp.eq.s32.totalorder %s74, 0
    %p752 = por %p750, %p751
    %s753 = ssub.s32 %s68, %s75
    %p754 = scmp.eq.s32.totalorder %s753, 0
    %s756 = sadd.s32 %s755, 1
    %s757 = scalar_select %p754, %s755, %s756
    %p760 = pneg %p754
    %p761 = scmp.eq.s32.totalorder %s68, 1
    %p762 = por %p760, %p761
    %p763 = scmp.ne.s32.totalorder %s755, %s758
    %p764 = scmp.eq.s32.totalorder %s68, 0
    %p765 = por %p763, %p764
    %p766 = scmp.ne.s32.totalorder %s755, %s758
    %p767 = scmp.eq.s32.totalorder %s73, 1
    %p768 = por %p766, %p767
    %p769 = scmp.ne.s32.totalorder %s758, %s759
    %p770 = scmp.eq.s32.totalorder %s73, 0
    %p771 = por %p769, %p770
    %p772 = scmp.ne.s32.totalorder %s758, %s759
    %p773 = scmp.eq.s32.totalorder %s74, 1
    %p774 = por %p772, %p773
    %p776 = scmp.ne.s32.totalorder %s759, %s775
    %p777 = scmp.eq.s32.totalorder %s74, 0
    %p778 = por %p776, %p777
    %s780 = sadd.s32 %s779, 1
    %p783 = scmp.eq.s32.totalorder %s68, 1
    %p784 = scmp.ne.s32.totalorder %s779, %s781
    %p785 = scmp.eq.s32.totalorder %s68, 0
    %p786 = por %p784, %p785
    %p787 = scmp.ne.s32.totalorder %s779, %s781
    %p788 = scmp.eq.s32.totalorder %s73, 1
    %p789 = por %p787, %p788
    %p790 = scmp.ne.s32.totalorder %s781, %s782
    %p791 = scmp.eq.s32.totalorder %s73, 0
    %p792 = por %p790, %p791
    %p793 = scmp.ne.s32.totalorder %s781, %s782
    %p794 = scmp.eq.s32.totalorder %s74, 1
    %p795 = por %p793, %p794
    %p797 = scmp.ne.s32.totalorder %s782, %s796
    %p798 = scmp.eq.s32.totalorder %s74, 0
    %p799 = por %p797, %p798
    %s800 = ssub.s32 %s68, %s75
    %p801 = scmp.eq.s32.totalorder %s800, 0
    %s803 = sadd.s32 %s802, 1
    %s804 = scalar_select %p801, %s802, %s803
    %p807 = pneg %p801
    %p808 = scmp.eq.s32.totalorder %s68, 1
    %p809 = por %p807, %p808
    %p810 = scmp.ne.s32.totalorder %s802, %s805
    %p811 = scmp.eq.s32.totalorder %s68, 0
    %p812 = por %p810, %p811
    %p813 = scmp.ne.s32.totalorder %s802, %s805
    %p814 = scmp.eq.s32.totalorder %s73, 1
    %p815 = por %p813, %p814
    %p816 = scmp.ne.s32.totalorder %s805, %s806
    %p817 = scmp.eq.s32.totalorder %s73, 0
    %p818 = por %p816, %p817
    %p819 = scmp.ne.s32.totalorder %s805, %s806
    %p820 = scmp.eq.s32.totalorder %s74, 1
    %p821 = por %p819, %p820
    %p823 = scmp.ne.s32.totalorder %s806, %s822
    %p824 = scmp.eq.s32.totalorder %s74, 0
    %p825 = por %p823, %p824
    %s826 = ssub.s32 %s68, %s75
    %p827 = scmp.eq.s32.totalorder %s826, 0
    %s829 = sadd.s32 %s828, 1
    %s830 = scalar_select %p827, %s828, %s829
    %p833 = pneg %p827
    %p834 = scmp.eq.s32.totalorder %s68, 1
    %p835 = por %p833, %p834
    %p836 = scmp.ne.s32.totalorder %s828, %s831
    %p837 = scmp.eq.s32.totalorder %s68, 0
    %p838 = por %p836, %p837
    %p839 = scmp.ne.s32.totalorder %s828, %s831
    %p840 = scmp.eq.s32.totalorder %s73, 1
    %p841 = por %p839, %p840
    %p842 = scmp.ne.s32.totalorder %s831, %s832
    %p843 = scmp.eq.s32.totalorder %s73, 0
    %p844 = por %p842, %p843
    %p845 = scmp.ne.s32.totalorder %s831, %s832
    %p846 = scmp.eq.s32.totalorder %s74, 1
    %p847 = por %p845, %p846
    %p849 = scmp.ne.s32.totalorder %s832, %s848
    %p850 = scmp.eq.s32.totalorder %s74, 0
    %p851 = por %p849, %p850
    %p852 = scmp.le.s32.totalorder 1, %s68
    %p853 = scmp.lt.s32.totalorder %s68, 3
    %p854 = pnand %p852, %p853
    %p855 = pneg %p854
    // Predicated region
    $region9: #{transformer_decoder_forward.2} parent=5 // pred_check
      _
    $region10: #{transformer_decoder_forward.2} parent=5 // pred_check_branch
      %857 = sbr.rel (%p854) target = $region12
    $region11: #{transformer_decoder_forward.2} parent=5 // pred_region
      %s858 = ssub.s32 %s68, 1
      // Predicated region
      $region13: #{transformer_decoder_forward.2} parent=11 // pred_check
        %p859 = pneg %p89
      $region14: #{transformer_decoder_forward.2} parent=11 // pred_check_branch
        %861 = sbr.rel (%p859) target = $region16
      $region15: #{transformer_decoder_forward.2} parent=11 // pred_region
        _
      $region16: #{transformer_decoder_forward.2} parent=11 // pred_fallthru
        _
      // Predicated region
      $region17: #{transformer_decoder_forward.2} parent=11 // pred_check
        %p862 = pneg %p110
      $region18: #{transformer_decoder_forward.2} parent=11 // pred_check_branch
        %864 = sbr.rel (%p862) target = $region20
      $region19: #{transformer_decoder_forward.2} parent=11 // pred_region
        _
      $region20: #{transformer_decoder_forward.2} parent=11 // pred_fallthru
        _
      // Predicated region
      $region21: #{transformer_decoder_forward.2} parent=11 // pred_check
        %p865 = pneg %p131
      $region22: #{transformer_decoder_forward.2} parent=11 // pred_check_branch
        %867 = sbr.rel (%p865) target = $region24
      $region23: #{transformer_decoder_forward.2} parent=11 // pred_region
        _
      $region24: #{transformer_decoder_forward.2} parent=11 // pred_fallthru
        _
      // Predicated region
      $region25: #{transformer_decoder_forward.2} parent=11 // pred_check
        %p868 = pneg %p152
      $region26: #{transformer_decoder_forward.2} parent=11 // pred_check_branch
        %870 = sbr.rel (%p868) target = $region28
      $region27: #{transformer_decoder_forward.2} parent=11 // pred_region
        _
      $region28: #{transformer_decoder_forward.2} parent=11 // pred_fallthru
        _
      // Predicated region
      $region29: #{transformer_decoder_forward.2} parent=11 // pred_check
        %p871 = pneg %p173
      $region30: #{transformer_decoder_forward.2} parent=11 // pred_check_branch
        %873 = sbr.rel (%p871) target = $region32
      $region31: #{transformer_decoder_forward.2} parent=11 // pred_region
        _
      $region32: #{transformer_decoder_forward.2} parent=11 // pred_fallthru
        _
    $region12: #{transformer_decoder_forward.2} parent=5 // pred_fallthru
      _
    %p874 = scmp.lt.s32.totalorder %s68, 2
    // Predicated region
    $region33: #{transformer_decoder_forward.2} parent=5 // pred_check
      %p875 = pneg %p874
    $region34: #{transformer_decoder_forward.2} parent=5 // pred_check_branch
      %877 = sbr.rel (%p875) target = $region36
    $region35: #{transformer_decoder_forward.2} parent=5 // pred_region
      // Predicated region
      $region37: #{transformer_decoder_forward.2} parent=35 // pred_check
        %p878 = pneg %p193
      $region38: #{transformer_decoder_forward.2} parent=35 // pred_check_branch
        %880 = sbr.rel (%p878) target = $region40
      $region39: #{transformer_decoder_forward.2} parent=35 // pred_region
        %p881 = scmp.lt.s32.totalorder %s68, 1
        %s882 = scalar_select %p881, %s68, 1
        %s883 = scalar_lea.vmem %s11, %s882
      $region40: #{transformer_decoder_forward.2} parent=35 // pred_fallthru
        _
      // Predicated region
      $region41: #{transformer_decoder_forward.2} parent=35 // pred_check
        %p884 = pneg %p219
      $region42: #{transformer_decoder_forward.2} parent=35 // pred_check_branch
        %886 = sbr.rel (%p884) target = $region44
      $region43: #{transformer_decoder_forward.2} parent=35 // pred_region
        %p887 = scmp.lt.s32.totalorder %s68, 1
        %s888 = scalar_select %p887, %s68, 1
        %s889 = scalar_lea.vmem %s13, %s888
      $region44: #{transformer_decoder_forward.2} parent=35 // pred_fallthru
        _
      // Predicated region
      $region45: #{transformer_decoder_forward.2} parent=35 // pred_check
        %p890 = pneg %p245
      $region46: #{transformer_decoder_forward.2} parent=35 // pred_check_branch
        %892 = sbr.rel (%p890) target = $region48
      $region47: #{transformer_decoder_forward.2} parent=35 // pred_region
        %p893 = scmp.lt.s32.totalorder %s68, 1
        %s894 = scalar_select %p893, %s68, 1
        %s895 = smul.addr %s894, 4
        %s896 = smul.addr %s895, 4
        %s897 = scalar_lea.vmem %s15, %s896
      $region48: #{transformer_decoder_forward.2} parent=35 // pred_fallthru
        _
      // Predicated region
      $region49: #{transformer_decoder_forward.2} parent=35 // pred_check
        %p898 = pneg %p271
      $region50: #{transformer_decoder_forward.2} parent=35 // pred_check_branch
        %900 = sbr.rel (%p898) target = $region52
      $region51: #{transformer_decoder_forward.2} parent=35 // pred_region
        %p901 = scmp.lt.s32.totalorder %s68, 1
        %s902 = scalar_select %p901, %s68, 1
        %s903 = scalar_lea.vmem %s17, %s902
      $region52: #{transformer_decoder_forward.2} parent=35 // pred_fallthru
        _
      // Predicated region
      $region53: #{transformer_decoder_forward.2} parent=35 // pred_check
        %p904 = pneg %p297
      $region54: #{transformer_decoder_forward.2} parent=35 // pred_check_branch
        %906 = sbr.rel (%p904) target = $region56
      $region55: #{transformer_decoder_forward.2} parent=35 // pred_region
        %p907 = scmp.lt.s32.totalorder %s68, 1
        %s908 = scalar_select %p907, %s68, 1
        %s909 = smul.addr %s908, 4
        %s910 = smul.addr %s909, 4
        %s911 = scalar_lea.vmem %s19, %s910
      $region56: #{transformer_decoder_forward.2} parent=35 // pred_fallthru
        _
      // Predicated region
      $region57: #{transformer_decoder_forward.2} parent=35 // pred_check
        %p912 = pneg %p323
      $region58: #{transformer_decoder_forward.2} parent=35 // pred_check_branch
        %914 = sbr.rel (%p912) target = $region60
      $region59: #{transformer_decoder_forward.2} parent=35 // pred_region
        %p915 = scmp.lt.s32.totalorder %s68, 1
        %s916 = scalar_select %p915, %s68, 1
        %s917 = smul.addr %s916, 4
        %s918 = scalar_lea.vmem %s21, %s917
      $region60: #{transformer_decoder_forward.2} parent=35 // pred_fallthru
        _
      // Predicated region
      $region61: #{transformer_decoder_forward.2} parent=35 // pred_check
        %p919 = pneg %p349
      $region62: #{transformer_decoder_forward.2} parent=35 // pred_check_branch
        %921 = sbr.rel (%p919) target = $region64
      $region63: #{transformer_decoder_forward.2} parent=35 // pred_region
        %p922 = scmp.lt.s32.totalorder %s68, 1
        %s923 = scalar_select %p922, %s68, 1
        %s924 = smul.addr %s923, 4
        %s925 = scalar_lea.vmem %s23, %s924
      $region64: #{transformer_decoder_forward.2} parent=35 // pred_fallthru
        _
      // Predicated region
      $region65: #{transformer_decoder_forward.2} parent=35 // pred_check
        %p926 = pneg %p375
      $region66: #{transformer_decoder_forward.2} parent=35 // pred_check_branch
        %928 = sbr.rel (%p926) target = $region68
      $region67: #{transformer_decoder_forward.2} parent=35 // pred_region
        %p929 = scmp.lt.s32.totalorder %s68, 1
        %s930 = scalar_select %p929, %s68, 1
        %s931 = smul.addr %s930, 4
        %s932 = smul.addr %s931, 4
        %s933 = scalar_lea.vmem %s25, %s932
      $region68: #{transformer_decoder_forward.2} parent=35 // pred_fallthru
        _
      // Predicated region
      $region69: #{transformer_decoder_forward.2} parent=35 // pred_check
        %p934 = pneg %p401
      $region70: #{transformer_decoder_forward.2} parent=35 // pred_check_branch
        %936 = sbr.rel (%p934) target = $region72
      $region71: #{transformer_decoder_forward.2} parent=35 // pred_region
        %p937 = scmp.lt.s32.totalorder %s68, 1
        %s938 = scalar_select %p937, %s68, 1
        %s939 = scalar_lea.vmem %s27, %s938
      $region72: #{transformer_decoder_forward.2} parent=35 // pred_fallthru
        _
      // Predicated region
      $region73: #{transformer_decoder_forward.2} parent=35 // pred_check
        %p940 = pneg %p427
      $region74: #{transformer_decoder_forward.2} parent=35 // pred_check_branch
        %942 = sbr.rel (%p940) target = $region76
      $region75: #{transformer_decoder_forward.2} parent=35 // pred_region
        %p943 = scmp.lt.s32.totalorder %s68, 1
        %s944 = scalar_select %p943, %s68, 1
        %s945 = scalar_lea.vmem %s29, %s944
      $region76: #{transformer_decoder_forward.2} parent=35 // pred_fallthru
        _
      // Predicated region
      $region77: #{transformer_decoder_forward.2} parent=35 // pred_check
        %p946 = pneg %p453
      $region78: #{transformer_decoder_forward.2} parent=35 // pred_check_branch
        %948 = sbr.rel (%p946) target = $region80
      $region79: #{transformer_decoder_forward.2} parent=35 // pred_region
        %p949 = scmp.lt.s32.totalorder %s68, 1
        %s950 = scalar_select %p949, %s68, 1
        %s951 = scalar_lea.vmem %s31, %s950
      $region80: #{transformer_decoder_forward.2} parent=35 // pred_fallthru
        _
      // Predicated region
      $region81: #{transformer_decoder_forward.2} parent=35 // pred_check
        %p952 = pneg %p479
      $region82: #{transformer_decoder_forward.2} parent=35 // pred_check_branch
        %954 = sbr.rel (%p952) target = $region84
      $region83: #{transformer_decoder_forward.2} parent=35 // pred_region
        %p955 = scmp.lt.s32.totalorder %s68, 1
        %s956 = scalar_select %p955, %s68, 1
        %s957 = smul.addr %s956, 4
        %s958 = smul.addr %s957, 4
        %s959 = scalar_lea.vmem %s33, %s958
      $region84: #{transformer_decoder_forward.2} parent=35 // pred_fallthru
        _
      // Predicated region
      $region85: #{transformer_decoder_forward.2} parent=35 // pred_check
        %p960 = pneg %p505
      $region86: #{transformer_decoder_forward.2} parent=35 // pred_check_branch
        %962 = sbr.rel (%p960) target = $region88
      $region87: #{transformer_decoder_forward.2} parent=35 // pred_region
        %p963 = scmp.lt.s32.totalorder %s68, 1
        %s964 = scalar_select %p963, %s68, 1
        %s965 = scalar_lea.vmem %s35, %s964
      $region88: #{transformer_decoder_forward.2} parent=35 // pred_fallthru
        _
      // Predicated region
      $region89: #{transformer_decoder_forward.2} parent=35 // pred_check
        %p966 = pneg %p531
      $region90: #{transformer_decoder_forward.2} parent=35 // pred_check_branch
        %968 = sbr.rel (%p966) target = $region92
      $region91: #{transformer_decoder_forward.2} parent=35 // pred_region
        %p969 = scmp.lt.s32.totalorder %s68, 1
        %s970 = scalar_select %p969, %s68, 1
        %s971 = smul.addr %s970, 4
        %s972 = smul.addr %s971, 4
        %s973 = scalar_lea.vmem %s37, %s972
      $region92: #{transformer_decoder_forward.2} parent=35 // pred_fallthru
        _
      // Predicated region
      $region93: #{transformer_decoder_forward.2} parent=35 // pred_check
        %p974 = pneg %p557
      $region94: #{transformer_decoder_forward.2} parent=35 // pred_check_branch
        %976 = sbr.rel (%p974) target = $region96
      $region95: #{transformer_decoder_forward.2} parent=35 // pred_region
        %p977 = scmp.lt.s32.totalorder %s68, 1
        %s978 = scalar_select %p977, %s68, 1
        %s979 = scalar_lea.vmem %s39, %s978
      $region96: #{transformer_decoder_forward.2} parent=35 // pred_fallthru
        _
      // Predicated region
      $region97: #{transformer_decoder_forward.2} parent=35 // pred_check
        %p980 = pneg %p583
      $region98: #{transformer_decoder_forward.2} parent=35 // pred_check_branch
        %982 = sbr.rel (%p980) target = $region100
      $region99: #{transformer_decoder_forward.2} parent=35 // pred_region
        %p983 = scmp.lt.s32.totalorder %s68, 1
        %s984 = scalar_select %p983, %s68, 1
        %s985 = smul.addr %s984, 4
        %s986 = smul.addr %s985, 4
        %s987 = scalar_lea.vmem %s41, %s986
      $region100: #{transformer_decoder_forward.2} parent=35 // pred_fallthru
        _
      // Predicated region
      $region101: #{transformer_decoder_forward.2} parent=35 // pred_check
        %p988 = pneg %p609
      $region102: #{transformer_decoder_forward.2} parent=35 // pred_check_branch
        %990 = sbr.rel (%p988) target = $region104
      $region103: #{transformer_decoder_forward.2} parent=35 // pred_region
        %p991 = scmp.lt.s32.totalorder %s68, 1
        %s992 = scalar_select %p991, %s68, 1
        %s993 = scalar_lea.vmem %s43, %s992
      $region104: #{transformer_decoder_forward.2} parent=35 // pred_fallthru
        _
      // Predicated region
      $region105: #{transformer_decoder_forward.2} parent=35 // pred_check
        %p994 = pneg %p635
      $region106: #{transformer_decoder_forward.2} parent=35 // pred_check_branch
        %996 = sbr.rel (%p994) target = $region108
      $region107: #{transformer_decoder_forward.2} parent=35 // pred_region
        %p997 = scmp.lt.s32.totalorder %s68, 1
        %s998 = scalar_select %p997, %s68, 1
        %s999 = scalar_lea.vmem %s45, %s998
      $region108: #{transformer_decoder_forward.2} parent=35 // pred_fallthru
        _
      // Predicated region
      $region109: #{transformer_decoder_forward.2} parent=35 // pred_check
        %p1000 = pneg %p661
      $region110: #{transformer_decoder_forward.2} parent=35 // pred_check_branch
        %1002 = sbr.rel (%p1000) target = $region112
      $region111: #{transformer_decoder_forward.2} parent=35 // pred_region
        %p1003 = scmp.lt.s32.totalorder %s68, 1
        %s1004 = scalar_select %p1003, %s68, 1
        %s1005 = scalar_lea.vmem %s47, %s1004
      $region112: #{transformer_decoder_forward.2} parent=35 // pred_fallthru
        _
      // Predicated region
      $region113: #{transformer_decoder_forward.2} parent=35 // pred_check
        %p1006 = pneg %p687
      $region114: #{transformer_decoder_forward.2} parent=35 // pred_check_branch
        %1008 = sbr.rel (%p1006) target = $region116
      $region115: #{transformer_decoder_forward.2} parent=35 // pred_region
        %p1009 = scmp.lt.s32.totalorder %s68, 1
        %s1010 = scalar_select %p1009, %s68, 1
        %s1011 = smul.addr %s1010, 4
        %s1012 = smul.addr %s1011, 4
        %s1013 = scalar_lea.vmem %s49, %s1012
      $region116: #{transformer_decoder_forward.2} parent=35 // pred_fallthru
        _
      // Predicated region
      $region117: #{transformer_decoder_forward.2} parent=35 // pred_check
        %p1014 = pneg %p713
      $region118: #{transformer_decoder_forward.2} parent=35 // pred_check_branch
        %1016 = sbr.rel (%p1014) target = $region120
      $region119: #{transformer_decoder_forward.2} parent=35 // pred_region
        %p1017 = scmp.lt.s32.totalorder %s68, 1
        %s1018 = scalar_select %p1017, %s68, 1
        %s1019 = scalar_lea.vmem %s51, %s1018
      $region120: #{transformer_decoder_forward.2} parent=35 // pred_fallthru
        _
      // Predicated region
      $region121: #{transformer_decoder_forward.2} parent=35 // pred_check
        %p1020 = pneg %p739
      $region122: #{transformer_decoder_forward.2} parent=35 // pred_check_branch
        %1022 = sbr.rel (%p1020) target = $region124
      $region123: #{transformer_decoder_forward.2} parent=35 // pred_region
        %p1023 = scmp.lt.s32.totalorder %s68, 1
        %s1024 = scalar_select %p1023, %s68, 1
        %s1025 = smul.addr %s1024, 8
        %s1026 = smul.addr %s1025, 4
        %s1027 = scalar_lea.vmem %s53, %s1026
      $region124: #{transformer_decoder_forward.2} parent=35 // pred_fallthru
        _
      // Predicated region
      $region125: #{transformer_decoder_forward.2} parent=35 // pred_check
        %p1028 = pneg %p765
      $region126: #{transformer_decoder_forward.2} parent=35 // pred_check_branch
        %1030 = sbr.rel (%p1028) target = $region128
      $region127: #{transformer_decoder_forward.2} parent=35 // pred_region
        %p1031 = scmp.lt.s32.totalorder %s68, 1
        %s1032 = scalar_select %p1031, %s68, 1
        %s1033 = scalar_lea.vmem %s55, %s1032
      $region128: #{transformer_decoder_forward.2} parent=35 // pred_fallthru
        _
    $region36: #{transformer_decoder_forward.2} parent=5 // pred_fallthru
      _
    %p1034 = scmp.le.s32.totalorder 1, %s68
    %p1035 = scmp.lt.s32.totalorder %s68, 3
    %p1036 = pnand %p1034, %p1035
    %p1037 = pneg %p1036
    // Predicated region
    $region129: #{transformer_decoder_forward.2} parent=5 // pred_check
      _
    $region130: #{transformer_decoder_forward.2} parent=5 // pred_check_branch
      %1039 = sbr.rel (%p1036) target = $region132
    $region131: #{transformer_decoder_forward.2} parent=5 // pred_region
      %s1040 = ssub.s32 %s68, 1
      %p1041 = pneg %p89
      %p1042 = pneg %p86
      %p1043 = pneg %p110
      %p1044 = pneg %p107
      %p1045 = pneg %p131
      %p1046 = pneg %p128
      %p1047 = pneg %p152
      %p1048 = pneg %p149
      %p1049 = pneg %p173
      %p1050 = pneg %p170
      %p1051 = scmp.lt.s32.totalorder %s73, 1
      %s1052 = scalar_select %p1051, %s73, 1
      %s1053 = scalar_lea.vmem %s11, %s1052
      %p1054 = pneg %p199
      %p1055 = pneg %p196
      %p1056 = scmp.lt.s32.totalorder %s73, 1
      %s1057 = scalar_select %p1056, %s73, 1
      %s1058 = scalar_lea.vmem %s13, %s1057
      %p1059 = pneg %p225
      %p1060 = pneg %p222
      %p1061 = scmp.lt.s32.totalorder %s73, 1
      %s1062 = scalar_select %p1061, %s73, 1
      %s1063 = smul.addr %s1062, 4
      %s1064 = smul.addr %s1063, 4
      %s1065 = scalar_lea.vmem %s15, %s1064
      %p1066 = pneg %p251
      %p1067 = pneg %p248
      %p1068 = scmp.lt.s32.totalorder %s73, 1
      %s1069 = scalar_select %p1068, %s73, 1
      %s1070 = scalar_lea.vmem %s17, %s1069
      %p1071 = pneg %p277
      %p1072 = pneg %p274
      %p1073 = scmp.lt.s32.totalorder %s73, 1
      %s1074 = scalar_select %p1073, %s73, 1
      %s1075 = smul.addr %s1074, 4
      %s1076 = smul.addr %s1075, 4
      %s1077 = scalar_lea.vmem %s19, %s1076
      %p1078 = pneg %p303
      %p1079 = pneg %p300
      %p1080 = scmp.lt.s32.totalorder %s73, 1
      %s1081 = scalar_select %p1080, %s73, 1
      %s1082 = smul.addr %s1081, 4
      %s1083 = scalar_lea.vmem %s21, %s1082
      %p1084 = pneg %p329
      %p1085 = pneg %p326
      %p1086 = scmp.lt.s32.totalorder %s73, 1
      %s1087 = scalar_select %p1086, %s73, 1
      %s1088 = smul.addr %s1087, 4
      %s1089 = scalar_lea.vmem %s23, %s1088
      %p1090 = pneg %p355
      %p1091 = pneg %p352
      %p1092 = scmp.lt.s32.totalorder %s73, 1
      %s1093 = scalar_select %p1092, %s73, 1
      %s1094 = smul.addr %s1093, 4
      %s1095 = smul.addr %s1094, 4
      %s1096 = scalar_lea.vmem %s25, %s1095
      %p1097 = pneg %p381
      %p1098 = pneg %p378
      %p1099 = scmp.lt.s32.totalorder %s73, 1
      %s1100 = scalar_select %p1099, %s73, 1
      %s1101 = scalar_lea.vmem %s27, %s1100
      %p1102 = pneg %p407
      %p1103 = pneg %p404
      %p1104 = scmp.lt.s32.totalorder %s73, 1
      %s1105 = scalar_select %p1104, %s73, 1
      %s1106 = scalar_lea.vmem %s29, %s1105
      %p1107 = pneg %p433
      %p1108 = pneg %p430
      %p1109 = scmp.lt.s32.totalorder %s73, 1
      %s1110 = scalar_select %p1109, %s73, 1
      %s1111 = scalar_lea.vmem %s31, %s1110
      %p1112 = pneg %p459
      %p1113 = pneg %p456
      %p1114 = scmp.lt.s32.totalorder %s73, 1
      %s1115 = scalar_select %p1114, %s73, 1
      %s1116 = smul.addr %s1115, 4
      %s1117 = smul.addr %s1116, 4
      %s1118 = scalar_lea.vmem %s33, %s1117
      %p1119 = pneg %p485
      %p1120 = pneg %p482
      %p1121 = scmp.lt.s32.totalorder %s73, 1
      %s1122 = scalar_select %p1121, %s73, 1
      %s1123 = scalar_lea.vmem %s35, %s1122
      %p1124 = pneg %p511
      %p1125 = pneg %p508
      %p1126 = scmp.lt.s32.totalorder %s73, 1
      %s1127 = scalar_select %p1126, %s73, 1
      %s1128 = smul.addr %s1127, 4
      %s1129 = smul.addr %s1128, 4
      %s1130 = scalar_lea.vmem %s37, %s1129
      %p1131 = pneg %p537
      %p1132 = pneg %p534
      %p1133 = scmp.lt.s32.totalorder %s73, 1
      %s1134 = scalar_select %p1133, %s73, 1
      %s1135 = scalar_lea.vmem %s39, %s1134
      %p1136 = pneg %p563
      %p1137 = pneg %p560
      %p1138 = scmp.lt.s32.totalorder %s73, 1
      %s1139 = scalar_select %p1138, %s73, 1
      %s1140 = smul.addr %s1139, 4
      %s1141 = smul.addr %s1140, 4
      %s1142 = scalar_lea.vmem %s41, %s1141
      %p1143 = pneg %p589
      %p1144 = pneg %p586
      %p1145 = scmp.lt.s32.totalorder %s73, 1
      %s1146 = scalar_select %p1145, %s73, 1
      %s1147 = scalar_lea.vmem %s43, %s1146
      %p1148 = pneg %p615
      %p1149 = pneg %p612
      %p1150 = scmp.lt.s32.totalorder %s73, 1
      %s1151 = scalar_select %p1150, %s73, 1
      %s1152 = scalar_lea.vmem %s45, %s1151
      %p1153 = pneg %p641
      %p1154 = pneg %p638
      %p1155 = scmp.lt.s32.totalorder %s73, 1
      %s1156 = scalar_select %p1155, %s73, 1
      %s1157 = scalar_lea.vmem %s47, %s1156
      %p1158 = pneg %p667
      %p1159 = pneg %p664
      %p1160 = scmp.lt.s32.totalorder %s73, 1
      %s1161 = scalar_select %p1160, %s73, 1
      %s1162 = smul.addr %s1161, 4
      %s1163 = smul.addr %s1162, 4
      %s1164 = scalar_lea.vmem %s49, %s1163
      %p1165 = pneg %p693
      %p1166 = pneg %p690
      %p1167 = scmp.lt.s32.totalorder %s73, 1
      %s1168 = scalar_select %p1167, %s73, 1
      %s1169 = scalar_lea.vmem %s51, %s1168
      %p1170 = pneg %p719
      %p1171 = pneg %p716
      %p1172 = scmp.lt.s32.totalorder %s73, 1
      %s1173 = scalar_select %p1172, %s73, 1
      %s1174 = smul.addr %s1173, 8
      %s1175 = smul.addr %s1174, 4
      %s1176 = scalar_lea.vmem %s53, %s1175
      %p1177 = pneg %p745
      %p1178 = pneg %p742
      %p1179 = scmp.lt.s32.totalorder %s73, 1
      %s1180 = scalar_select %p1179, %s73, 1
      %s1181 = scalar_lea.vmem %s55, %s1180
      %p1182 = pneg %p771
      %p1183 = pneg %p768
      %p1184 = pneg %p792
      %p1185 = pneg %p789
      %p1186 = pneg %p818
      %p1187 = pneg %p815
      %p1188 = scmp.lt.s32.totalorder %s73, 1
      %s1189 = scalar_select %p1188, %s73, 1
      %s1190 = smul.addr %s1189, 8
      %s1191 = smul.addr %s1190, 8
      %s1192 = scalar_lea.vmem %s59, %s1191
      %p1193 = pneg %p844
      %p1194 = pneg %p841
      %p1195 = scmp.lt.s32.totalorder %s73, 1
      %s1196 = scalar_select %p1195, %s73, 1
      %s1197 = smul.addr %s1196, 8
      %s1198 = smul.addr %s1197, 8
      %s1199 = scalar_lea.vmem %s61, %s1198
      %p1200 = scmp.lt.s32.totalorder %s73, 1
      %s1201 = scalar_select %p1200, %s73, 1
      %s1202 = scalar_lea.vmem %s11, %s1201
      %p1203 = scmp.lt.s32.totalorder %s73, 1
      %s1204 = scalar_select %p1203, %s73, 1
      %s1205 = scalar_lea.vmem %s13, %s1204
      %p1206 = scmp.lt.s32.totalorder %s73, 1
      %s1207 = scalar_select %p1206, %s73, 1
      %s1208 = smul.addr %s1207, 4
      %s1209 = smul.addr %s1208, 4
      %s1210 = scalar_lea.vmem %s15, %s1209
      %p1211 = scmp.lt.s32.totalorder %s73, 1
      %s1212 = scalar_select %p1211, %s73, 1
      %s1213 = scalar_lea.vmem %s17, %s1212
      %p1214 = scmp.lt.s32.totalorder %s73, 1
      %s1215 = scalar_select %p1214, %s73, 1
      %s1216 = smul.addr %s1215, 4
      %s1217 = smul.addr %s1216, 4
      %s1218 = scalar_lea.vmem %s19, %s1217
      %p1219 = scmp.lt.s32.totalorder %s73, 1
      %s1220 = scalar_select %p1219, %s73, 1
      %s1221 = smul.addr %s1220, 4
      %s1222 = scalar_lea.vmem %s21, %s1221
      %p1223 = scmp.lt.s32.totalorder %s73, 1
      %s1224 = scalar_select %p1223, %s73, 1
      %s1225 = smul.addr %s1224, 4
      %s1226 = scalar_lea.vmem %s23, %s1225
      %p1227 = scmp.lt.s32.totalorder %s73, 1
      %s1228 = scalar_select %p1227, %s73, 1
      %s1229 = smul.addr %s1228, 4
      %s1230 = smul.addr %s1229, 4
      %s1231 = scalar_lea.vmem %s25, %s1230
      %p1232 = scmp.lt.s32.totalorder %s73, 1
      %s1233 = scalar_select %p1232, %s73, 1
      %s1234 = scalar_lea.vmem %s27, %s1233
      %p1235 = scmp.lt.s32.totalorder %s73, 1
      %s1236 = scalar_select %p1235, %s73, 1
      %s1237 = scalar_lea.vmem %s29, %s1236
      %p1238 = scmp.lt.s32.totalorder %s73, 1
      %s1239 = scalar_select %p1238, %s73, 1
      %s1240 = scalar_lea.vmem %s31, %s1239
      %p1241 = scmp.lt.s32.totalorder %s73, 1
      %s1242 = scalar_select %p1241, %s73, 1
      %s1243 = smul.addr %s1242, 4
      %s1244 = smul.addr %s1243, 4
      %s1245 = scalar_lea.vmem %s33, %s1244
      %p1246 = scmp.lt.s32.totalorder %s73, 1
      %s1247 = scalar_select %p1246, %s73, 1
      %s1248 = scalar_lea.vmem %s35, %s1247
      %p1249 = scmp.lt.s32.totalorder %s73, 1
      %s1250 = scalar_select %p1249, %s73, 1
      %s1251 = smul.addr %s1250, 4
      %s1252 = smul.addr %s1251, 4
      %s1253 = scalar_lea.vmem %s37, %s1252
      %p1254 = scmp.lt.s32.totalorder %s73, 1
      %s1255 = scalar_select %p1254, %s73, 1
      %s1256 = scalar_lea.vmem %s39, %s1255
      %p1257 = scmp.lt.s32.totalorder %s73, 1
      %s1258 = scalar_select %p1257, %s73, 1
      %s1259 = smul.addr %s1258, 4
      %s1260 = smul.addr %s1259, 4
      %s1261 = scalar_lea.vmem %s41, %s1260
      %p1262 = scmp.lt.s32.totalorder %s73, 1
      %s1263 = scalar_select %p1262, %s73, 1
      %s1264 = scalar_lea.vmem %s43, %s1263
      %p1265 = scmp.lt.s32.totalorder %s73, 1
      %s1266 = scalar_select %p1265, %s73, 1
      %s1267 = scalar_lea.vmem %s45, %s1266
      %p1268 = scmp.lt.s32.totalorder %s73, 1
      %s1269 = scalar_select %p1268, %s73, 1
      %s1270 = scalar_lea.vmem %s47, %s1269
      %p1271 = scmp.lt.s32.totalorder %s73, 1
      %s1272 = scalar_select %p1271, %s73, 1
      %s1273 = smul.addr %s1272, 4
      %s1274 = smul.addr %s1273, 4
      %s1275 = scalar_lea.vmem %s49, %s1274
      %p1276 = scmp.lt.s32.totalorder %s73, 1
      %s1277 = scalar_select %p1276, %s73, 1
      %s1278 = scalar_lea.vmem %s51, %s1277
      %p1279 = scmp.lt.s32.totalorder %s73, 1
      %s1280 = scalar_select %p1279, %s73, 1
      %s1281 = smul.addr %s1280, 8
      %s1282 = smul.addr %s1281, 4
      %s1283 = scalar_lea.vmem %s53, %s1282
      %p1284 = scmp.lt.s32.totalorder %s73, 1
      %s1285 = scalar_select %p1284, %s73, 1
      %s1286 = scalar_lea.vmem %s55, %s1285
      %p1287 = scmp.lt.s32.totalorder %s73, 1
      %s1288 = scalar_select %p1287, %s73, 1
      %s1289 = smul.addr %s1288, 8
      %s1290 = smul.addr %s1289, 8
      %s1291 = scalar_lea.vmem %s59, %s1290
      %p1292 = scmp.lt.s32.totalorder %s73, 1
      %s1293 = scalar_select %p1292, %s73, 1
      %s1294 = smul.addr %s1293, 8
      %s1295 = smul.addr %s1294, 8
      %s1296 = scalar_lea.vmem %s61, %s1295
      %p1298 = scmp.eq.s32.totalorder %s73, 0
      // Predicated region
      $region133: #{transformer_decoder_forward.2} parent=131 // pred_check
        %p1299 = pneg %p1298
      $region134: #{transformer_decoder_forward.2} parent=131 // pred_check_branch
        %1301 = sbr.rel (%p1299) target = $region136
      $region135: #{transformer_decoder_forward.2} parent=131 // pred_region
        %v1302 = vld [vmem:[%s1] sm:$0xff]
        %v1303 = vld [vmem:[%s1 + $0x8] sm:$0xff]
        %vm1304 = vcmask 261120
        %1305 = vst.msk [vmem:[%s57] sm:$0xff] %vm1304, %v1302
        %1306 = vst.msk [vmem:[%s57 + $0x8] sm:$0xff] %vm1304, %v1303
      $region136: #{transformer_decoder_forward.2} parent=131 // pred_fallthru
        _
      %v1307 = vld [vmem:[%s57] sm:$0xff]
      %v1308 = vld [vmem:[%s57 + $0x8] sm:$0xff]
      %v1309 = vld [vmem:[%s3] sm:$0xff]
      %v1310 = vld [vmem:[%s3 + $0x8] sm:$0xff]
      %v1311 = vld [vmem:[%s3 + $0x10] sm:$0xff]
      %v1312 = vld [vmem:[%s3 + $0x18] sm:$0xff]
      %v1313 = vld [vmem:[%s7] sm:$0xff]
      %v1314 = vld [vmem:[%s7 + $0x8] sm:$0xff]
      %v1315 = vld [vmem:[%s9] sm:$0x1]
      %v1316 = vld [vmem:[%s9 + $0x1] sm:$0x1]
      %v1317 = vld [vmem:[%s1202] sm:$0x1]
      %v1318 = vld [vmem:[%s1205] sm:$0x1]
      %vm1319 = vcmask 261120
      %v1320 = vsel %vm1319, %v1307, 0.0
      %1321 = vadd.xlane.f32.xlu0 %v1320
      %v1322 = vpop.xlane.xlu0 %1321
      %v1323 = vsel %vm1319, %v1308, 0.0
      %1324 = vadd.xlane.f32.xlu0 %v1323
      %v1325 = vpop.xlane.xlu0 %1324
      %v1326 = vrcp.pop 32.0
      %v1327 = vmul.f32 32.0, %v1326
      %v1328 = vsub.f32 1.0, %v1327
      %v1329 = vmul.f32 %v1326, %v1328
      %v1330 = vadd.f32 %v1326, %v1329
      %vm1331 = vweird.f32 %v1326
      %v1332 = vsel %vm1331, %v1326, %v1330
      %v1333 = vmul.f32 %v1322, %v1332
      %v1334 = vmul.f32 %v1325, %v1332
      %v1335 = vsub.f32 %v1307, %v1333
      %v1336 = vsub.f32 %v1308, %v1334
      %v1337 = vmul.f32 %v1335, %v1335
      %v1338 = vmul.f32 %v1336, %v1336
      %v1339 = vsel %vm1319, %v1337, 0.0
      %1340 = vadd.xlane.f32.xlu0 %v1339
      %v1341 = vpop.xlane.xlu0 %1340
      %v1342 = vsel %vm1319, %v1338, 0.0
      %1343 = vadd.xlane.f32.xlu0 %v1342
      %v1344 = vpop.xlane.xlu0 %1343
      %v1345 = vmul.f32 %v1341, %v1332
      %v1346 = vmul.f32 %v1344, %v1332
      %v1347 = vadd.f32 %v1345, 1e-05
      %v1348 = vadd.f32 %v1346, 1e-05
      %v1349 = vrsqrt.pop %v1347
      %v1350 = vmul.f32 %v1349, %v1347
      %v1351 = vmul.f32 %v1350, %v1349
      %v1352 = vmul.f32 0.5, %v1351
      %v1353 = vsub.f32 1.5, %v1352
      %v1354 = vmul.f32 %v1349, %v1353
      %vm1355 = vweird.f32 %v1347
      %vm1356 = vweird.f32 %v1349
      %vm1357 = vmor %vm1355, %vm1356
      %v1358 = vsel %vm1357, %v1349, %v1354
      %v1359 = vrsqrt.pop %v1348
      %v1360 = vmul.f32 %v1359, %v1348
      %v1361 = vmul.f32 %v1360, %v1359
      %v1362 = vmul.f32 0.5, %v1361
      %v1363 = vsub.f32 1.5, %v1362
      %v1364 = vmul.f32 %v1359, %v1363
      %vm1365 = vweird.f32 %v1348
      %vm1366 = vweird.f32 %v1359
      %vm1367 = vmor %vm1365, %vm1366
      %v1368 = vsel %vm1367, %v1359, %v1364
      %v1369 = vmul.f32 %v1335, %v1358
      %v1370 = vmul.f32 %v1336, %v1368
      %v1372 = vperm.slane %v1317, 0
      %v1374 = vmul.f32 %v1369, %v1372
      %v1375 = vmul.f32 %v1370, %v1372
      %v1377 = vperm.slane %v1318, 0
      %v1379 = vadd.f32 %v1374, %v1377
      %v1380 = vadd.f32 %v1375, %v1377
      %v1381 = vld [vmem:[%s1210] sm:$0xf]
      %v1382 = vld [vmem:[%s1210 + $0x4] sm:$0xf]
      %v1383 = vld [vmem:[%s1210 + $0x8] sm:$0xf]
      %v1384 = vld [vmem:[%s1210 + $0xc] sm:$0xf]
      %v1385 = vpack.c.bf16 %v1380, %v1379
      %v1386 = vld [vmem:[%s1213] sm:$0x1]
      %v1388 = vperm.slane %v1386, 0
      %v1394 = vunpack.c.l.b16 %v1381
      %v1395 = vunpack.c.l.b16 %v1382
      %v1396 = vunpack.c.l.b16 %v1383
      %v1397 = vunpack.c.l.b16 %v1384
      %v1398 = vpack.c.b16 %v1395, %v1394
      %v1399 = vpack.c.b16 %v1397, %v1396
      %v1403 = vsel %vm1319, %v1385, 0
      %1405 = vmatpush.bf16.msra.mxu0 0
      %1406 = vmatpush.bf16.msra.mxu0 0
      %1407 = vmatpush.bf16.msra.mxu0 0
      %1408 = vmatpush.bf16.msra.mxu0 0
      %1409 = vmatpush.bf16.msra.mxu0 0
      %1410 = vmatpush.bf16.msra.mxu0 0
      %1411 = vmatpush.bf16.msra.mxu0 %v1399
      %1412 = vmatpush.bf16.msra.mxu0 %v1398
      %1413 = vmatmul.bf16.gmra.mxu0 %v1403
      %v1414 = vpop.f32.mrf.mxu0
      %v1415 = vadd.f32 %v1388, %v1414
      %v1416 = vpop.f32.mrf.mxu0
      %v1417 = vadd.f32 %v1388, %v1416
      %1418 = vdwg.mxu0
      %v1419 = vld [vmem:[%s5] sm:$0xff]
      %v1420 = vld [vmem:[%s5 + $0x8] sm:$0x7f]
      %v1421 = vld [vmem:[%s1218] sm:$0xf]
      %v1422 = vld [vmem:[%s1218 + $0x4] sm:$0xf]
      %v1423 = vld [vmem:[%s1218 + $0x8] sm:$0xf]
      %v1424 = vld [vmem:[%s1218 + $0xc] sm:$0xf]
      %v1425 = vpack.c.bf16 %v1420, %v1419
      %v1430 = vunpack.c.l.b16 %v1421
      %v1431 = vunpack.c.l.b16 %v1422
      %v1432 = vunpack.c.l.b16 %v1423
      %v1433 = vunpack.c.l.b16 %v1424
      %v1434 = vpack.c.b16 %v1431, %v1430
      %v1435 = vpack.c.b16 %v1433, %v1432
      %v1439 = vsel %vm1319, %v1425, 0
      %1441 = vmatpush.bf16.msra.mxu0 0
      %1442 = vmatpush.bf16.msra.mxu0 0
      %1443 = vmatpush.bf16.msra.mxu0 0
      %1444 = vmatpush.bf16.msra.mxu0 0
      %1445 = vmatpush.bf16.msra.mxu0 0
      %1446 = vmatpush.bf16.msra.mxu0 0
      %1447 = vmatpush.bf16.msra.mxu0 %v1435
      %1448 = vmatpush.bf16.msra.mxu0 %v1434
      %1449 = vmatmul.bf16.gmra.mxu0 %v1439
      %v1450 = vpop.f32.mrf.mxu0
      %v1451 = vadd.f32 0.0, %v1450
      %v1452 = vpop.f32.mrf.mxu0
      %v1453 = vadd.f32 0.0, %v1452
      %1454 = vdwg.mxu0
      %v1455 = vld [vmem:[%s1222] sm:$0xf]
      %v1456 = vmul.f32 %v1455, 0.35355338
      %v1457 = vld [vmem:[%s1226] sm:$0xf]
      %v1458 = vmul.f32 %v1457, 0.35355338
      %v1459 = vmul.f32 %v1415, 0.35355338
      %v1460 = vmul.f32 %v1417, 0.35355338
      %v1461 = vperm.slane %v1456, 0
      %v1462 = vadd.f32 %v1459, %v1461
      %v1463 = vadd.f32 %v1460, %v1461
      %v1464 = vpack.c.bf16 %v1462, %v1462
      %v1465 = vpack.c.bf16 %v1463, %v1463
      %v1466 = vpack.c.bf16 %v1415, %v1415
      %v1467 = vpack.c.bf16 %v1417, %v1417
      %v1468 = vperm.slane %v1458, 0
      %v1469 = vadd.f32 %v1459, %v1468
      %v1470 = vadd.f32 %v1460, %v1468
      %v1471 = vpack.c.bf16 %v1470, %v1469
      %v1472 = vpack.c.bf16 %v1453, %v1451
      %vm1473 = vcmask 64512
      %v1475 = vsel %vm1473, %v1471, 0
      %v1478 = vsel %vm1473, %v1472, 0
      %1480 = vmatpush.bf16.xpose.msra.mxu0 0
      %1481 = vmatpush.bf16.xpose.msra.mxu0 0
      %1482 = vmatpush.bf16.xpose.msra.mxu0 0
      %1483 = vmatpush.bf16.xpose.msra.mxu0 0
      %1484 = vmatpush.bf16.xpose.msra.mxu0 0
      %1485 = vmatpush.bf16.xpose.msra.mxu0 0
      %1486 = vmatpush.bf16.xpose.msra.mxu0 0
      %1487 = vmatpush.bf16.xpose.msra.mxu0 %v1478
      %1488 = vmatmul.bf16.gmra.mxu0 %v1475
      %v1489 = vpop.f32.mrf.mxu0
      %v1490 = vadd.f32 0.0, %v1489
      %v1491 = vpop.f32.mrf.mxu0
      %v1492 = vadd.f32 0.0, %v1491
      %1493 = vdwg.mxu0
      %1496 = vrot.lane.b32.xlu0 %v1490, 1
      %v1497 = vpop.permute.xlu0 %1496
      %1498 = vrot.lane.b32.xlu0 %v1492, 1
      %v1499 = vpop.permute.xlu0 %1498
      %1502 = vrot.lane.b32.xlu0 %v1490, 2
      %v1503 = vpop.permute.xlu0 %1502
      %1504 = vrot.lane.b32.xlu0 %v1492, 2
      %v1505 = vpop.permute.xlu0 %1504
      %1508 = vrot.lane.b32.xlu0 %v1490, 3
      %v1509 = vpop.permute.xlu0 %1508
      %1510 = vrot.lane.b32.xlu0 %v1492, 3
      %v1511 = vpop.permute.xlu0 %1510
      %1514 = vrot.lane.b32.xlu0 %v1490, 4
      %v1515 = vpop.permute.xlu0 %1514
      %1516 = vrot.lane.b32.xlu0 %v1492, 4
      %v1517 = vpop.permute.xlu0 %1516
      %1520 = vrot.lane.b32.xlu0 %v1490, 5
      %v1521 = vpop.permute.xlu0 %1520
      %1522 = vrot.lane.b32.xlu0 %v1492, 5
      %v1523 = vpop.permute.xlu0 %1522
      %1526 = vrot.lane.b32.xlu0 %v1490, 6
      %v1527 = vpop.permute.xlu0 %1526
      %1528 = vrot.lane.b32.xlu0 %v1492, 6
      %v1529 = vpop.permute.xlu0 %1528
      %1532 = vrot.lane.b32.xlu0 %v1490, 7
      %v1533 = vpop.permute.xlu0 %1532
      %1534 = vrot.lane.b32.xlu0 %v1492, 7
      %v1535 = vpop.permute.xlu0 %1534
      %vm1538 = vcmask 1040384
      %v1539 = vsel %vm1538, %v1490, %v1497
      %v1540 = vsel %vm1538, %v1492, %v1499
      %vm1541 = vcmask 1041408
      %v1542 = vsel %vm1541, %v1539, %v1503
      %v1543 = vsel %vm1541, %v1540, %v1505
      %vm1544 = vcmask 1042432
      %v1545 = vsel %vm1544, %v1542, %v1509
      %v1546 = vsel %vm1544, %v1543, %v1511
      %vm1547 = vcmask 1043456
      %v1548 = vsel %vm1547, %v1545, %v1515
      %v1549 = vsel %vm1547, %v1546, %v1517
      %vm1550 = vcmask 1044480
      %v1551 = vsel %vm1550, %v1548, %v1521
      %v1552 = vsel %vm1550, %v1549, %v1523
      %vm1553 = vcmask 1045504
      %v1554 = vsel %vm1553, %v1551, %v1527
      %v1555 = vsel %vm1553, %v1552, %v1529
      %vm1556 = vcmask 1046528
      %v1557 = vsel %vm1556, %v1554, %v1533
      %v1558 = vsel %vm1556, %v1555, %v1535
      %v1560 = vunpack.c.l.b16 %v1466
      %v1561 = vpack.c.b16 %v1560, %v1560
      %1562 = vrot.lane.b32.xlu0 %v1561, 96
      %v1563 = vpop.permute.xlu0 %1562
      %1565 = vrot.lane.b32.xlu0 %v1557, 121
      %v1566 = vpop.permute.xlu0 %1565
      %v1569 = vsel %vm1473, %v1464, 0
      %v1572 = vsel %vm1473, %v1563, 0
      %1574 = vmatpush.bf16.xpose.msra.mxu0 0
      %1575 = vmatpush.bf16.xpose.msra.mxu0 0
      %1576 = vmatpush.bf16.xpose.msra.mxu0 0
      %1577 = vmatpush.bf16.xpose.msra.mxu0 0
      %1578 = vmatpush.bf16.xpose.msra.mxu0 0
      %1579 = vmatpush.bf16.xpose.msra.mxu0 0
      %1580 = vmatpush.bf16.xpose.msra.mxu0 0
      %1581 = vmatpush.bf16.xpose.msra.mxu0 %v1572
      %1582 = vmatmul.bf16.gmra.mxu0 %v1569
      %v1583 = vpop.f32.mrf.mxu0
      %v1584 = vadd.f32 %v1566, %v1583
      %v1585 = vpop.f32.mrf.mxu0
      %1586 = vdwg.mxu0
      %v1588 = vunpack.c.l.b16 %v1467
      %v1589 = vpack.c.b16 %v1588, %v1588
      %1590 = vrot.lane.b32.xlu0 %v1589, 96
      %v1591 = vpop.permute.xlu0 %1590
      %1593 = vrot.lane.b32.xlu0 %v1558, 121
      %v1594 = vpop.permute.xlu0 %1593
      %v1597 = vsel %vm1473, %v1465, 0
      %v1600 = vsel %vm1473, %v1591, 0
      %1602 = vmatpush.bf16.xpose.msra.mxu0 0
      %1603 = vmatpush.bf16.xpose.msra.mxu0 0
      %1604 = vmatpush.bf16.xpose.msra.mxu0 0
      %1605 = vmatpush.bf16.xpose.msra.mxu0 0
      %1606 = vmatpush.bf16.xpose.msra.mxu0 0
      %1607 = vmatpush.bf16.xpose.msra.mxu0 0
      %1608 = vmatpush.bf16.xpose.msra.mxu0 0
      %1609 = vmatpush.bf16.xpose.msra.mxu0 %v1600
      %1610 = vmatmul.bf16.gmra.mxu0 %v1597
      %v1611 = vpop.f32.mrf.mxu0
      %v1612 = vadd.f32 %v1594, %v1611
      %v1613 = vpop.f32.mrf.mxu0
      %1614 = vdwg.mxu0
      %v1615 = vadd.f32 %v1584, %v1313
      %v1616 = vadd.f32 %v1612, %v1314
      %v1617 = vsel %vm1473, %v1615, -inf
      %1618 = vmax.xlane.f32.xlu0 %v1617
      %v1619 = vpop.xlane.xlu0 %1618
      %v1620 = vsel %vm1473, %v1616, -inf
      %1621 = vmax.xlane.f32.xlu0 %v1620
      %v1622 = vpop.xlane.xlu0 %1621
      %v1623 = vsub.f32 %v1615, %v1619
      %v1624 = vsub.f32 %v1616, %v1622
      %v1625 = vmul.f32 %v1623, 1.442695
      %v1626 = vpow.pop %v1625
      %v1627 = vmul.f32 %v1624, 1.442695
      %v1628 = vpow.pop %v1627
      %v1629 = vsel %vm1473, %v1626, 0.0
      %1630 = vadd.xlane.f32.xlu0 %v1629
      %v1631 = vpop.xlane.xlu0 %1630
      %v1632 = vsel %vm1473, %v1628, 0.0
      %1633 = vadd.xlane.f32.xlu0 %v1632
      %v1634 = vpop.xlane.xlu0 %1633
      %v1635 = vrcp.pop %v1631
      %v1636 = vmul.f32 %v1631, %v1635
      %v1637 = vsub.f32 1.0, %v1636
      %v1638 = vmul.f32 %v1635, %v1637
      %v1639 = vadd.f32 %v1635, %v1638
      %vm1640 = vweird.f32 %v1631
      %vm1641 = vweird.f32 %v1635
      %vm1642 = vmor %vm1640, %vm1641
      %v1643 = vsel %vm1642, %v1635, %v1639
      %v1644 = vand.u32 2147483647, %v1631
      %vm1645 = vcmp.eq.f32.partialorder %v1644, 8.507059e+37
      %v1646 = vand.u32 %v1631, 2147483648
      %v1647 = vor.u32 1.1754944e-38, %v1646
      %v1648 = vsel %vm1645, %v1647, %v1643
      %v1649 = vmul.f32 %v1626, %v1648
      %v1650 = vrcp.pop %v1634
      %v1651 = vmul.f32 %v1634, %v1650
      %v1652 = vsub.f32 1.0, %v1651
      %v1653 = vmul.f32 %v1650, %v1652
      %v1654 = vadd.f32 %v1650, %v1653
      %vm1655 = vweird.f32 %v1634
      %vm1656 = vweird.f32 %v1650
      %vm1657 = vmor %vm1655, %vm1656
      %v1658 = vsel %vm1657, %v1650, %v1654
      %v1659 = vand.u32 2147483647, %v1634
      %vm1660 = vcmp.eq.f32.partialorder %v1659, 8.507059e+37
      %v1661 = vand.u32 %v1634, 2147483648
      %v1662 = vor.u32 1.1754944e-38, %v1661
      %v1663 = vsel %vm1660, %v1662, %v1658
      %v1664 = vmul.f32 %v1628, %v1663
      %1665 = vst.msk [vmem:[%s1291] sm:$0xff] %vm1473, %v1649
      %1666 = vst.msk [vmem:[%s1291 + $0x8] sm:$0xff] %vm1473, %v1664
      %v1667 = vpack.c.bf16 %v1649, %v1649
      %v1668 = vpack.c.bf16 %v1664, %v1664
      %1669 = vrot.lane.b32.xlu0 %v1561, 64
      %v1670 = vpop.permute.xlu0 %1669
      %v1672 = vsel %vm1473, %v1667, 0
      %v1675 = vsel %vm1547, %v1670, 0
      %1677 = vmatpush.bf16.msra.mxu0 0
      %1678 = vmatpush.bf16.msra.mxu0 0
      %1679 = vmatpush.bf16.msra.mxu0 0
      %1680 = vmatpush.bf16.msra.mxu0 0
      %1681 = vmatpush.bf16.msra.mxu0 0
      %1682 = vmatpush.bf16.msra.mxu0 0
      %1683 = vmatpush.bf16.msra.mxu0 0
      %1684 = vmatpush.bf16.msra.mxu0 %v1675
      %1685 = vmatmul.bf16.gmra.mxu0 %v1672
      %v1686 = vpop.f32.mrf.mxu0
      %v1687 = vadd.f32 0.0, %v1686
      %v1688 = vpop.f32.mrf.mxu0
      %1689 = vdwg.mxu0
      %1690 = vrot.lane.b32.xlu0 %v1589, 64
      %v1691 = vpop.permute.xlu0 %1690
      %v1693 = vsel %vm1473, %v1668, 0
      %v1696 = vsel %vm1547, %v1691, 0
      %1698 = vmatpush.bf16.msra.mxu0 0
      %1699 = vmatpush.bf16.msra.mxu0 0
      %1700 = vmatpush.bf16.msra.mxu0 0
      %1701 = vmatpush.bf16.msra.mxu0 0
      %1702 = vmatpush.bf16.msra.mxu0 0
      %1703 = vmatpush.bf16.msra.mxu0 0
      %1704 = vmatpush.bf16.msra.mxu0 0
      %1705 = vmatpush.bf16.msra.mxu0 %v1696
      %1706 = vmatmul.bf16.gmra.mxu0 %v1693
      %v1707 = vpop.f32.mrf.mxu0
      %v1708 = vadd.f32 0.0, %v1707
      %v1709 = vpop.f32.mrf.mxu0
      %1710 = vdwg.mxu0
      %1711 = vst.msk [vmem:[#allocation2] sm:$0xff] %vm1473, %v1687
      %1712 = vst.msk [vmem:[#allocation2 + $0x8] sm:$0xff] %vm1473, %v1708
      %v1713 = vperm.slane %v1456, 1
      %1715 = vrot.lane.b32.xlu0 %v1713, 8
      %v1716 = vpop.permute.xlu0 %1715
      %v1718 = vadd.f32 %v1459, %v1716
      %v1719 = vadd.f32 %v1460, %v1716
      %v1720 = vpack.c.bf16 %v1718, %v1718
      %v1721 = vpack.c.bf16 %v1719, %v1719
      %v1722 = vperm.slane %v1458, 1
      %1724 = vrot.lane.b32.xlu0 %v1722, 8
      %v1725 = vpop.permute.xlu0 %1724
      %v1727 = vadd.f32 %v1459, %v1725
      %v1728 = vadd.f32 %v1460, %v1725
      %v1729 = vpack.c.bf16 %v1728, %v1727
      %1731 = vrot.lane.b32.xlu0 %v1729, 120
      %v1732 = vpop.permute.xlu0 %1731
      %1734 = vrot.lane.b32.xlu0 %v1472, 120
      %v1735 = vpop.permute.xlu0 %1734
      %v1737 = vsel %vm1473, %v1732, 0
      %v1740 = vsel %vm1473, %v1735, 0
      %1742 = vmatpush.bf16.xpose.msra.mxu0 0
      %1743 = vmatpush.bf16.xpose.msra.mxu0 0
      %1744 = vmatpush.bf16.xpose.msra.mxu0 0
      %1745 = vmatpush.bf16.xpose.msra.mxu0 0
      %1746 = vmatpush.bf16.xpose.msra.mxu0 0
      %1747 = vmatpush.bf16.xpose.msra.mxu0 0
      %1748 = vmatpush.bf16.xpose.msra.mxu0 0
      %1749 = vmatpush.bf16.xpose.msra.mxu0 %v1740
      %1750 = vmatmul.bf16.gmra.mxu0 %v1737
      %v1751 = vpop.f32.mrf.mxu0
      %v1752 = vadd.f32 0.0, %v1751
      %v1753 = vpop.f32.mrf.mxu0
      %v1754 = vadd.f32 0.0, %v1753
      %1755 = vdwg.mxu0
      %1758 = vrot.lane.b32.xlu0 %v1752, 1
      %v1759 = vpop.permute.xlu0 %1758
      %1760 = vrot.lane.b32.xlu0 %v1754, 1
      %v1761 = vpop.permute.xlu0 %1760
      %1764 = vrot.lane.b32.xlu0 %v1752, 2
      %v1765 = vpop.permute.xlu0 %1764
      %1766 = vrot.lane.b32.xlu0 %v1754, 2
      %v1767 = vpop.permute.xlu0 %1766
      %1770 = vrot.lane.b32.xlu0 %v1752, 3
      %v1771 = vpop.permute.xlu0 %1770
      %1772 = vrot.lane.b32.xlu0 %v1754, 3
      %v1773 = vpop.permute.xlu0 %1772
      %1776 = vrot.lane.b32.xlu0 %v1752, 4
      %v1777 = vpop.permute.xlu0 %1776
      %1778 = vrot.lane.b32.xlu0 %v1754, 4
      %v1779 = vpop.permute.xlu0 %1778
      %1782 = vrot.lane.b32.xlu0 %v1752, 5
      %v1783 = vpop.permute.xlu0 %1782
      %1784 = vrot.lane.b32.xlu0 %v1754, 5
      %v1785 = vpop.permute.xlu0 %1784
      %1788 = vrot.lane.b32.xlu0 %v1752, 6
      %v1789 = vpop.permute.xlu0 %1788
      %1790 = vrot.lane.b32.xlu0 %v1754, 6
      %v1791 = vpop.permute.xlu0 %1790
      %1794 = vrot.lane.b32.xlu0 %v1752, 7
      %v1795 = vpop.permute.xlu0 %1794
      %1796 = vrot.lane.b32.xlu0 %v1754, 7
      %v1797 = vpop.permute.xlu0 %1796
      %v1800 = vsel %vm1538, %v1752, %v1759
      %v1801 = vsel %vm1538, %v1754, %v1761
      %v1802 = vsel %vm1541, %v1800, %v1765
      %v1803 = vsel %vm1541, %v1801, %v1767
      %v1804 = vsel %vm1544, %v1802, %v1771
      %v1805 = vsel %vm1544, %v1803, %v1773
      %v1806 = vsel %vm1547, %v1804, %v1777
      %v1807 = vsel %vm1547, %v1805, %v1779
      %v1808 = vsel %vm1550, %v1806, %v1783
      %v1809 = vsel %vm1550, %v1807, %v1785
      %v1810 = vsel %vm1553, %v1808, %v1789
      %v1811 = vsel %vm1553, %v1809, %v1791
      %v1812 = vsel %vm1556, %v1810, %v1795
      %v1813 = vsel %vm1556, %v1811, %v1797
      %v1815 = vunpack.c.l.b16 %v1720
      %v1816 = vpack.c.b16 %v1815, %v1815
      %1817 = vrot.lane.b32.xlu0 %v1816, 120
      %v1818 = vpop.permute.xlu0 %1817
      %1819 = vrot.lane.b32.xlu0 %v1561, 88
      %v1820 = vpop.permute.xlu0 %1819
      %1822 = vrot.lane.b32.xlu0 %v1812, 121
      %v1823 = vpop.permute.xlu0 %1822
      %v1826 = vsel %vm1473, %v1818, 0
      %v1829 = vsel %vm1473, %v1820, 0
      %1831 = vmatpush.bf16.xpose.msra.mxu0 0
      %1832 = vmatpush.bf16.xpose.msra.mxu0 0
      %1833 = vmatpush.bf16.xpose.msra.mxu0 0
      %1834 = vmatpush.bf16.xpose.msra.mxu0 0
      %1835 = vmatpush.bf16.xpose.msra.mxu0 0
      %1836 = vmatpush.bf16.xpose.msra.mxu0 0
      %1837 = vmatpush.bf16.xpose.msra.mxu0 0
      %1838 = vmatpush.bf16.xpose.msra.mxu0 %v1829
      %1839 = vmatmul.bf16.gmra.mxu0 %v1826
      %v1840 = vpop.f32.mrf.mxu0
      %v1841 = vadd.f32 %v1823, %v1840
      %v1842 = vpop.f32.mrf.mxu0
      %1843 = vdwg.mxu0
      %v1845 = vunpack.c.l.b16 %v1721
      %v1846 = vpack.c.b16 %v1845, %v1845
      %1847 = vrot.lane.b32.xlu0 %v1846, 120
      %v1848 = vpop.permute.xlu0 %1847
      %1849 = vrot.lane.b32.xlu0 %v1589, 88
      %v1850 = vpop.permute.xlu0 %1849
      %1852 = vrot.lane.b32.xlu0 %v1813, 121
      %v1853 = vpop.permute.xlu0 %1852
      %v1856 = vsel %vm1473, %v1848, 0
      %v1859 = vsel %vm1473, %v1850, 0
      %1861 = vmatpush.bf16.xpose.msra.mxu0 0
      %1862 = vmatpush.bf16.xpose.msra.mxu0 0
      %1863 = vmatpush.bf16.xpose.msra.mxu0 0
      %1864 = vmatpush.bf16.xpose.msra.mxu0 0
      %1865 = vmatpush.bf16.xpose.msra.mxu0 0
      %1866 = vmatpush.bf16.xpose.msra.mxu0 0
      %1867 = vmatpush.bf16.xpose.msra.mxu0 0
      %1868 = vmatpush.bf16.xpose.msra.mxu0 %v1859
      %1869 = vmatmul.bf16.gmra.mxu0 %v1856
      %v1870 = vpop.f32.mrf.mxu0
      %v1871 = vadd.f32 %v1853, %v1870
      %v1872 = vpop.f32.mrf.mxu0
      %1873 = vdwg.mxu0
      %v1874 = vadd.f32 %v1841, %v1313
      %v1875 = vadd.f32 %v1871, %v1314
      %v1876 = vsel %vm1473, %v1874, -inf
      %1877 = vmax.xlane.f32.xlu0 %v1876
      %v1878 = vpop.xlane.xlu0 %1877
      %v1879 = vsel %vm1473, %v1875, -inf
      %1880 = vmax.xlane.f32.xlu0 %v1879
      %v1881 = vpop.xlane.xlu0 %1880
      %v1882 = vsub.f32 %v1874, %v1878
      %v1883 = vsub.f32 %v1875, %v1881
      %v1884 = vmul.f32 %v1882, 1.442695
      %v1885 = vpow.pop %v1884
      %v1886 = vmul.f32 %v1883, 1.442695
      %v1887 = vpow.pop %v1886
      %v1888 = vsel %vm1473, %v1885, 0.0
      %1889 = vadd.xlane.f32.xlu0 %v1888
      %v1890 = vpop.xlane.xlu0 %1889
      %v1891 = vsel %vm1473, %v1887, 0.0
      %1892 = vadd.xlane.f32.xlu0 %v1891
      %v1893 = vpop.xlane.xlu0 %1892
      %v1894 = vrcp.pop %v1890
      %v1895 = vmul.f32 %v1890, %v1894
      %v1896 = vsub.f32 1.0, %v1895
      %v1897 = vmul.f32 %v1894, %v1896
      %v1898 = vadd.f32 %v1894, %v1897
      %vm1899 = vweird.f32 %v1890
      %vm1900 = vweird.f32 %v1894
      %vm1901 = vmor %vm1899, %vm1900
      %v1902 = vsel %vm1901, %v1894, %v1898
      %v1903 = vand.u32 2147483647, %v1890
      %vm1904 = vcmp.eq.f32.partialorder %v1903, 8.507059e+37
      %v1905 = vand.u32 %v1890, 2147483648
      %v1906 = vor.u32 1.1754944e-38, %v1905
      %v1907 = vsel %vm1904, %v1906, %v1902
      %v1908 = vmul.f32 %v1885, %v1907
      %v1909 = vrcp.pop %v1893
      %v1910 = vmul.f32 %v1893, %v1909
      %v1911 = vsub.f32 1.0, %v1910
      %v1912 = vmul.f32 %v1909, %v1911
      %v1913 = vadd.f32 %v1909, %v1912
      %vm1914 = vweird.f32 %v1893
      %vm1915 = vweird.f32 %v1909
      %vm1916 = vmor %vm1914, %vm1915
      %v1917 = vsel %vm1916, %v1909, %v1913
      %v1918 = vand.u32 2147483647, %v1893
      %vm1919 = vcmp.eq.f32.partialorder %v1918, 8.507059e+37
      %v1920 = vand.u32 %v1893, 2147483648
      %v1921 = vor.u32 1.1754944e-38, %v1920
      %v1922 = vsel %vm1919, %v1921, %v1917
      %v1923 = vmul.f32 %v1887, %v1922
      %s1924 = scalar_lea.vmem %s1291, 16
      %1925 = vst.msk [vmem:[%s1924] sm:$0xff] %vm1473, %v1908
      %1926 = vst.msk [vmem:[%s1924 + $0x8] sm:$0xff] %vm1473, %v1923
      %v1927 = vpack.c.bf16 %v1908, %v1908
      %v1928 = vpack.c.bf16 %v1923, %v1923
      %1929 = vrot.lane.b32.xlu0 %v1561, 56
      %v1930 = vpop.permute.xlu0 %1929
      %v1932 = vsel %vm1473, %v1927, 0
      %v1935 = vsel %vm1547, %v1930, 0
      %1937 = vmatpush.bf16.msra.mxu0 0
      %1938 = vmatpush.bf16.msra.mxu0 0
      %1939 = vmatpush.bf16.msra.mxu0 0
      %1940 = vmatpush.bf16.msra.mxu0 0
      %1941 = vmatpush.bf16.msra.mxu0 0
      %1942 = vmatpush.bf16.msra.mxu0 0
      %1943 = vmatpush.bf16.msra.mxu0 0
      %1944 = vmatpush.bf16.msra.mxu0 %v1935
      %1945 = vmatmul.bf16.gmra.mxu0 %v1932
      %v1946 = vpop.f32.mrf.mxu0
      %v1947 = vadd.f32 0.0, %v1946
      %v1948 = vpop.f32.mrf.mxu0
      %1949 = vdwg.mxu0
      %1950 = vrot.lane.b32.xlu0 %v1589, 56
      %v1951 = vpop.permute.xlu0 %1950
      %v1953 = vsel %vm1473, %v1928, 0
      %v1956 = vsel %vm1547, %v1951, 0
      %1958 = vmatpush.bf16.msra.mxu0 0
      %1959 = vmatpush.bf16.msra.mxu0 0
      %1960 = vmatpush.bf16.msra.mxu0 0
      %1961 = vmatpush.bf16.msra.mxu0 0
      %1962 = vmatpush.bf16.msra.mxu0 0
      %1963 = vmatpush.bf16.msra.mxu0 0
      %1964 = vmatpush.bf16.msra.mxu0 0
      %1965 = vmatpush.bf16.msra.mxu0 %v1956
      %1966 = vmatmul.bf16.gmra.mxu0 %v1953
      %v1967 = vpop.f32.mrf.mxu0
      %v1968 = vadd.f32 0.0, %v1967
      %v1969 = vpop.f32.mrf.mxu0
      %1970 = vdwg.mxu0
      %1973 = vrot.lane.b32.xlu0 %v1947, 8
      %v1974 = vpop.permute.xlu0 %1973
      %1975 = vrot.lane.b32.xlu0 %v1968, 8
      %v1976 = vpop.permute.xlu0 %1975
      %vm1979 = vcmask 130112
      %1980 = vst.msk [vmem:[#allocation2] sm:$0xff] %vm1979, %v1974
      %1981 = vst.msk [vmem:[#allocation2 + $0x8] sm:$0xff] %vm1979, %v1976
      %v1982 = vperm.slane %v1456, 2
      %1984 = vrot.lane.b32.xlu0 %v1982, 16
      %v1985 = vpop.permute.xlu0 %1984
      %v1987 = vadd.f32 %v1459, %v1985
      %v1988 = vadd.f32 %v1460, %v1985
      %v1989 = vpack.c.bf16 %v1987, %v1987
      %v1990 = vpack.c.bf16 %v1988, %v1988
      %v1991 = vperm.slane %v1458, 2
      %1993 = vrot.lane.b32.xlu0 %v1991, 16
      %v1994 = vpop.permute.xlu0 %1993
      %v1996 = vadd.f32 %v1459, %v1994
      %v1997 = vadd.f32 %v1460, %v1994
      %v1998 = vpack.c.bf16 %v1997, %v1996
      %2000 = vrot.lane.b32.xlu0 %v1998, 112
      %v2001 = vpop.permute.xlu0 %2000
      %2002 = vrot.lane.b32.xlu0 %v1472, 112
      %v2003 = vpop.permute.xlu0 %2002
      %v2005 = vsel %vm1473, %v2001, 0
      %v2008 = vsel %vm1473, %v2003, 0
      %2010 = vmatpush.bf16.xpose.msra.mxu0 0
      %2011 = vmatpush.bf16.xpose.msra.mxu0 0
      %2012 = vmatpush.bf16.xpose.msra.mxu0 0
      %2013 = vmatpush.bf16.xpose.msra.mxu0 0
      %2014 = vmatpush.bf16.xpose.msra.mxu0 0
      %2015 = vmatpush.bf16.xpose.msra.mxu0 0
      %2016 = vmatpush.bf16.xpose.msra.mxu0 0
      %2017 = vmatpush.bf16.xpose.msra.mxu0 %v2008
      %2018 = vmatmul.bf16.gmra.mxu0 %v2005
      %v2019 = vpop.f32.mrf.mxu0
      %v2020 = vadd.f32 0.0, %v2019
      %v2021 = vpop.f32.mrf.mxu0
      %v2022 = vadd.f32 0.0, %v2021
      %2023 = vdwg.mxu0
      %2026 = vrot.lane.b32.xlu0 %v2020, 1
      %v2027 = vpop.permute.xlu0 %2026
      %2028 = vrot.lane.b32.xlu0 %v2022, 1
      %v2029 = vpop.permute.xlu0 %2028
      %2032 = vrot.lane.b32.xlu0 %v2020, 2
      %v2033 = vpop.permute.xlu0 %2032
      %2034 = vrot.lane.b32.xlu0 %v2022, 2
      %v2035 = vpop.permute.xlu0 %2034
      %2038 = vrot.lane.b32.xlu0 %v2020, 3
      %v2039 = vpop.permute.xlu0 %2038
      %2040 = vrot.lane.b32.xlu0 %v2022, 3
      %v2041 = vpop.permute.xlu0 %2040
      %2044 = vrot.lane.b32.xlu0 %v2020, 4
      %v2045 = vpop.permute.xlu0 %2044
      %2046 = vrot.lane.b32.xlu0 %v2022, 4
      %v2047 = vpop.permute.xlu0 %2046
      %2050 = vrot.lane.b32.xlu0 %v2020, 5
      %v2051 = vpop.permute.xlu0 %2050
      %2052 = vrot.lane.b32.xlu0 %v2022, 5
      %v2053 = vpop.permute.xlu0 %2052
      %2056 = vrot.lane.b32.xlu0 %v2020, 6
      %v2057 = vpop.permute.xlu0 %2056
      %2058 = vrot.lane.b32.xlu0 %v2022, 6
      %v2059 = vpop.permute.xlu0 %2058
      %2062 = vrot.lane.b32.xlu0 %v2020, 7
      %v2063 = vpop.permute.xlu0 %2062
      %2064 = vrot.lane.b32.xlu0 %v2022, 7
      %v2065 = vpop.permute.xlu0 %2064
      %v2068 = vsel %vm1538, %v2020, %v2027
      %v2069 = vsel %vm1538, %v2022, %v2029
      %v2070 = vsel %vm1541, %v2068, %v2033
      %v2071 = vsel %vm1541, %v2069, %v2035
      %v2072 = vsel %vm1544, %v2070, %v2039
      %v2073 = vsel %vm1544, %v2071, %v2041
      %v2074 = vsel %vm1547, %v2072, %v2045
      %v2075 = vsel %vm1547, %v2073, %v2047
      %v2076 = vsel %vm1550, %v2074, %v2051
      %v2077 = vsel %vm1550, %v2075, %v2053
      %v2078 = vsel %vm1553, %v2076, %v2057
      %v2079 = vsel %vm1553, %v2077, %v2059
      %v2080 = vsel %vm1556, %v2078, %v2063
      %v2081 = vsel %vm1556, %v2079, %v2065
      %v2083 = vunpack.c.l.b16 %v1989
      %v2084 = vpack.c.b16 %v2083, %v2083
      %2085 = vrot.lane.b32.xlu0 %v2084, 112
      %v2086 = vpop.permute.xlu0 %2085
      %2087 = vrot.lane.b32.xlu0 %v1561, 80
      %v2088 = vpop.permute.xlu0 %2087
      %2090 = vrot.lane.b32.xlu0 %v2080, 121
      %v2091 = vpop.permute.xlu0 %2090
      %v2094 = vsel %vm1473, %v2086, 0
      %v2097 = vsel %vm1473, %v2088, 0
      %2099 = vmatpush.bf16.xpose.msra.mxu0 0
      %2100 = vmatpush.bf16.xpose.msra.mxu0 0
      %2101 = vmatpush.bf16.xpose.msra.mxu0 0
      %2102 = vmatpush.bf16.xpose.msra.mxu0 0
      %2103 = vmatpush.bf16.xpose.msra.mxu0 0
      %2104 = vmatpush.bf16.xpose.msra.mxu0 0
      %2105 = vmatpush.bf16.xpose.msra.mxu0 0
      %2106 = vmatpush.bf16.xpose.msra.mxu0 %v2097
      %2107 = vmatmul.bf16.gmra.mxu0 %v2094
      %v2108 = vpop.f32.mrf.mxu0
      %v2109 = vadd.f32 %v2091, %v2108
      %v2110 = vpop.f32.mrf.mxu0
      %2111 = vdwg.mxu0
      %v2113 = vunpack.c.l.b16 %v1990
      %v2114 = vpack.c.b16 %v2113, %v2113
      %2115 = vrot.lane.b32.xlu0 %v2114, 112
      %v2116 = vpop.permute.xlu0 %2115
      %2117 = vrot.lane.b32.xlu0 %v1589, 80
      %v2118 = vpop.permute.xlu0 %2117
      %2120 = vrot.lane.b32.xlu0 %v2081, 121
      %v2121 = vpop.permute.xlu0 %2120
      %v2124 = vsel %vm1473, %v2116, 0
      %v2127 = vsel %vm1473, %v2118, 0
      %2129 = vmatpush.bf16.xpose.msra.mxu0 0
      %2130 = vmatpush.bf16.xpose.msra.mxu0 0
      %2131 = vmatpush.bf16.xpose.msra.mxu0 0
      %2132 = vmatpush.bf16.xpose.msra.mxu0 0
      %2133 = vmatpush.bf16.xpose.msra.mxu0 0
      %2134 = vmatpush.bf16.xpose.msra.mxu0 0
      %2135 = vmatpush.bf16.xpose.msra.mxu0 0
      %2136 = vmatpush.bf16.xpose.msra.mxu0 %v2127
      %2137 = vmatmul.bf16.gmra.mxu0 %v2124
      %v2138 = vpop.f32.mrf.mxu0
      %v2139 = vadd.f32 %v2121, %v2138
      %v2140 = vpop.f32.mrf.mxu0
      %2141 = vdwg.mxu0
      %v2142 = vadd.f32 %v2109, %v1313
      %v2143 = vadd.f32 %v2139, %v1314
      %v2144 = vsel %vm1473, %v2142, -inf
      %2145 = vmax.xlane.f32.xlu0 %v2144
      %v2146 = vpop.xlane.xlu0 %2145
      %v2147 = vsel %vm1473, %v2143, -inf
      %2148 = vmax.xlane.f32.xlu0 %v2147
      %v2149 = vpop.xlane.xlu0 %2148
      %v2150 = vsub.f32 %v2142, %v2146
      %v2151 = vsub.f32 %v2143, %v2149
      %v2152 = vmul.f32 %v2150, 1.442695
      %v2153 = vpow.pop %v2152
      %v2154 = vmul.f32 %v2151, 1.442695
      %v2155 = vpow.pop %v2154
      %v2156 = vsel %vm1473, %v2153, 0.0
      %2157 = vadd.xlane.f32.xlu0 %v2156
      %v2158 = vpop.xlane.xlu0 %2157
      %v2159 = vsel %vm1473, %v2155, 0.0
      %2160 = vadd.xlane.f32.xlu0 %v2159
      %v2161 = vpop.xlane.xlu0 %2160
      %v2162 = vrcp.pop %v2158
      %v2163 = vmul.f32 %v2158, %v2162
      %v2164 = vsub.f32 1.0, %v2163
      %v2165 = vmul.f32 %v2162, %v2164
      %v2166 = vadd.f32 %v2162, %v2165
      %vm2167 = vweird.f32 %v2158
      %vm2168 = vweird.f32 %v2162
      %vm2169 = vmor %vm2167, %vm2168
      %v2170 = vsel %vm2169, %v2162, %v2166
      %v2171 = vand.u32 2147483647, %v2158
      %vm2172 = vcmp.eq.f32.partialorder %v2171, 8.507059e+37
      %v2173 = vand.u32 %v2158, 2147483648
      %v2174 = vor.u32 1.1754944e-38, %v2173
      %v2175 = vsel %vm2172, %v2174, %v2170
      %v2176 = vmul.f32 %v2153, %v2175
      %v2177 = vrcp.pop %v2161
      %v2178 = vmul.f32 %v2161, %v2177
      %v2179 = vsub.f32 1.0, %v2178
      %v2180 = vmul.f32 %v2177, %v2179
      %v2181 = vadd.f32 %v2177, %v2180
      %vm2182 = vweird.f32 %v2161
      %vm2183 = vweird.f32 %v2177
      %vm2184 = vmor %vm2182, %vm2183
      %v2185 = vsel %vm2184, %v2177, %v2181
      %v2186 = vand.u32 2147483647, %v2161
      %vm2187 = vcmp.eq.f32.partialorder %v2186, 8.507059e+37
      %v2188 = vand.u32 %v2161, 2147483648
      %v2189 = vor.u32 1.1754944e-38, %v2188
      %v2190 = vsel %vm2187, %v2189, %v2185
      %v2191 = vmul.f32 %v2155, %v2190
      %s2192 = scalar_lea.vmem %s1291, 32
      %2193 = vst.msk [vmem:[%s2192] sm:$0xff] %vm1473, %v2176
      %2194 = vst.msk [vmem:[%s2192 + $0x8] sm:$0xff] %vm1473, %v2191
      %v2195 = vpack.c.bf16 %v2176, %v2176
      %v2196 = vpack.c.bf16 %v2191, %v2191
      %2197 = vrot.lane.b32.xlu0 %v1561, 48
      %v2198 = vpop.permute.xlu0 %2197
      %v2200 = vsel %vm1473, %v2195, 0
      %v2203 = vsel %vm1547, %v2198, 0
      %2205 = vmatpush.bf16.msra.mxu0 0
      %2206 = vmatpush.bf16.msra.mxu0 0
      %2207 = vmatpush.bf16.msra.mxu0 0
      %2208 = vmatpush.bf16.msra.mxu0 0
      %2209 = vmatpush.bf16.msra.mxu0 0
      %2210 = vmatpush.bf16.msra.mxu0 0
      %2211 = vmatpush.bf16.msra.mxu0 0
      %2212 = vmatpush.bf16.msra.mxu0 %v2203
      %2213 = vmatmul.bf16.gmra.mxu0 %v2200
      %v2214 = vpop.f32.mrf.mxu0
      %v2215 = vadd.f32 0.0, %v2214
      %v2216 = vpop.f32.mrf.mxu0
      %2217 = vdwg.mxu0
      %2218 = vrot.lane.b32.xlu0 %v1589, 48
      %v2219 = vpop.permute.xlu0 %2218
      %v2221 = vsel %vm1473, %v2196, 0
      %v2224 = vsel %vm1547, %v2219, 0
      %2226 = vmatpush.bf16.msra.mxu0 0
      %2227 = vmatpush.bf16.msra.mxu0 0
      %2228 = vmatpush.bf16.msra.mxu0 0
      %2229 = vmatpush.bf16.msra.mxu0 0
      %2230 = vmatpush.bf16.msra.mxu0 0
      %2231 = vmatpush.bf16.msra.mxu0 0
      %2232 = vmatpush.bf16.msra.mxu0 0
      %2233 = vmatpush.bf16.msra.mxu0 %v2224
      %2234 = vmatmul.bf16.gmra.mxu0 %v2221
      %v2235 = vpop.f32.mrf.mxu0
      %v2236 = vadd.f32 0.0, %v2235
      %v2237 = vpop.f32.mrf.mxu0
      %2238 = vdwg.mxu0
      %2241 = vrot.lane.b32.xlu0 %v2215, 16
      %v2242 = vpop.permute.xlu0 %2241
      %2243 = vrot.lane.b32.xlu0 %v2236, 16
      %v2244 = vpop.permute.xlu0 %2243
      %vm2247 = vcmask 195712
      %2248 = vst.msk [vmem:[#allocation2] sm:$0xff] %vm2247, %v2242
      %2249 = vst.msk [vmem:[#allocation2 + $0x8] sm:$0xff] %vm2247, %v2244
      %v2250 = vperm.slane %v1456, 3
      %2252 = vrot.lane.b32.xlu0 %v2250, 24
      %v2253 = vpop.permute.xlu0 %2252
      %v2255 = vadd.f32 %v1459, %v2253
      %v2256 = vadd.f32 %v1460, %v2253
      %v2257 = vpack.c.bf16 %v2255, %v2255
      %v2258 = vpack.c.bf16 %v2256, %v2256
      %v2259 = vperm.slane %v1458, 3
      %2261 = vrot.lane.b32.xlu0 %v2259, 24
      %v2262 = vpop.permute.xlu0 %2261
      %v2264 = vadd.f32 %v1459, %v2262
      %v2265 = vadd.f32 %v1460, %v2262
      %v2266 = vpack.c.bf16 %v2265, %v2264
      %2268 = vrot.lane.b32.xlu0 %v2266, 104
      %v2269 = vpop.permute.xlu0 %2268
      %2270 = vrot.lane.b32.xlu0 %v1472, 104
      %v2271 = vpop.permute.xlu0 %2270
      %v2273 = vsel %vm1473, %v2269, 0
      %v2276 = vsel %vm1473, %v2271, 0
      %2278 = vmatpush.bf16.xpose.msra.mxu0 0
      %2279 = vmatpush.bf16.xpose.msra.mxu0 0
      %2280 = vmatpush.bf16.xpose.msra.mxu0 0
      %2281 = vmatpush.bf16.xpose.msra.mxu0 0
      %2282 = vmatpush.bf16.xpose.msra.mxu0 0
      %2283 = vmatpush.bf16.xpose.msra.mxu0 0
      %2284 = vmatpush.bf16.xpose.msra.mxu0 0
      %2285 = vmatpush.bf16.xpose.msra.mxu0 %v2276
      %2286 = vmatmul.bf16.gmra.mxu0 %v2273
      %v2287 = vpop.f32.mrf.mxu0
      %v2288 = vadd.f32 0.0, %v2287
      %v2289 = vpop.f32.mrf.mxu0
      %v2290 = vadd.f32 0.0, %v2289
      %2291 = vdwg.mxu0
      %2294 = vrot.lane.b32.xlu0 %v2288, 1
      %v2295 = vpop.permute.xlu0 %2294
      %2296 = vrot.lane.b32.xlu0 %v2290, 1
      %v2297 = vpop.permute.xlu0 %2296
      %2300 = vrot.lane.b32.xlu0 %v2288, 2
      %v2301 = vpop.permute.xlu0 %2300
      %2302 = vrot.lane.b32.xlu0 %v2290, 2
      %v2303 = vpop.permute.xlu0 %2302
      %2306 = vrot.lane.b32.xlu0 %v2288, 3
      %v2307 = vpop.permute.xlu0 %2306
      %2308 = vrot.lane.b32.xlu0 %v2290, 3
      %v2309 = vpop.permute.xlu0 %2308
      %2312 = vrot.lane.b32.xlu0 %v2288, 4
      %v2313 = vpop.permute.xlu0 %2312
      %2314 = vrot.lane.b32.xlu0 %v2290, 4
      %v2315 = vpop.permute.xlu0 %2314
      %2318 = vrot.lane.b32.xlu0 %v2288, 5
      %v2319 = vpop.permute.xlu0 %2318
      %2320 = vrot.lane.b32.xlu0 %v2290, 5
      %v2321 = vpop.permute.xlu0 %2320
      %2324 = vrot.lane.b32.xlu0 %v2288, 6
      %v2325 = vpop.permute.xlu0 %2324
      %2326 = vrot.lane.b32.xlu0 %v2290, 6
      %v2327 = vpop.permute.xlu0 %2326
      %2330 = vrot.lane.b32.xlu0 %v2288, 7
      %v2331 = vpop.permute.xlu0 %2330
      %2332 = vrot.lane.b32.xlu0 %v2290, 7
      %v2333 = vpop.permute.xlu0 %2332
      %v2336 = vsel %vm1538, %v2288, %v2295
      %v2337 = vsel %vm1538, %v2290, %v2297
      %v2338 = vsel %vm1541, %v2336, %v2301
      %v2339 = vsel %vm1541, %v2337, %v2303
      %v2340 = vsel %vm1544, %v2338, %v2307
      %v2341 = vsel %vm1544, %v2339, %v2309
      %v2342 = vsel %vm1547, %v2340, %v2313
      %v2343 = vsel %vm1547, %v2341, %v2315
      %v2344 = vsel %vm1550, %v2342, %v2319
      %v2345 = vsel %vm1550, %v2343, %v2321
      %v2346 = vsel %vm1553, %v2344, %v2325
      %v2347 = vsel %vm1553, %v2345, %v2327
      %v2348 = vsel %vm1556, %v2346, %v2331
      %v2349 = vsel %vm1556, %v2347, %v2333
      %v2351 = vunpack.c.l.b16 %v2257
      %v2352 = vpack.c.b16 %v2351, %v2351
      %2353 = vrot.lane.b32.xlu0 %v2352, 104
      %v2354 = vpop.permute.xlu0 %2353
      %2355 = vrot.lane.b32.xlu0 %v1561, 72
      %v2356 = vpop.permute.xlu0 %2355
      %2358 = vrot.lane.b32.xlu0 %v2348, 121
      %v2359 = vpop.permute.xlu0 %2358
      %v2362 = vsel %vm1473, %v2354, 0
      %v2365 = vsel %vm1473, %v2356, 0
      %2367 = vmatpush.bf16.xpose.msra.mxu0 0
      %2368 = vmatpush.bf16.xpose.msra.mxu0 0
      %2369 = vmatpush.bf16.xpose.msra.mxu0 0
      %2370 = vmatpush.bf16.xpose.msra.mxu0 0
      %2371 = vmatpush.bf16.xpose.msra.mxu0 0
      %2372 = vmatpush.bf16.xpose.msra.mxu0 0
      %2373 = vmatpush.bf16.xpose.msra.mxu0 0
      %2374 = vmatpush.bf16.xpose.msra.mxu0 %v2365
      %2375 = vmatmul.bf16.gmra.mxu0 %v2362
      %v2376 = vpop.f32.mrf.mxu0
      %v2377 = vadd.f32 %v2359, %v2376
      %v2378 = vpop.f32.mrf.mxu0
      %2379 = vdwg.mxu0
      %v2381 = vunpack.c.l.b16 %v2258
      %v2382 = vpack.c.b16 %v2381, %v2381
      %2383 = vrot.lane.b32.xlu0 %v2382, 104
      %v2384 = vpop.permute.xlu0 %2383
      %2385 = vrot.lane.b32.xlu0 %v1589, 72
      %v2386 = vpop.permute.xlu0 %2385
      %2388 = vrot.lane.b32.xlu0 %v2349, 121
      %v2389 = vpop.permute.xlu0 %2388
      %v2392 = vsel %vm1473, %v2384, 0
      %v2395 = vsel %vm1473, %v2386, 0
      %2397 = vmatpush.bf16.xpose.msra.mxu0 0
      %2398 = vmatpush.bf16.xpose.msra.mxu0 0
      %2399 = vmatpush.bf16.xpose.msra.mxu0 0
      %2400 = vmatpush.bf16.xpose.msra.mxu0 0
      %2401 = vmatpush.bf16.xpose.msra.mxu0 0
      %2402 = vmatpush.bf16.xpose.msra.mxu0 0
      %2403 = vmatpush.bf16.xpose.msra.mxu0 0
      %2404 = vmatpush.bf16.xpose.msra.mxu0 %v2395
      %2405 = vmatmul.bf16.gmra.mxu0 %v2392
      %v2406 = vpop.f32.mrf.mxu0
      %v2407 = vadd.f32 %v2389, %v2406
      %v2408 = vpop.f32.mrf.mxu0
      %2409 = vdwg.mxu0
      %v2410 = vadd.f32 %v2377, %v1313
      %v2411 = vadd.f32 %v2407, %v1314
      %v2412 = vsel %vm1473, %v2410, -inf
      %2413 = vmax.xlane.f32.xlu0 %v2412
      %v2414 = vpop.xlane.xlu0 %2413
      %v2415 = vsel %vm1473, %v2411, -inf
      %2416 = vmax.xlane.f32.xlu0 %v2415
      %v2417 = vpop.xlane.xlu0 %2416
      %v2418 = vsub.f32 %v2410, %v2414
      %v2419 = vsub.f32 %v2411, %v2417
      %v2420 = vmul.f32 %v2418, 1.442695
      %v2421 = vpow.pop %v2420
      %v2422 = vmul.f32 %v2419, 1.442695
      %v2423 = vpow.pop %v2422
      %v2424 = vsel %vm1473, %v2421, 0.0
      %2425 = vadd.xlane.f32.xlu0 %v2424
      %v2426 = vpop.xlane.xlu0 %2425
      %v2427 = vsel %vm1473, %v2423, 0.0
      %2428 = vadd.xlane.f32.xlu0 %v2427
      %v2429 = vpop.xlane.xlu0 %2428
      %v2430 = vrcp.pop %v2426
      %v2431 = vmul.f32 %v2426, %v2430
      %v2432 = vsub.f32 1.0, %v2431
      %v2433 = vmul.f32 %v2430, %v2432
      %v2434 = vadd.f32 %v2430, %v2433
      %vm2435 = vweird.f32 %v2426
      %vm2436 = vweird.f32 %v2430
      %vm2437 = vmor %vm2435, %vm2436
      %v2438 = vsel %vm2437, %v2430, %v2434
      %v2439 = vand.u32 2147483647, %v2426
      %vm2440 = vcmp.eq.f32.partialorder %v2439, 8.507059e+37
      %v2441 = vand.u32 %v2426, 2147483648
      %v2442 = vor.u32 1.1754944e-38, %v2441
      %v2443 = vsel %vm2440, %v2442, %v2438
      %v2444 = vmul.f32 %v2421, %v2443
      %v2445 = vrcp.pop %v2429
      %v2446 = vmul.f32 %v2429, %v2445
      %v2447 = vsub.f32 1.0, %v2446
      %v2448 = vmul.f32 %v2445, %v2447
      %v2449 = vadd.f32 %v2445, %v2448
      %vm2450 = vweird.f32 %v2429
      %vm2451 = vweird.f32 %v2445
      %vm2452 = vmor %vm2450, %vm2451
      %v2453 = vsel %vm2452, %v2445, %v2449
      %v2454 = vand.u32 2147483647, %v2429
      %vm2455 = vcmp.eq.f32.partialorder %v2454, 8.507059e+37
      %v2456 = vand.u32 %v2429, 2147483648
      %v2457 = vor.u32 1.1754944e-38, %v2456
      %v2458 = vsel %vm2455, %v2457, %v2453
      %v2459 = vmul.f32 %v2423, %v2458
      %s2460 = scalar_lea.vmem %s1291, 48
      %2461 = vst.msk [vmem:[%s2460] sm:$0xff] %vm1473, %v2444
      %2462 = vst.msk [vmem:[%s2460 + $0x8] sm:$0xff] %vm1473, %v2459
      %v2463 = vpack.c.bf16 %v2444, %v2444
      %v2464 = vpack.c.bf16 %v2459, %v2459
      %2465 = vrot.lane.b32.xlu0 %v1561, 40
      %v2466 = vpop.permute.xlu0 %2465
      %v2468 = vsel %vm1473, %v2463, 0
      %v2471 = vsel %vm1547, %v2466, 0
      %2473 = vmatpush.bf16.msra.mxu0 0
      %2474 = vmatpush.bf16.msra.mxu0 0
      %2475 = vmatpush.bf16.msra.mxu0 0
      %2476 = vmatpush.bf16.msra.mxu0 0
      %2477 = vmatpush.bf16.msra.mxu0 0
      %2478 = vmatpush.bf16.msra.mxu0 0
      %2479 = vmatpush.bf16.msra.mxu0 0
      %2480 = vmatpush.bf16.msra.mxu0 %v2471
      %2481 = vmatmul.bf16.gmra.mxu0 %v2468
      %v2482 = vpop.f32.mrf.mxu0
      %v2483 = vadd.f32 0.0, %v2482
      %v2484 = vpop.f32.mrf.mxu0
      %2485 = vdwg.mxu0
      %2486 = vrot.lane.b32.xlu0 %v1589, 40
      %v2487 = vpop.permute.xlu0 %2486
      %v2489 = vsel %vm1473, %v2464, 0
      %v2492 = vsel %vm1547, %v2487, 0
      %2494 = vmatpush.bf16.msra.mxu0 0
      %2495 = vmatpush.bf16.msra.mxu0 0
      %2496 = vmatpush.bf16.msra.mxu0 0
      %2497 = vmatpush.bf16.msra.mxu0 0
      %2498 = vmatpush.bf16.msra.mxu0 0
      %2499 = vmatpush.bf16.msra.mxu0 0
      %2500 = vmatpush.bf16.msra.mxu0 0
      %2501 = vmatpush.bf16.msra.mxu0 %v2492
      %2502 = vmatmul.bf16.gmra.mxu0 %v2489
      %v2503 = vpop.f32.mrf.mxu0
      %v2504 = vadd.f32 0.0, %v2503
      %v2505 = vpop.f32.mrf.mxu0
      %2506 = vdwg.mxu0
      %2509 = vrot.lane.b32.xlu0 %v2483, 24
      %v2510 = vpop.permute.xlu0 %2509
      %2511 = vrot.lane.b32.xlu0 %v2504, 24
      %v2512 = vpop.permute.xlu0 %2511
      %vm2515 = vcmask 261312
      %2516 = vst.msk [vmem:[#allocation2] sm:$0xff] %vm2515, %v2510
      %2517 = vst.msk [vmem:[#allocation2 + $0x8] sm:$0xff] %vm2515, %v2512
      %v2518 = vld [vmem:[#allocation2] sm:$0xff]
      %v2519 = vld [vmem:[#allocation2 + $0x8] sm:$0xff]
      %v2520 = vld [vmem:[%s1231] sm:$0xf]
      %v2521 = vld [vmem:[%s1231 + $0x4] sm:$0xf]
      %v2522 = vld [vmem:[%s1231 + $0x8] sm:$0xf]
      %v2523 = vld [vmem:[%s1231 + $0xc] sm:$0xf]
      %v2524 = vpack.c.bf16 %v2519, %v2518
      %v2529 = vunpack.c.l.b16 %v2520
      %v2530 = vunpack.c.l.b16 %v2521
      %v2531 = vunpack.c.l.b16 %v2522
      %v2532 = vunpack.c.l.b16 %v2523
      %v2533 = vpack.c.b16 %v2530, %v2529
      %v2534 = vpack.c.b16 %v2532, %v2531
      %v2538 = vsel %vm1319, %v2524, 0
      %2540 = vmatpush.bf16.msra.mxu0 0
      %2541 = vmatpush.bf16.msra.mxu0 0
      %2542 = vmatpush.bf16.msra.mxu0 0
      %2543 = vmatpush.bf16.msra.mxu0 0
      %2544 = vmatpush.bf16.msra.mxu0 0
      %2545 = vmatpush.bf16.msra.mxu0 0
      %2546 = vmatpush.bf16.msra.mxu0 %v2534
      %2547 = vmatpush.bf16.msra.mxu0 %v2533
      %2548 = vmatmul.bf16.gmra.mxu0 %v2538
      %v2549 = vpop.f32.mrf.mxu0
      %v2550 = vadd.f32 0.0, %v2549
      %v2551 = vpop.f32.mrf.mxu0
      %v2552 = vadd.f32 0.0, %v2551
      %2553 = vdwg.mxu0
      %v2554 = vadd.f32 %v1379, %v2550
      %v2555 = vadd.f32 %v1380, %v2552
      %v2556 = vld [vmem:[%s1234] sm:$0x1]
      %v2558 = vperm.slane %v2556, 0
      %v2560 = vadd.f32 %v2554, %v2558
      %v2561 = vadd.f32 %v2555, %v2558
      %v2562 = vld [vmem:[%s1237] sm:$0x1]
      %v2563 = vld [vmem:[%s1240] sm:$0x1]
      %v2564 = vsel %vm1319, %v2560, 0.0
      %2565 = vadd.xlane.f32.xlu0 %v2564
      %v2566 = vpop.xlane.xlu0 %2565
      %v2567 = vsel %vm1319, %v2561, 0.0
      %2568 = vadd.xlane.f32.xlu0 %v2567
      %v2569 = vpop.xlane.xlu0 %2568
      %v2570 = vmul.f32 %v2566, %v1332
      %v2571 = vmul.f32 %v2569, %v1332
      %v2572 = vsub.f32 %v2560, %v2570
      %v2573 = vsub.f32 %v2561, %v2571
      %v2574 = vmul.f32 %v2572, %v2572
      %v2575 = vmul.f32 %v2573, %v2573
      %v2576 = vsel %vm1319, %v2574, 0.0
      %2577 = vadd.xlane.f32.xlu0 %v2576
      %v2578 = vpop.xlane.xlu0 %2577
      %v2579 = vsel %vm1319, %v2575, 0.0
      %2580 = vadd.xlane.f32.xlu0 %v2579
      %v2581 = vpop.xlane.xlu0 %2580
      %v2582 = vmul.f32 %v2578, %v1332
      %v2583 = vmul.f32 %v2581, %v1332
      %v2584 = vadd.f32 %v2582, 1e-05
      %v2585 = vadd.f32 %v2583, 1e-05
      %v2586 = vrsqrt.pop %v2584
      %v2587 = vmul.f32 %v2586, %v2584
      %v2588 = vmul.f32 %v2587, %v2586
      %v2589 = vmul.f32 0.5, %v2588
      %v2590 = vsub.f32 1.5, %v2589
      %v2591 = vmul.f32 %v2586, %v2590
      %vm2592 = vweird.f32 %v2584
      %vm2593 = vweird.f32 %v2586
      %vm2594 = vmor %vm2592, %vm2593
      %v2595 = vsel %vm2594, %v2586, %v2591
      %v2596 = vrsqrt.pop %v2585
      %v2597 = vmul.f32 %v2596, %v2585
      %v2598 = vmul.f32 %v2597, %v2596
      %v2599 = vmul.f32 0.5, %v2598
      %v2600 = vsub.f32 1.5, %v2599
      %v2601 = vmul.f32 %v2596, %v2600
      %vm2602 = vweird.f32 %v2585
      %vm2603 = vweird.f32 %v2596
      %vm2604 = vmor %vm2602, %vm2603
      %v2605 = vsel %vm2604, %v2596, %v2601
      %v2606 = vmul.f32 %v2572, %v2595
      %v2607 = vmul.f32 %v2573, %v2605
      %v2609 = vperm.slane %v2562, 0
      %v2611 = vmul.f32 %v2606, %v2609
      %v2612 = vmul.f32 %v2607, %v2609
      %v2614 = vperm.slane %v2563, 0
      %v2616 = vadd.f32 %v2611, %v2614
      %v2617 = vadd.f32 %v2612, %v2614
      %v2618 = vld [vmem:[%s1245] sm:$0xf]
      %v2619 = vld [vmem:[%s1245 + $0x4] sm:$0xf]
      %v2620 = vld [vmem:[%s1245 + $0x8] sm:$0xf]
      %v2621 = vld [vmem:[%s1245 + $0xc] sm:$0xf]
      %v2622 = vpack.c.bf16 %v2617, %v2616
      %v2623 = vld [vmem:[%s1248] sm:$0x1]
      %v2625 = vperm.slane %v2623, 0
      %v2631 = vunpack.c.l.b16 %v2618
      %v2632 = vunpack.c.l.b16 %v2619
      %v2633 = vunpack.c.l.b16 %v2620
      %v2634 = vunpack.c.l.b16 %v2621
      %v2635 = vpack.c.b16 %v2632, %v2631
      %v2636 = vpack.c.b16 %v2634, %v2633
      %v2640 = vsel %vm1319, %v2622, 0
      %2642 = vmatpush.bf16.msra.mxu0 0
      %2643 = vmatpush.bf16.msra.mxu0 0
      %2644 = vmatpush.bf16.msra.mxu0 0
      %2645 = vmatpush.bf16.msra.mxu0 0
      %2646 = vmatpush.bf16.msra.mxu0 0
      %2647 = vmatpush.bf16.msra.mxu0 0
      %2648 = vmatpush.bf16.msra.mxu0 %v2636
      %2649 = vmatpush.bf16.msra.mxu0 %v2635
      %2650 = vmatmul.bf16.gmra.mxu0 %v2640
      %v2651 = vpop.f32.mrf.mxu0
      %v2652 = vadd.f32 %v2625, %v2651
      %v2653 = vpop.f32.mrf.mxu0
      %v2654 = vadd.f32 %v2625, %v2653
      %2655 = vdwg.mxu0
      %v2656 = vmul.f32 %v2652, 0.35355338
      %v2657 = vmul.f32 %v2654, 0.35355338
      %v2658 = vld [vmem:[%s1253] sm:$0xf]
      %v2659 = vld [vmem:[%s1253 + $0x4] sm:$0xf]
      %v2660 = vld [vmem:[%s1253 + $0x8] sm:$0xf]
      %v2661 = vld [vmem:[%s1253 + $0xc] sm:$0xf]
      %v2662 = vpack.c.bf16 %v1310, %v1309
      %v2663 = vpack.c.bf16 %v1312, %v1311
      %v2664 = vld [vmem:[%s1256] sm:$0x1]
      %v2666 = vperm.slane %v2664, 0
      %v2672 = vunpack.c.l.b16 %v2658
      %v2673 = vunpack.c.l.b16 %v2659
      %v2674 = vunpack.c.l.b16 %v2660
      %v2675 = vunpack.c.l.b16 %v2661
      %v2676 = vpack.c.b16 %v2673, %v2672
      %v2677 = vpack.c.b16 %v2675, %v2674
      %v2681 = vsel %vm1319, %v2662, 0
      %v2684 = vsel %vm1319, %v2663, 0
      %2686 = vmatpush.bf16.msra.mxu0 0
      %2687 = vmatpush.bf16.msra.mxu0 0
      %2688 = vmatpush.bf16.msra.mxu0 0
      %2689 = vmatpush.bf16.msra.mxu0 0
      %2690 = vmatpush.bf16.msra.mxu0 0
      %2691 = vmatpush.bf16.msra.mxu0 0
      %2692 = vmatpush.bf16.msra.mxu0 %v2677
      %2693 = vmatpush.bf16.msra.mxu0 %v2676
      %2694 = vmatmul.bf16.gmra.mxu0 %v2681
      %v2695 = vpop.f32.mrf.mxu0
      %v2696 = vadd.f32 %v2666, %v2695
      %v2697 = vpop.f32.mrf.mxu0
      %v2698 = vadd.f32 %v2666, %v2697
      %2699 = vmatmul.bf16.gmra.mxu0 %v2684
      %v2700 = vpop.f32.mrf.mxu0
      %v2701 = vadd.f32 %v2666, %v2700
      %v2702 = vpop.f32.mrf.mxu0
      %v2703 = vadd.f32 %v2666, %v2702
      %2704 = vdwg.mxu0
      %v2705 = vpack.c.bf16 %v2656, %v2656
      %v2706 = vpack.c.bf16 %v2657, %v2657
      %v2707 = vpack.c.bf16 %v2696, %v2696
      %v2708 = vpack.c.bf16 %v2698, %v2698
      %v2709 = vpack.c.bf16 %v2701, %v2701
      %v2710 = vpack.c.bf16 %v2703, %v2703
      %v2713 = vperm.slane %v1315, 0
      %v2714 = vperm.slane %v1316, 0
      %v2719 = vunpack.c.l.b16 %v2707
      %v2720 = vunpack.c.l.b16 %v2708
      %v2721 = vpack.c.b16 %v2720, %v2719
      %v2723 = vsel %vm1473, %v2705, 0
      %v2726 = vsel %vm1473, %v2721, 0
      %2728 = vmatpush.bf16.xpose.msra.mxu0 0
      %2729 = vmatpush.bf16.xpose.msra.mxu0 0
      %2730 = vmatpush.bf16.xpose.msra.mxu0 0
      %2731 = vmatpush.bf16.xpose.msra.mxu0 0
      %2732 = vmatpush.bf16.xpose.msra.mxu0 0
      %2733 = vmatpush.bf16.xpose.msra.mxu0 0
      %2734 = vmatpush.bf16.xpose.msra.mxu0 0
      %2735 = vmatpush.bf16.xpose.msra.mxu0 %v2726
      %2736 = vmatmul.bf16.gmra.mxu0 %v2723
      %v2737 = vpop.f32.mrf.mxu0
      %v2738 = vadd.f32 %v2713, %v2737
      %v2739 = vpop.f32.mrf.mxu0
      %2740 = vdwg.mxu0
      %v2743 = vunpack.c.l.b16 %v2709
      %v2744 = vunpack.c.l.b16 %v2710
      %v2745 = vpack.c.b16 %v2744, %v2743
      %v2747 = vsel %vm1473, %v2706, 0
      %v2750 = vsel %vm1473, %v2745, 0
      %2752 = vmatpush.bf16.xpose.msra.mxu0 0
      %2753 = vmatpush.bf16.xpose.msra.mxu0 0
      %2754 = vmatpush.bf16.xpose.msra.mxu0 0
      %2755 = vmatpush.bf16.xpose.msra.mxu0 0
      %2756 = vmatpush.bf16.xpose.msra.mxu0 0
      %2757 = vmatpush.bf16.xpose.msra.mxu0 0
      %2758 = vmatpush.bf16.xpose.msra.mxu0 0
      %2759 = vmatpush.bf16.xpose.msra.mxu0 %v2750
      %2760 = vmatmul.bf16.gmra.mxu0 %v2747
      %v2761 = vpop.f32.mrf.mxu0
      %v2762 = vadd.f32 %v2714, %v2761
      %v2763 = vpop.f32.mrf.mxu0
      %2764 = vdwg.mxu0
      %vm2765 = vcmask 130048
      %v2766 = vsel %vm2765, %v2738, -inf
      %2767 = vmax.xlane.f32.xlu0 %v2766
      %v2768 = vpop.xlane.xlu0 %2767
      %v2769 = vsel %vm2765, %v2762, -inf
      %2770 = vmax.xlane.f32.xlu0 %v2769
      %v2771 = vpop.xlane.xlu0 %2770
      %v2772 = vsub.f32 %v2738, %v2768
      %v2773 = vsub.f32 %v2762, %v2771
      %v2774 = vmul.f32 %v2772, 1.442695
      %v2775 = vpow.pop %v2774
      %v2776 = vmul.f32 %v2773, 1.442695
      %v2777 = vpow.pop %v2776
      %v2778 = vsel %vm2765, %v2775, 0.0
      %2779 = vadd.xlane.f32.xlu0 %v2778
      %v2780 = vpop.xlane.xlu0 %2779
      %v2781 = vsel %vm2765, %v2777, 0.0
      %2782 = vadd.xlane.f32.xlu0 %v2781
      %v2783 = vpop.xlane.xlu0 %2782
      %v2784 = vrcp.pop %v2780
      %v2785 = vmul.f32 %v2780, %v2784
      %v2786 = vsub.f32 1.0, %v2785
      %v2787 = vmul.f32 %v2784, %v2786
      %v2788 = vadd.f32 %v2784, %v2787
      %vm2789 = vweird.f32 %v2780
      %vm2790 = vweird.f32 %v2784
      %vm2791 = vmor %vm2789, %vm2790
      %v2792 = vsel %vm2791, %v2784, %v2788
      %v2793 = vand.u32 2147483647, %v2780
      %vm2794 = vcmp.eq.f32.partialorder %v2793, 8.507059e+37
      %v2795 = vand.u32 %v2780, 2147483648
      %v2796 = vor.u32 1.1754944e-38, %v2795
      %v2797 = vsel %vm2794, %v2796, %v2792
      %v2798 = vmul.f32 %v2775, %v2797
      %v2799 = vrcp.pop %v2783
      %v2800 = vmul.f32 %v2783, %v2799
      %v2801 = vsub.f32 1.0, %v2800
      %v2802 = vmul.f32 %v2799, %v2801
      %v2803 = vadd.f32 %v2799, %v2802
      %vm2804 = vweird.f32 %v2783
      %vm2805 = vweird.f32 %v2799
      %vm2806 = vmor %vm2804, %vm2805
      %v2807 = vsel %vm2806, %v2799, %v2803
      %v2808 = vand.u32 2147483647, %v2783
      %vm2809 = vcmp.eq.f32.partialorder %v2808, 8.507059e+37
      %v2810 = vand.u32 %v2783, 2147483648
      %v2811 = vor.u32 1.1754944e-38, %v2810
      %v2812 = vsel %vm2809, %v2811, %v2807
      %v2813 = vmul.f32 %v2777, %v2812
      %2814 = vst.msk [vmem:[%s1296] sm:$0xff] %vm2765, %v2798
      %2815 = vst.msk [vmem:[%s1296 + $0x8] sm:$0xff] %vm2765, %v2813
      %v2816 = vpack.c.bf16 %v2798, %v2798
      %v2817 = vpack.c.bf16 %v2813, %v2813
      %2818 = vrot.lane.b32.xlu0 %v2721, 96
      %v2819 = vpop.permute.xlu0 %2818
      %v2822 = vsel %vm2765, %v2816, 0
      %2824 = vmatpush.bf16.msra.mxu0 0
      %2825 = vmatpush.bf16.msra.mxu0 0
      %2826 = vmatpush.bf16.msra.mxu0 0
      %2827 = vmatpush.bf16.msra.mxu0 0
      %2828 = vmatpush.bf16.msra.mxu0 0
      %2829 = vmatpush.bf16.msra.mxu0 0
      %2830 = vmatpush.bf16.msra.mxu0 0
      %2831 = vmatpush.bf16.msra.mxu0 %v2819
      %2832 = vmatmul.bf16.gmra.mxu0 %v2822
      %v2833 = vpop.f32.mrf.mxu0
      %v2834 = vadd.f32 0.0, %v2833
      %v2835 = vpop.f32.mrf.mxu0
      %2836 = vdwg.mxu0
      %2837 = vrot.lane.b32.xlu0 %v2745, 96
      %v2838 = vpop.permute.xlu0 %2837
      %v2841 = vsel %vm2765, %v2817, 0
      %2843 = vmatpush.bf16.msra.mxu0 0
      %2844 = vmatpush.bf16.msra.mxu0 0
      %2845 = vmatpush.bf16.msra.mxu0 0
      %2846 = vmatpush.bf16.msra.mxu0 0
      %2847 = vmatpush.bf16.msra.mxu0 0
      %2848 = vmatpush.bf16.msra.mxu0 0
      %2849 = vmatpush.bf16.msra.mxu0 0
      %2850 = vmatpush.bf16.msra.mxu0 %v2838
      %2851 = vmatmul.bf16.gmra.mxu0 %v2841
      %v2852 = vpop.f32.mrf.mxu0
      %v2853 = vadd.f32 0.0, %v2852
      %v2854 = vpop.f32.mrf.mxu0
      %2855 = vdwg.mxu0
      %2856 = vst.msk [vmem:[#allocation2] sm:$0xff] %vm1473, %v2834
      %2857 = vst.msk [vmem:[#allocation2 + $0x8] sm:$0xff] %vm1473, %v2853
      %v2859 = vunpack.c.l.b16 %v2705
      %v2860 = vpack.c.b16 %v2859, %v2859
      %2861 = vrot.lane.b32.xlu0 %v2860, 120
      %v2862 = vpop.permute.xlu0 %2861
      %2863 = vrot.lane.b32.xlu0 %v2721, 120
      %v2864 = vpop.permute.xlu0 %2863
      %v2866 = vsel %vm1473, %v2862, 0
      %v2869 = vsel %vm1473, %v2864, 0
      %2871 = vmatpush.bf16.xpose.msra.mxu0 0
      %2872 = vmatpush.bf16.xpose.msra.mxu0 0
      %2873 = vmatpush.bf16.xpose.msra.mxu0 0
      %2874 = vmatpush.bf16.xpose.msra.mxu0 0
      %2875 = vmatpush.bf16.xpose.msra.mxu0 0
      %2876 = vmatpush.bf16.xpose.msra.mxu0 0
      %2877 = vmatpush.bf16.xpose.msra.mxu0 0
      %2878 = vmatpush.bf16.xpose.msra.mxu0 %v2869
      %2879 = vmatmul.bf16.gmra.mxu0 %v2866
      %v2880 = vpop.f32.mrf.mxu0
      %v2881 = vadd.f32 %v2713, %v2880
      %v2882 = vpop.f32.mrf.mxu0
      %2883 = vdwg.mxu0
      %v2885 = vunpack.c.l.b16 %v2706
      %v2886 = vpack.c.b16 %v2885, %v2885
      %2887 = vrot.lane.b32.xlu0 %v2886, 120
      %v2888 = vpop.permute.xlu0 %2887
      %2889 = vrot.lane.b32.xlu0 %v2745, 120
      %v2890 = vpop.permute.xlu0 %2889
      %v2892 = vsel %vm1473, %v2888, 0
      %v2895 = vsel %vm1473, %v2890, 0
      %2897 = vmatpush.bf16.xpose.msra.mxu0 0
      %2898 = vmatpush.bf16.xpose.msra.mxu0 0
      %2899 = vmatpush.bf16.xpose.msra.mxu0 0
      %2900 = vmatpush.bf16.xpose.msra.mxu0 0
      %2901 = vmatpush.bf16.xpose.msra.mxu0 0
      %2902 = vmatpush.bf16.xpose.msra.mxu0 0
      %2903 = vmatpush.bf16.xpose.msra.mxu0 0
      %2904 = vmatpush.bf16.xpose.msra.mxu0 %v2895
      %2905 = vmatmul.bf16.gmra.mxu0 %v2892
      %v2906 = vpop.f32.mrf.mxu0
      %v2907 = vadd.f32 %v2714, %v2906
      %v2908 = vpop.f32.mrf.mxu0
      %2909 = vdwg.mxu0
      %v2910 = vsel %vm2765, %v2881, -inf
      %2911 = vmax.xlane.f32.xlu0 %v2910
      %v2912 = vpop.xlane.xlu0 %2911
      %v2913 = vsel %vm2765, %v2907, -inf
      %2914 = vmax.xlane.f32.xlu0 %v2913
      %v2915 = vpop.xlane.xlu0 %2914
      %v2916 = vsub.f32 %v2881, %v2912
      %v2917 = vsub.f32 %v2907, %v2915
      %v2918 = vmul.f32 %v2916, 1.442695
      %v2919 = vpow.pop %v2918
      %v2920 = vmul.f32 %v2917, 1.442695
      %v2921 = vpow.pop %v2920
      %v2922 = vsel %vm2765, %v2919, 0.0
      %2923 = vadd.xlane.f32.xlu0 %v2922
      %v2924 = vpop.xlane.xlu0 %2923
      %v2925 = vsel %vm2765, %v2921, 0.0
      %2926 = vadd.xlane.f32.xlu0 %v2925
      %v2927 = vpop.xlane.xlu0 %2926
      %v2928 = vrcp.pop %v2924
      %v2929 = vmul.f32 %v2924, %v2928
      %v2930 = vsub.f32 1.0, %v2929
      %v2931 = vmul.f32 %v2928, %v2930
      %v2932 = vadd.f32 %v2928, %v2931
      %vm2933 = vweird.f32 %v2924
      %vm2934 = vweird.f32 %v2928
      %vm2935 = vmor %vm2933, %vm2934
      %v2936 = vsel %vm2935, %v2928, %v2932
      %v2937 = vand.u32 2147483647, %v2924
      %vm2938 = vcmp.eq.f32.partialorder %v2937, 8.507059e+37
      %v2939 = vand.u32 %v2924, 2147483648
      %v2940 = vor.u32 1.1754944e-38, %v2939
      %v2941 = vsel %vm2938, %v2940, %v2936
      %v2942 = vmul.f32 %v2919, %v2941
      %v2943 = vrcp.pop %v2927
      %v2944 = vmul.f32 %v2927, %v2943
      %v2945 = vsub.f32 1.0, %v2944
      %v2946 = vmul.f32 %v2943, %v2945
      %v2947 = vadd.f32 %v2943, %v2946
      %vm2948 = vweird.f32 %v2927
      %vm2949 = vweird.f32 %v2943
      %vm2950 = vmor %vm2948, %vm2949
      %v2951 = vsel %vm2950, %v2943, %v2947
      %v2952 = vand.u32 2147483647, %v2927
      %vm2953 = vcmp.eq.f32.partialorder %v2952, 8.507059e+37
      %v2954 = vand.u32 %v2927, 2147483648
      %v2955 = vor.u32 1.1754944e-38, %v2954
      %v2956 = vsel %vm2953, %v2955, %v2951
      %v2957 = vmul.f32 %v2921, %v2956
      %s2958 = scalar_lea.vmem %s1296, 16
      %2959 = vst.msk [vmem:[%s2958] sm:$0xff] %vm2765, %v2942
      %2960 = vst.msk [vmem:[%s2958 + $0x8] sm:$0xff] %vm2765, %v2957
      %v2961 = vpack.c.bf16 %v2942, %v2942
      %v2962 = vpack.c.bf16 %v2957, %v2957
      %2963 = vrot.lane.b32.xlu0 %v2721, 88
      %v2964 = vpop.permute.xlu0 %2963
      %v2967 = vsel %vm2765, %v2961, 0
      %2969 = vmatpush.bf16.msra.mxu0 0
      %2970 = vmatpush.bf16.msra.mxu0 0
      %2971 = vmatpush.bf16.msra.mxu0 0
      %2972 = vmatpush.bf16.msra.mxu0 0
      %2973 = vmatpush.bf16.msra.mxu0 0
      %2974 = vmatpush.bf16.msra.mxu0 0
      %2975 = vmatpush.bf16.msra.mxu0 0
      %2976 = vmatpush.bf16.msra.mxu0 %v2964
      %2977 = vmatmul.bf16.gmra.mxu0 %v2967
      %v2978 = vpop.f32.mrf.mxu0
      %v2979 = vadd.f32 0.0, %v2978
      %v2980 = vpop.f32.mrf.mxu0
      %2981 = vdwg.mxu0
      %2982 = vrot.lane.b32.xlu0 %v2745, 88
      %v2983 = vpop.permute.xlu0 %2982
      %v2986 = vsel %vm2765, %v2962, 0
      %2988 = vmatpush.bf16.msra.mxu0 0
      %2989 = vmatpush.bf16.msra.mxu0 0
      %2990 = vmatpush.bf16.msra.mxu0 0
      %2991 = vmatpush.bf16.msra.mxu0 0
      %2992 = vmatpush.bf16.msra.mxu0 0
      %2993 = vmatpush.bf16.msra.mxu0 0
      %2994 = vmatpush.bf16.msra.mxu0 0
      %2995 = vmatpush.bf16.msra.mxu0 %v2983
      %2996 = vmatmul.bf16.gmra.mxu0 %v2986
      %v2997 = vpop.f32.mrf.mxu0
      %v2998 = vadd.f32 0.0, %v2997
      %v2999 = vpop.f32.mrf.mxu0
      %3000 = vdwg.mxu0
      %3003 = vrot.lane.b32.xlu0 %v2979, 8
      %v3004 = vpop.permute.xlu0 %3003
      %3005 = vrot.lane.b32.xlu0 %v2998, 8
      %v3006 = vpop.permute.xlu0 %3005
      %3009 = vst.msk [vmem:[#allocation2] sm:$0xff] %vm1979, %v3004
      %3010 = vst.msk [vmem:[#allocation2 + $0x8] sm:$0xff] %vm1979, %v3006
      %3011 = vrot.lane.b32.xlu0 %v2860, 112
      %v3012 = vpop.permute.xlu0 %3011
      %3013 = vrot.lane.b32.xlu0 %v2721, 112
      %v3014 = vpop.permute.xlu0 %3013
      %v3016 = vsel %vm1473, %v3012, 0
      %v3019 = vsel %vm1473, %v3014, 0
      %3021 = vmatpush.bf16.xpose.msra.mxu0 0
      %3022 = vmatpush.bf16.xpose.msra.mxu0 0
      %3023 = vmatpush.bf16.xpose.msra.mxu0 0
      %3024 = vmatpush.bf16.xpose.msra.mxu0 0
      %3025 = vmatpush.bf16.xpose.msra.mxu0 0
      %3026 = vmatpush.bf16.xpose.msra.mxu0 0
      %3027 = vmatpush.bf16.xpose.msra.mxu0 0
      %3028 = vmatpush.bf16.xpose.msra.mxu0 %v3019
      %3029 = vmatmul.bf16.gmra.mxu0 %v3016
      %v3030 = vpop.f32.mrf.mxu0
      %v3031 = vadd.f32 %v2713, %v3030
      %v3032 = vpop.f32.mrf.mxu0
      %3033 = vdwg.mxu0
      %3034 = vrot.lane.b32.xlu0 %v2886, 112
      %v3035 = vpop.permute.xlu0 %3034
      %3036 = vrot.lane.b32.xlu0 %v2745, 112
      %v3037 = vpop.permute.xlu0 %3036
      %v3039 = vsel %vm1473, %v3035, 0
      %v3042 = vsel %vm1473, %v3037, 0
      %3044 = vmatpush.bf16.xpose.msra.mxu0 0
      %3045 = vmatpush.bf16.xpose.msra.mxu0 0
      %3046 = vmatpush.bf16.xpose.msra.mxu0 0
      %3047 = vmatpush.bf16.xpose.msra.mxu0 0
      %3048 = vmatpush.bf16.xpose.msra.mxu0 0
      %3049 = vmatpush.bf16.xpose.msra.mxu0 0
      %3050 = vmatpush.bf16.xpose.msra.mxu0 0
      %3051 = vmatpush.bf16.xpose.msra.mxu0 %v3042
      %3052 = vmatmul.bf16.gmra.mxu0 %v3039
      %v3053 = vpop.f32.mrf.mxu0
      %v3054 = vadd.f32 %v2714, %v3053
      %v3055 = vpop.f32.mrf.mxu0
      %3056 = vdwg.mxu0
      %v3057 = vsel %vm2765, %v3031, -inf
      %3058 = vmax.xlane.f32.xlu0 %v3057
      %v3059 = vpop.xlane.xlu0 %3058
      %v3060 = vsel %vm2765, %v3054, -inf
      %3061 = vmax.xlane.f32.xlu0 %v3060
      %v3062 = vpop.xlane.xlu0 %3061
      %v3063 = vsub.f32 %v3031, %v3059
      %v3064 = vsub.f32 %v3054, %v3062
      %v3065 = vmul.f32 %v3063, 1.442695
      %v3066 = vpow.pop %v3065
      %v3067 = vmul.f32 %v3064, 1.442695
      %v3068 = vpow.pop %v3067
      %v3069 = vsel %vm2765, %v3066, 0.0
      %3070 = vadd.xlane.f32.xlu0 %v3069
      %v3071 = vpop.xlane.xlu0 %3070
      %v3072 = vsel %vm2765, %v3068, 0.0
      %3073 = vadd.xlane.f32.xlu0 %v3072
      %v3074 = vpop.xlane.xlu0 %3073
      %v3075 = vrcp.pop %v3071
      %v3076 = vmul.f32 %v3071, %v3075
      %v3077 = vsub.f32 1.0, %v3076
      %v3078 = vmul.f32 %v3075, %v3077
      %v3079 = vadd.f32 %v3075, %v3078
      %vm3080 = vweird.f32 %v3071
      %vm3081 = vweird.f32 %v3075
      %vm3082 = vmor %vm3080, %vm3081
      %v3083 = vsel %vm3082, %v3075, %v3079
      %v3084 = vand.u32 2147483647, %v3071
      %vm3085 = vcmp.eq.f32.partialorder %v3084, 8.507059e+37
      %v3086 = vand.u32 %v3071, 2147483648
      %v3087 = vor.u32 1.1754944e-38, %v3086
      %v3088 = vsel %vm3085, %v3087, %v3083
      %v3089 = vmul.f32 %v3066, %v3088
      %v3090 = vrcp.pop %v3074
      %v3091 = vmul.f32 %v3074, %v3090
      %v3092 = vsub.f32 1.0, %v3091
      %v3093 = vmul.f32 %v3090, %v3092
      %v3094 = vadd.f32 %v3090, %v3093
      %vm3095 = vweird.f32 %v3074
      %vm3096 = vweird.f32 %v3090
      %vm3097 = vmor %vm3095, %vm3096
      %v3098 = vsel %vm3097, %v3090, %v3094
      %v3099 = vand.u32 2147483647, %v3074
      %vm3100 = vcmp.eq.f32.partialorder %v3099, 8.507059e+37
      %v3101 = vand.u32 %v3074, 2147483648
      %v3102 = vor.u32 1.1754944e-38, %v3101
      %v3103 = vsel %vm3100, %v3102, %v3098
      %v3104 = vmul.f32 %v3068, %v3103
      %s3105 = scalar_lea.vmem %s1296, 32
      %3106 = vst.msk [vmem:[%s3105] sm:$0xff] %vm2765, %v3089
      %3107 = vst.msk [vmem:[%s3105 + $0x8] sm:$0xff] %vm2765, %v3104
      %v3108 = vpack.c.bf16 %v3089, %v3089
      %v3109 = vpack.c.bf16 %v3104, %v3104
      %3110 = vrot.lane.b32.xlu0 %v2721, 80
      %v3111 = vpop.permute.xlu0 %3110
      %v3114 = vsel %vm2765, %v3108, 0
      %3116 = vmatpush.bf16.msra.mxu0 0
      %3117 = vmatpush.bf16.msra.mxu0 0
      %3118 = vmatpush.bf16.msra.mxu0 0
      %3119 = vmatpush.bf16.msra.mxu0 0
      %3120 = vmatpush.bf16.msra.mxu0 0
      %3121 = vmatpush.bf16.msra.mxu0 0
      %3122 = vmatpush.bf16.msra.mxu0 0
      %3123 = vmatpush.bf16.msra.mxu0 %v3111
      %3124 = vmatmul.bf16.gmra.mxu0 %v3114
      %v3125 = vpop.f32.mrf.mxu0
      %v3126 = vadd.f32 0.0, %v3125
      %v3127 = vpop.f32.mrf.mxu0
      %3128 = vdwg.mxu0
      %3129 = vrot.lane.b32.xlu0 %v2745, 80
      %v3130 = vpop.permute.xlu0 %3129
      %v3133 = vsel %vm2765, %v3109, 0
      %3135 = vmatpush.bf16.msra.mxu0 0
      %3136 = vmatpush.bf16.msra.mxu0 0
      %3137 = vmatpush.bf16.msra.mxu0 0
      %3138 = vmatpush.bf16.msra.mxu0 0
      %3139 = vmatpush.bf16.msra.mxu0 0
      %3140 = vmatpush.bf16.msra.mxu0 0
      %3141 = vmatpush.bf16.msra.mxu0 0
      %3142 = vmatpush.bf16.msra.mxu0 %v3130
      %3143 = vmatmul.bf16.gmra.mxu0 %v3133
      %v3144 = vpop.f32.mrf.mxu0
      %v3145 = vadd.f32 0.0, %v3144
      %v3146 = vpop.f32.mrf.mxu0
      %3147 = vdwg.mxu0
      %3150 = vrot.lane.b32.xlu0 %v3126, 16
      %v3151 = vpop.permute.xlu0 %3150
      %3152 = vrot.lane.b32.xlu0 %v3145, 16
      %v3153 = vpop.permute.xlu0 %3152
      %3156 = vst.msk [vmem:[#allocation2] sm:$0xff] %vm2247, %v3151
      %3157 = vst.msk [vmem:[#allocation2 + $0x8] sm:$0xff] %vm2247, %v3153
      %3158 = vrot.lane.b32.xlu0 %v2860, 104
      %v3159 = vpop.permute.xlu0 %3158
      %3160 = vrot.lane.b32.xlu0 %v2721, 104
      %v3161 = vpop.permute.xlu0 %3160
      %v3163 = vsel %vm1473, %v3159, 0
      %v3166 = vsel %vm1473, %v3161, 0
      %3168 = vmatpush.bf16.xpose.msra.mxu0 0
      %3169 = vmatpush.bf16.xpose.msra.mxu0 0
      %3170 = vmatpush.bf16.xpose.msra.mxu0 0
      %3171 = vmatpush.bf16.xpose.msra.mxu0 0
      %3172 = vmatpush.bf16.xpose.msra.mxu0 0
      %3173 = vmatpush.bf16.xpose.msra.mxu0 0
      %3174 = vmatpush.bf16.xpose.msra.mxu0 0
      %3175 = vmatpush.bf16.xpose.msra.mxu0 %v3166
      %3176 = vmatmul.bf16.gmra.mxu0 %v3163
      %v3177 = vpop.f32.mrf.mxu0
      %v3178 = vadd.f32 %v2713, %v3177
      %v3179 = vpop.f32.mrf.mxu0
      %3180 = vdwg.mxu0
      %3181 = vrot.lane.b32.xlu0 %v2886, 104
      %v3182 = vpop.permute.xlu0 %3181
      %3183 = vrot.lane.b32.xlu0 %v2745, 104
      %v3184 = vpop.permute.xlu0 %3183
      %v3186 = vsel %vm1473, %v3182, 0
      %v3189 = vsel %vm1473, %v3184, 0
      %3191 = vmatpush.bf16.xpose.msra.mxu0 0
      %3192 = vmatpush.bf16.xpose.msra.mxu0 0
      %3193 = vmatpush.bf16.xpose.msra.mxu0 0
      %3194 = vmatpush.bf16.xpose.msra.mxu0 0
      %3195 = vmatpush.bf16.xpose.msra.mxu0 0
      %3196 = vmatpush.bf16.xpose.msra.mxu0 0
      %3197 = vmatpush.bf16.xpose.msra.mxu0 0
      %3198 = vmatpush.bf16.xpose.msra.mxu0 %v3189
      %3199 = vmatmul.bf16.gmra.mxu0 %v3186
      %v3200 = vpop.f32.mrf.mxu0
      %v3201 = vadd.f32 %v2714, %v3200
      %v3202 = vpop.f32.mrf.mxu0
      %3203 = vdwg.mxu0
      %v3204 = vsel %vm2765, %v3178, -inf
      %3205 = vmax.xlane.f32.xlu0 %v3204
      %v3206 = vpop.xlane.xlu0 %3205
      %v3207 = vsel %vm2765, %v3201, -inf
      %3208 = vmax.xlane.f32.xlu0 %v3207
      %v3209 = vpop.xlane.xlu0 %3208
      %v3210 = vsub.f32 %v3178, %v3206
      %v3211 = vsub.f32 %v3201, %v3209
      %v3212 = vmul.f32 %v3210, 1.442695
      %v3213 = vpow.pop %v3212
      %v3214 = vmul.f32 %v3211, 1.442695
      %v3215 = vpow.pop %v3214
      %v3216 = vsel %vm2765, %v3213, 0.0
      %3217 = vadd.xlane.f32.xlu0 %v3216
      %v3218 = vpop.xlane.xlu0 %3217
      %v3219 = vsel %vm2765, %v3215, 0.0
      %3220 = vadd.xlane.f32.xlu0 %v3219
      %v3221 = vpop.xlane.xlu0 %3220
      %v3222 = vrcp.pop %v3218
      %v3223 = vmul.f32 %v3218, %v3222
      %v3224 = vsub.f32 1.0, %v3223
      %v3225 = vmul.f32 %v3222, %v3224
      %v3226 = vadd.f32 %v3222, %v3225
      %vm3227 = vweird.f32 %v3218
      %vm3228 = vweird.f32 %v3222
      %vm3229 = vmor %vm3227, %vm3228
      %v3230 = vsel %vm3229, %v3222, %v3226
      %v3231 = vand.u32 2147483647, %v3218
      %vm3232 = vcmp.eq.f32.partialorder %v3231, 8.507059e+37
      %v3233 = vand.u32 %v3218, 2147483648
      %v3234 = vor.u32 1.1754944e-38, %v3233
      %v3235 = vsel %vm3232, %v3234, %v3230
      %v3236 = vmul.f32 %v3213, %v3235
      %v3237 = vrcp.pop %v3221
      %v3238 = vmul.f32 %v3221, %v3237
      %v3239 = vsub.f32 1.0, %v3238
      %v3240 = vmul.f32 %v3237, %v3239
      %v3241 = vadd.f32 %v3237, %v3240
      %vm3242 = vweird.f32 %v3221
      %vm3243 = vweird.f32 %v3237
      %vm3244 = vmor %vm3242, %vm3243
      %v3245 = vsel %vm3244, %v3237, %v3241
      %v3246 = vand.u32 2147483647, %v3221
      %vm3247 = vcmp.eq.f32.partialorder %v3246, 8.507059e+37
      %v3248 = vand.u32 %v3221, 2147483648
      %v3249 = vor.u32 1.1754944e-38, %v3248
      %v3250 = vsel %vm3247, %v3249, %v3245
      %v3251 = vmul.f32 %v3215, %v3250
      %s3252 = scalar_lea.vmem %s1296, 48
      %3253 = vst.msk [vmem:[%s3252] sm:$0xff] %vm2765, %v3236
      %3254 = vst.msk [vmem:[%s3252 + $0x8] sm:$0xff] %vm2765, %v3251
      %v3255 = vpack.c.bf16 %v3236, %v3236
      %v3256 = vpack.c.bf16 %v3251, %v3251
      %3257 = vrot.lane.b32.xlu0 %v2721, 72
      %v3258 = vpop.permute.xlu0 %3257
      %v3261 = vsel %vm2765, %v3255, 0
      %3263 = vmatpush.bf16.msra.mxu0 0
      %3264 = vmatpush.bf16.msra.mxu0 0
      %3265 = vmatpush.bf16.msra.mxu0 0
      %3266 = vmatpush.bf16.msra.mxu0 0
      %3267 = vmatpush.bf16.msra.mxu0 0
      %3268 = vmatpush.bf16.msra.mxu0 0
      %3269 = vmatpush.bf16.msra.mxu0 0
      %3270 = vmatpush.bf16.msra.mxu0 %v3258
      %3271 = vmatmul.bf16.gmra.mxu0 %v3261
      %v3272 = vpop.f32.mrf.mxu0
      %v3273 = vadd.f32 0.0, %v3272
      %v3274 = vpop.f32.mrf.mxu0
      %3275 = vdwg.mxu0
      %3276 = vrot.lane.b32.xlu0 %v2745, 72
      %v3277 = vpop.permute.xlu0 %3276
      %v3280 = vsel %vm2765, %v3256, 0
      %3282 = vmatpush.bf16.msra.mxu0 0
      %3283 = vmatpush.bf16.msra.mxu0 0
      %3284 = vmatpush.bf16.msra.mxu0 0
      %3285 = vmatpush.bf16.msra.mxu0 0
      %3286 = vmatpush.bf16.msra.mxu0 0
      %3287 = vmatpush.bf16.msra.mxu0 0
      %3288 = vmatpush.bf16.msra.mxu0 0
      %3289 = vmatpush.bf16.msra.mxu0 %v3277
      %3290 = vmatmul.bf16.gmra.mxu0 %v3280
      %v3291 = vpop.f32.mrf.mxu0
      %v3292 = vadd.f32 0.0, %v3291
      %v3293 = vpop.f32.mrf.mxu0
      %3294 = vdwg.mxu0
      %3297 = vrot.lane.b32.xlu0 %v3273, 24
      %v3298 = vpop.permute.xlu0 %3297
      %3299 = vrot.lane.b32.xlu0 %v3292, 24
      %v3300 = vpop.permute.xlu0 %3299
      %3303 = vst.msk [vmem:[#allocation2] sm:$0xff] %vm2515, %v3298
      %3304 = vst.msk [vmem:[#allocation2 + $0x8] sm:$0xff] %vm2515, %v3300
      %v3305 = vld [vmem:[#allocation2] sm:$0xff]
      %v3306 = vld [vmem:[#allocation2 + $0x8] sm:$0xff]
      %v3307 = vld [vmem:[%s1261] sm:$0xf]
      %v3308 = vld [vmem:[%s1261 + $0x4] sm:$0xf]
      %v3309 = vld [vmem:[%s1261 + $0x8] sm:$0xf]
      %v3310 = vld [vmem:[%s1261 + $0xc] sm:$0xf]
      %v3311 = vpack.c.bf16 %v3306, %v3305
      %v3316 = vunpack.c.l.b16 %v3307
      %v3317 = vunpack.c.l.b16 %v3308
      %v3318 = vunpack.c.l.b16 %v3309
      %v3319 = vunpack.c.l.b16 %v3310
      %v3320 = vpack.c.b16 %v3317, %v3316
      %v3321 = vpack.c.b16 %v3319, %v3318
      %v3325 = vsel %vm1319, %v3311, 0
      %3327 = vmatpush.bf16.msra.mxu0 0
      %3328 = vmatpush.bf16.msra.mxu0 0
      %3329 = vmatpush.bf16.msra.mxu0 0
      %3330 = vmatpush.bf16.msra.mxu0 0
      %3331 = vmatpush.bf16.msra.mxu0 0
      %3332 = vmatpush.bf16.msra.mxu0 0
      %3333 = vmatpush.bf16.msra.mxu0 %v3321
      %3334 = vmatpush.bf16.msra.mxu0 %v3320
      %3335 = vmatmul.bf16.gmra.mxu0 %v3325
      %v3336 = vpop.f32.mrf.mxu0
      %v3337 = vadd.f32 0.0, %v3336
      %v3338 = vpop.f32.mrf.mxu0
      %v3339 = vadd.f32 0.0, %v3338
      %3340 = vdwg.mxu0
      %v3341 = vadd.f32 %v2616, %v3337
      %v3342 = vadd.f32 %v2617, %v3339
      %v3343 = vld [vmem:[%s1264] sm:$0x1]
      %v3345 = vperm.slane %v3343, 0
      %v3347 = vadd.f32 %v3341, %v3345
      %v3348 = vadd.f32 %v3342, %v3345
      %v3349 = vld [vmem:[%s1267] sm:$0x1]
      %v3350 = vld [vmem:[%s1270] sm:$0x1]
      %v3351 = vsel %vm1319, %v3347, 0.0
      %3352 = vadd.xlane.f32.xlu0 %v3351
      %v3353 = vpop.xlane.xlu0 %3352
      %v3354 = vsel %vm1319, %v3348, 0.0
      %3355 = vadd.xlane.f32.xlu0 %v3354
      %v3356 = vpop.xlane.xlu0 %3355
      %v3357 = vmul.f32 %v3353, %v1332
      %v3358 = vmul.f32 %v3356, %v1332
      %v3359 = vsub.f32 %v3347, %v3357
      %v3360 = vsub.f32 %v3348, %v3358
      %v3361 = vmul.f32 %v3359, %v3359
      %v3362 = vmul.f32 %v3360, %v3360
      %v3363 = vsel %vm1319, %v3361, 0.0
      %3364 = vadd.xlane.f32.xlu0 %v3363
      %v3365 = vpop.xlane.xlu0 %3364
      %v3366 = vsel %vm1319, %v3362, 0.0
      %3367 = vadd.xlane.f32.xlu0 %v3366
      %v3368 = vpop.xlane.xlu0 %3367
      %v3369 = vmul.f32 %v3365, %v1332
      %v3370 = vmul.f32 %v3368, %v1332
      %v3371 = vadd.f32 %v3369, 1e-05
      %v3372 = vadd.f32 %v3370, 1e-05
      %v3373 = vrsqrt.pop %v3371
      %v3374 = vmul.f32 %v3373, %v3371
      %v3375 = vmul.f32 %v3374, %v3373
      %v3376 = vmul.f32 0.5, %v3375
      %v3377 = vsub.f32 1.5, %v3376
      %v3378 = vmul.f32 %v3373, %v3377
      %vm3379 = vweird.f32 %v3371
      %vm3380 = vweird.f32 %v3373
      %vm3381 = vmor %vm3379, %vm3380
      %v3382 = vsel %vm3381, %v3373, %v3378
      %v3383 = vrsqrt.pop %v3372
      %v3384 = vmul.f32 %v3383, %v3372
      %v3385 = vmul.f32 %v3384, %v3383
      %v3386 = vmul.f32 0.5, %v3385
      %v3387 = vsub.f32 1.5, %v3386
      %v3388 = vmul.f32 %v3383, %v3387
      %vm3389 = vweird.f32 %v3372
      %vm3390 = vweird.f32 %v3383
      %vm3391 = vmor %vm3389, %vm3390
      %v3392 = vsel %vm3391, %v3383, %v3388
      %v3393 = vmul.f32 %v3359, %v3382
      %v3394 = vmul.f32 %v3360, %v3392
      %v3396 = vperm.slane %v3349, 0
      %v3398 = vmul.f32 %v3393, %v3396
      %v3399 = vmul.f32 %v3394, %v3396
      %v3401 = vperm.slane %v3350, 0
      %v3403 = vadd.f32 %v3398, %v3401
      %v3404 = vadd.f32 %v3399, %v3401
      %v3405 = vld [vmem:[%s1275] sm:$0xf]
      %v3406 = vld [vmem:[%s1275 + $0x4] sm:$0xf]
      %v3407 = vld [vmem:[%s1275 + $0x8] sm:$0xf]
      %v3408 = vld [vmem:[%s1275 + $0xc] sm:$0xf]
      %v3409 = vpack.c.bf16 %v3404, %v3403
      %v3410 = vld [vmem:[%s1278] sm:$0x1]
      %v3412 = vperm.slane %v3410, 0
      %v3418 = vunpack.c.l.b16 %v3405
      %v3419 = vunpack.c.l.b16 %v3406
      %v3420 = vunpack.c.l.b16 %v3407
      %v3421 = vunpack.c.l.b16 %v3408
      %v3422 = vpack.c.b16 %v3419, %v3418
      %v3423 = vpack.c.b16 %v3421, %v3420
      %v3427 = vsel %vm1319, %v3409, 0
      %3429 = vmatpush.bf16.msra.mxu0 0
      %3430 = vmatpush.bf16.msra.mxu0 0
      %3431 = vmatpush.bf16.msra.mxu0 0
      %3432 = vmatpush.bf16.msra.mxu0 0
      %3433 = vmatpush.bf16.msra.mxu0 0
      %3434 = vmatpush.bf16.msra.mxu0 0
      %3435 = vmatpush.bf16.msra.mxu0 %v3423
      %3436 = vmatpush.bf16.msra.mxu0 %v3422
      %3437 = vmatmul.bf16.gmra.mxu0 %v3427
      %v3438 = vpop.f32.mrf.mxu0
      %v3439 = vadd.f32 %v3412, %v3438
      %v3440 = vpop.f32.mrf.mxu0
      %v3441 = vadd.f32 %v3412, %v3440
      %3442 = vdwg.mxu0
      %v3443 = vmax.f32 %v3439, 0.0
      %v3444 = vmax.f32 %v3441, 0.0
      %v3445 = vld [vmem:[%s1283] sm:$0xf]
      %v3446 = vld [vmem:[%s1283 + $0x4] sm:$0xf]
      %v3447 = vld [vmem:[%s1283 + $0x8] sm:$0xf]
      %v3448 = vld [vmem:[%s1283 + $0xc] sm:$0xf]
      %v3449 = vld [vmem:[%s1283 + $0x10] sm:$0xf]
      %v3450 = vld [vmem:[%s1283 + $0x14] sm:$0xf]
      %v3451 = vld [vmem:[%s1283 + $0x18] sm:$0xf]
      %v3452 = vld [vmem:[%s1283 + $0x1c] sm:$0xf]
      %v3453 = vpack.c.bf16 %v3444, %v3443
      %v3462 = vunpack.c.l.b16 %v3445
      %v3463 = vunpack.c.l.b16 %v3446
      %v3464 = vunpack.c.l.b16 %v3447
      %v3465 = vunpack.c.l.b16 %v3448
      %v3466 = vunpack.c.l.b16 %v3449
      %v3467 = vunpack.c.l.b16 %v3450
      %v3468 = vunpack.c.l.b16 %v3451
      %v3469 = vunpack.c.l.b16 %v3452
      %v3470 = vpack.c.b16 %v3463, %v3462
      %v3471 = vpack.c.b16 %v3465, %v3464
      %v3472 = vpack.c.b16 %v3467, %v3466
      %v3473 = vpack.c.b16 %v3469, %v3468
      %vm3478 = vcmask 523264
      %v3480 = vsel %vm3478, %v3453, 0
      %3482 = vmatpush.bf16.msra.mxu0 0
      %3483 = vmatpush.bf16.msra.mxu0 0
      %3484 = vmatpush.bf16.msra.mxu0 0
      %3485 = vmatpush.bf16.msra.mxu0 0
      %3486 = vmatpush.bf16.msra.mxu0 %v3473
      %3487 = vmatpush.bf16.msra.mxu0 %v3472
      %3488 = vmatpush.bf16.msra.mxu0 %v3471
      %3489 = vmatpush.bf16.msra.mxu0 %v3470
      %3490 = vmatmul.bf16.gmra.mxu0 %v3480
      %v3491 = vpop.f32.mrf.mxu0
      %v3492 = vadd.f32 0.0, %v3491
      %v3493 = vpop.f32.mrf.mxu0
      %v3494 = vadd.f32 0.0, %v3493
      %3495 = vdwg.mxu0
      %v3496 = vadd.f32 %v3403, %v3492
      %v3497 = vadd.f32 %v3404, %v3494
      %v3498 = vld [vmem:[%s1286] sm:$0x1]
      %v3500 = vperm.slane %v3498, 0
      %v3502 = vadd.f32 %v3496, %v3500
      %v3503 = vadd.f32 %v3497, %v3500
      %3504 = vst.msk [vmem:[%s57] sm:$0xff] %vm1319, %v3502
      %3505 = vst.msk [vmem:[%s57 + $0x8] sm:$0xff] %vm1319, %v3503
      %p3506 = scmp.lt.s32.totalorder %s73, 1
      %s3507 = scalar_select %p3506, %s73, 1
      %s3508 = smul.addr %s3507, 8
      %s3509 = smul.addr %s3508, 8
      %s3510 = scalar_lea.vmem %s59, %s3509
      %p3511 = scmp.lt.s32.totalorder %s73, 1
      %s3512 = scalar_select %p3511, %s73, 1
      %s3513 = smul.addr %s3512, 8
      %s3514 = smul.addr %s3513, 8
      %s3515 = scalar_lea.vmem %s61, %s3514
      // Predicated region
      $region137: #{transformer_decoder_forward.2} parent=131 // pred_check
        %p3516 = pneg %p789
      $region138: #{transformer_decoder_forward.2} parent=131 // pred_check_branch
        %3518 = sbr.rel (%p3516) target = $region140
      $region139: #{transformer_decoder_forward.2} parent=131 // pred_region
        _
      $region140: #{transformer_decoder_forward.2} parent=131 // pred_fallthru
        _
      // Predicated region
      $region141: #{transformer_decoder_forward.2} parent=131 // pred_check
        %p3519 = pneg %p815
      $region142: #{transformer_decoder_forward.2} parent=131 // pred_check_branch
        %3521 = sbr.rel (%p3519) target = $region144
      $region143: #{transformer_decoder_forward.2} parent=131 // pred_region
        _
      $region144: #{transformer_decoder_forward.2} parent=131 // pred_fallthru
        _
      // Predicated region
      $region145: #{transformer_decoder_forward.2} parent=131 // pred_check
        %p3522 = pneg %p841
      $region146: #{transformer_decoder_forward.2} parent=131 // pred_check_branch
        %3524 = sbr.rel (%p3522) target = $region148
      $region147: #{transformer_decoder_forward.2} parent=131 // pred_region
        _
      $region148: #{transformer_decoder_forward.2} parent=131 // pred_fallthru
        _
      // Predicated region
      $region149: #{transformer_decoder_forward.2} parent=131 // pred_check
        %p3525 = pneg %p789
      $region150: #{transformer_decoder_forward.2} parent=131 // pred_check_branch
        %3527 = sbr.rel (%p3525) target = $region152
      $region151: #{transformer_decoder_forward.2} parent=131 // pred_region
        _
      $region152: #{transformer_decoder_forward.2} parent=131 // pred_fallthru
        _
    $region132: #{transformer_decoder_forward.2} parent=5 // pred_fallthru
      _
    %p3528 = scmp.le.s32.totalorder 2, %s68
    // Predicated region
    $region153: #{transformer_decoder_forward.2} parent=5 // pred_check
      %p3529 = pneg %p3528
    $region154: #{transformer_decoder_forward.2} parent=5 // pred_check_branch
      %3531 = sbr.rel (%p3529) target = $region156
    $region155: #{transformer_decoder_forward.2} parent=5 // pred_region
      %s3532 = ssub.s32 %s68, 2
      // Predicated region
      $region157: #{transformer_decoder_forward.2} parent=155 // pred_check
        %p3533 = pneg %p821
      $region158: #{transformer_decoder_forward.2} parent=155 // pred_check_branch
        %3535 = sbr.rel (%p3533) target = $region160
      $region159: #{transformer_decoder_forward.2} parent=155 // pred_region
        %p3536 = scmp.lt.s32.totalorder %s74, 1
        %s3537 = scalar_select %p3536, %s74, 1
        %s3538 = smul.addr %s3537, 8
        %s3539 = smul.addr %s3538, 8
        %s3540 = scalar_lea.vmem %s59, %s3539
      $region160: #{transformer_decoder_forward.2} parent=155 // pred_fallthru
        _
      // Predicated region
      $region161: #{transformer_decoder_forward.2} parent=155 // pred_check
        %p3541 = pneg %p847
      $region162: #{transformer_decoder_forward.2} parent=155 // pred_check_branch
        %3543 = sbr.rel (%p3541) target = $region164
      $region163: #{transformer_decoder_forward.2} parent=155 // pred_region
        %p3544 = scmp.lt.s32.totalorder %s74, 1
        %s3545 = scalar_select %p3544, %s74, 1
        %s3546 = smul.addr %s3545, 8
        %s3547 = smul.addr %s3546, 8
        %s3548 = scalar_lea.vmem %s61, %s3547
      $region164: #{transformer_decoder_forward.2} parent=155 // pred_fallthru
        _
    $region156: #{transformer_decoder_forward.2} parent=5 // pred_fallthru
      _
  $region6: #{transformer_decoder_forward.2} parent=0 // loop_footer
    %s72 = sadd.s32 1, %s68
  $region7: #{transformer_decoder_forward.2} parent=0 // loop_footer_branch
    %67 = sbr.rel target = $region3
  $region8: #{transformer_decoder_forward.2} parent=0 // loop_exit
    _

</llo_original>
